<compile_context>
chip_gen: v7x
topology: tpu7x:2x2x1
jax: 0.10.0
libtpu: 0.0.40
codegen_flags: <defaults>
</compile_context>

<pallas_src>
import functools

import jax
import jax.numpy as jnp
from jax.experimental import pallas as pl
from jax.experimental.pallas import tpu as pltpu

_LANE = 128


def _round_up(n, m):
    return ((n + m - 1) // m) * m


def _mlp_decoder_kernel(x_ref, w1_ref, b1_ref, w2_ref, b2_ref, w3_ref, b3_ref,
                        o_ref, h2_ref):
    """Fused 3-layer MLP.

    Grid: i = batch tile (parallel), j = output-column tile (arbitrary).
    Layers 1+2 run once per batch tile (at j == 0); their ReLU output is kept
    resident in the bf16 VMEM scratch h2_ref. Layer 3 consumes one N-tile of w3
    per j step, so only (H2, block_d) of w3 is ever in VMEM.
    """
    j = pl.program_id(1)

    @pl.when(j == 0)
    def _():
        x = x_ref[...].astype(jnp.bfloat16)
        # Layer 1: (tb, Lp) @ (Lp, 512) -> f32 acc; bias + ReLU in f32.
        h1 = jnp.dot(x, w1_ref[...], preferred_element_type=jnp.float32) + b1_ref[...]
        h1 = jnp.maximum(h1, 0.0).astype(jnp.bfloat16)
        # Layer 2: (tb, 512) @ (512, 1024) -> f32 acc; bias + ReLU in f32.
        h2 = jnp.dot(h1, w2_ref[...], preferred_element_type=jnp.float32) + b2_ref[...]
        h2_ref[...] = jnp.maximum(h2, 0.0).astype(jnp.bfloat16)

    # Layer 3: (tb, 1024) @ (1024, tn) + (1, tn), lane-dense store.
    out = jnp.dot(h2_ref[...], w3_ref[...], preferred_element_type=jnp.float32) + b3_ref[...]
    o_ref[...] = out.astype(o_ref.dtype)


@functools.partial(jax.jit, static_argnames=("output_dim", "block_b", "block_d"))
def mlp_decoder_forward(x, prepared_params, *, output_dim, block_b=128, block_d=512):
    """x: (B, latent_dim) f32 -> (B, output_dim) f32."""
    w1, b1, w2, b2, w3, b3 = prepared_params
    B, L = x.shape
    L_pad, H1 = w1.shape
    H2, D_pad = w3.shape

    # Lane-dense N tile that divides the (already 128-padded) output width.
    block_d = min(block_d, D_pad)
    if D_pad % block_d != 0:
        block_d = _LANE

    B_pad = _round_up(B, block_b)

    # Zero-pad batch rows and latent columns (exact for an affine layer; the
    # padded rows are sliced off below).
    x_pad = jnp.zeros((B_pad, L_pad), x.dtype).at[:B, :L].set(x)

    grid = (B_pad // block_b, D_pad // block_d)

    # Constant-index blocks (full weights / biases): fetch once, single buffer.
    def const(shape):
        return pl.BlockSpec(shape, lambda i, j: (0,) * len(shape),
                            pipeline_mode=pl.Buffered(1))

    flops = 2 * B_pad * (L_pad * H1 + H1 * H2 + H2 * D_pad)
    bytes_accessed = (x_pad.size * x_pad.dtype.itemsize
                      + sum(int(a.size) * a.dtype.itemsize for a in prepared_params)
                      + B_pad * D_pad * 4)

    out = pl.pallas_call(
        _mlp_decoder_kernel,
        out_shape=jax.ShapeDtypeStruct((B_pad, D_pad), jnp.float32),
        grid_spec=pltpu.PrefetchScalarGridSpec(
            num_scalar_prefetch=0,
            grid=grid,
            in_specs=[
                pl.BlockSpec((block_b, L_pad), lambda i, j: (i, 0)),   # x tile (f32)
                const((L_pad, H1)),                                    # w1 (bf16)
                const((1, H1)),                                        # b1 (f32)
                const((H1, H2)),                                       # w2 (bf16)
                const((1, H2)),                                        # b2 (f32)
                pl.BlockSpec((H2, block_d), lambda i, j: (0, j)),      # w3 N-tile (bf16)
                pl.BlockSpec((1, block_d), lambda i, j: (0, j)),       # b3 N-tile (f32)
            ],
            out_specs=pl.BlockSpec((block_b, block_d), lambda i, j: (i, j)),
            scratch_shapes=[pltpu.VMEM((block_b, H2), jnp.bfloat16)],  # resident h2
        ),
        compiler_params=pltpu.CompilerParams(
            dimension_semantics=("parallel", "arbitrary"),
            # Headroom for large real output dims; still under v7x's 64 MiB VMEM.
            vmem_limit_bytes=48 * 1024 * 1024,
        ),
        cost_estimate=pl.CostEstimate(flops=flops, transcendentals=0,
                                      bytes_accessed=bytes_accessed),
    )(x_pad, w1, b1, w2, b2, w3, b3)

    return out[:B, :output_dim]


def prepare_params(params):
    """Pad to MXU/lane-friendly shapes and cast matmul operands to bf16.

    * w1 zero-padded on its input dim to a multiple of 128 (matches padded x).
    * w3 / b3 zero-padded on the output dim to a multiple of 128 (lane-dense).
    * Weights in bf16 (MXU-native); biases stay f32 (elementwise math in f32).
    """
    w1, b1, w2, b2, w3, b3 = params
    L, H1 = w1.shape
    H2, D = w3.shape
    L_pad = _round_up(L, _LANE)
    D_pad = _round_up(D, _LANE)

    w1p = jnp.zeros((L_pad, H1), jnp.bfloat16).at[:L, :].set(w1.astype(jnp.bfloat16))
    w3p = jnp.zeros((H2, D_pad), jnp.bfloat16).at[:, :D].set(w3.astype(jnp.bfloat16))
    b3p = jnp.zeros((1, D_pad), jnp.float32).at[:, :D].set(b3.astype(jnp.float32))
    return (w1p, b1.astype(jnp.float32), w2.astype(jnp.bfloat16),
            b2.astype(jnp.float32), w3p, b3p)


def init_params(key, latent_dim, output_dim):
    """Deterministic synthetic init (uniform +-1/sqrt(fan_in), like torch Linear)."""
    ks = jax.random.split(key, 6)

    def lin(kw, kb, fan_in, fan_out):
        bound = 1.0 / jnp.sqrt(float(fan_in))
        w = jax.random.uniform(kw, (fan_in, fan_out), jnp.float32, -bound, bound)
        b = jax.random.uniform(kb, (1, fan_out), jnp.float32, -bound, bound)
        return w, b

    w1, b1 = lin(ks[0], ks[1], latent_dim, 512)
    w2, b2 = lin(ks[2], ks[3], 512, 1024)
    w3, b3 = lin(ks[4], ks[5], 1024, output_dim)
    return (w1, b1, w2, b2, w3, b3)


def reference_forward(x, params):
    """Pure-JAX f32 reference (exact PyTorch math)."""
    w1, b1, w2, b2, w3, b3 = params
    h1 = jnp.maximum(x @ w1 + b1, 0.0)
    h2 = jnp.maximum(h1 @ w2 + b2, 0.0)
    return h2 @ w3 + b3


def reference_forward_bf16(x, params):
    """Reference with the kernel's numerics: bf16 matmul operands, f32 accumulate."""
    w1, b1, w2, b2, w3, b3 = params
    bf = jnp.bfloat16
    h1 = jnp.dot(x.astype(bf), w1.astype(bf), preferred_element_type=jnp.float32) + b1
    h1 = jnp.maximum(h1, 0.0)
    h2 = jnp.dot(h1.astype(bf), w2.astype(bf), preferred_element_type=jnp.float32) + b2
    h2 = jnp.maximum(h2, 0.0)
    return jnp.dot(h2.astype(bf), w3.astype(bf), preferred_element_type=jnp.float32) + b3


if __name__ == "__main__":
    key = jax.random.PRNGKey(0)
    k_x, k_p = jax.random.split(key)

    # ModalityConfig(input_shape=(output_dim,)). Small problem that still
    # exercises every padding path (batch % 128 != 0, latent < 128, output < 128)
    # and leaves >= 2 batch grid steps so both v7x TensorCores get work.
    batch = 200
    latent_dim = 32
    output_dim = 16

    x = jax.random.normal(k_x, (batch, latent_dim), jnp.float32)
    params = init_params(k_p, latent_dim, output_dim)
    prepped = prepare_params(params)

    out = mlp_decoder_forward(x, prepped, output_dim=output_dim,
                              block_b=128, block_d=512)
    out = jax.block_until_ready(out)

    assert out.shape == (batch, output_dim)
    ref_bf16 = reference_forward_bf16(x, params)
    ref_f32 = reference_forward(x, params)
    assert jnp.allclose(out, ref_bf16, atol=2e-2, rtol=2e-2), "mismatch vs bf16-matmul reference"
    assert jnp.allclose(out, ref_f32, atol=1e-1, rtol=1e-1), "mismatch vs f32 reference"

    print("KERNEL_OK")
</pallas_src>

<mosaic_0001>
module attributes {stable_mosaic.version = 11 : i64} {
  func.func @_mlp_decoder_kernel(%arg0: i32, %arg1: i32, %arg2: memref<128x128xf32, #tpu.memory_space<vmem>>, %arg3: memref<128x512xbf16, #tpu.memory_space<vmem>>, %arg4: memref<1x512xf32, #tpu.memory_space<vmem>>, %arg5: memref<512x1024xbf16, #tpu.memory_space<vmem>>, %arg6: memref<1x1024xf32, #tpu.memory_space<vmem>>, %arg7: memref<1024x128xbf16, #tpu.memory_space<vmem>>, %arg8: memref<1x128xf32, #tpu.memory_space<vmem>>, %arg9: memref<128x128xf32, #tpu.memory_space<vmem>>, %arg10: memref<128x1024xbf16, #tpu.memory_space<vmem>>) attributes {dimension_semantics = [#tpu.dimension_semantics<parallel>, #tpu.dimension_semantics<arbitrary>], iteration_bounds = array<i64: 2, 1>, scalar_prefetch = 0 : i64, scratch_operands = 1 : i64, tpu.core_type = #tpu.core_type<tc>, window_params = [{transform_indices = @transform_0, window_bounds = array<i64: 128, 128>}, {pipeline_mode = #tpu.pipeline_mode<synchronous>, transform_indices = @transform_1, window_bounds = array<i64: 128, 512>}, {pipeline_mode = #tpu.pipeline_mode<synchronous>, transform_indices = @transform_2, window_bounds = array<i64: 1, 512>}, {pipeline_mode = #tpu.pipeline_mode<synchronous>, transform_indices = @transform_3, window_bounds = array<i64: 512, 1024>}, {pipeline_mode = #tpu.pipeline_mode<synchronous>, transform_indices = @transform_4, window_bounds = array<i64: 1, 1024>}, {transform_indices = @transform_5, window_bounds = array<i64: 1024, 128>}, {transform_indices = @transform_6, window_bounds = array<i64: 1, 128>}, {transform_indices = @transform_7, window_bounds = array<i64: 128, 128>}]} {
    %c0_i32 = arith.constant 0 : i32
    %0 = arith.cmpi eq, %arg1, %c0_i32 : i32
    %1 = arith.extui %0 : i1 to i32
    %c0_i32_0 = arith.constant 0 : i32
    %2 = arith.cmpi ne, %1, %c0_i32_0 : i32
    scf.if %2 {
      %c0_8 = arith.constant 0 : index
      %c0_9 = arith.constant 0 : index
      %10 = vector.load %arg2[%c0_8, %c0_9] : memref<128x128xf32, #tpu.memory_space<vmem>>, vector<128x128xf32>
      %11 = arith.truncf %10 : vector<128x128xf32> to vector<128x128xbf16>
      %c0_10 = arith.constant 0 : index
      %c0_11 = arith.constant 0 : index
      %12 = vector.load %arg3[%c0_10, %c0_11] : memref<128x512xbf16, #tpu.memory_space<vmem>>, vector<128x512xbf16>
      %cst_12 = arith.constant dense<0.000000e+00> : vector<128x512xf32>
      %13 = tpu.matmul %11, %12, %cst_12 {dimension_numbers = #tpu.dot_dimension_numbers<[1], [0], [0], [1], [0, 0, 1, 1], [], []>} : vector<128x128xbf16>, vector<128x512xbf16>, vector<128x512xf32> -> vector<128x512xf32>
      %c0_13 = arith.constant 0 : index
      %c0_14 = arith.constant 0 : index
      %14 = vector.load %arg4[%c0_13, %c0_14] : memref<1x512xf32, #tpu.memory_space<vmem>>, vector<1x512xf32>
      %15 = vector.broadcast %14 : vector<1x512xf32> to vector<128x512xf32>
      %16 = arith.addf %13, %15 : vector<128x512xf32>
      %cst_15 = arith.constant 0.000000e+00 : f32
      %17 = vector.broadcast %cst_15 : f32 to vector<128x512xf32>
      %18 = arith.maximumf %16, %17 : vector<128x512xf32>
      %19 = arith.truncf %18 : vector<128x512xf32> to vector<128x512xbf16>
      %c0_16 = arith.constant 0 : index
      %c0_17 = arith.constant 0 : index
      %20 = vector.load %arg5[%c0_16, %c0_17] : memref<512x1024xbf16, #tpu.memory_space<vmem>>, vector<512x1024xbf16>
      %cst_18 = arith.constant dense<0.000000e+00> : vector<128x1024xf32>
      %21 = tpu.matmul %19, %20, %cst_18 {dimension_numbers = #tpu.dot_dimension_numbers<[1], [0], [0], [1], [0, 0, 1, 1], [], []>} : vector<128x512xbf16>, vector<512x1024xbf16>, vector<128x1024xf32> -> vector<128x1024xf32>
      %c0_19 = arith.constant 0 : index
      %c0_20 = arith.constant 0 : index
      %22 = vector.load %arg6[%c0_19, %c0_20] : memref<1x1024xf32, #tpu.memory_space<vmem>>, vector<1x1024xf32>
      %23 = vector.broadcast %22 : vector<1x1024xf32> to vector<128x1024xf32>
      %24 = arith.addf %21, %23 : vector<128x1024xf32>
      %cst_21 = arith.constant 0.000000e+00 : f32
      %25 = vector.broadcast %cst_21 : f32 to vector<128x1024xf32>
      %26 = arith.maximumf %24, %25 : vector<128x1024xf32>
      %27 = arith.truncf %26 : vector<128x1024xf32> to vector<128x1024xbf16>
      %c0_22 = arith.constant 0 : index
      %c0_23 = arith.constant 0 : index
      %28 = vector.load %arg10[%c0_22, %c0_23] : memref<128x1024xbf16, #tpu.memory_space<vmem>>, vector<128x1024xbf16>
      tpu.vector_store %arg10[%c0_22, %c0_23], %27 {strides = array<i32>} : memref<128x1024xbf16, #tpu.memory_space<vmem>>, vector<128x1024xbf16>,
    } else {
    }
    %c0 = arith.constant 0 : index
    %c0_1 = arith.constant 0 : index
    %3 = vector.load %arg10[%c0, %c0_1] : memref<128x1024xbf16, #tpu.memory_space<vmem>>, vector<128x1024xbf16>
    %c0_2 = arith.constant 0 : index
    %c0_3 = arith.constant 0 : index
    %4 = vector.load %arg7[%c0_2, %c0_3] : memref<1024x128xbf16, #tpu.memory_space<vmem>>, vector<1024x128xbf16>
    %cst = arith.constant dense<0.000000e+00> : vector<128x128xf32>
    %5 = tpu.matmul %3, %4, %cst {dimension_numbers = #tpu.dot_dimension_numbers<[1], [0], [0], [1], [0, 0, 1, 1], [], []>} : vector<128x1024xbf16>, vector<1024x128xbf16>, vector<128x128xf32> -> vector<128x128xf32>
    %c0_4 = arith.constant 0 : index
    %c0_5 = arith.constant 0 : index
    %6 = vector.load %arg8[%c0_4, %c0_5] : memref<1x128xf32, #tpu.memory_space<vmem>>, vector<1x128xf32>
    %7 = vector.broadcast %6 : vector<1x128xf32> to vector<128x128xf32>
    %8 = arith.addf %5, %7 : vector<128x128xf32>
    %c0_6 = arith.constant 0 : index
    %c0_7 = arith.constant 0 : index
    %9 = vector.load %arg9[%c0_6, %c0_7] : memref<128x128xf32, #tpu.memory_space<vmem>>, vector<128x128xf32>
    tpu.vector_store %arg9[%c0_6, %c0_7], %8 {strides = array<i32>} : memref<128x128xf32, #tpu.memory_space<vmem>>, vector<128x128xf32>,
    return
  }
  func.func @transform_0(%arg0: i32, %arg1: i32) -> (i32, i32) {
    %c0_i32 = arith.constant 0 : i32
    %c0_i32_0 = arith.constant 0 : i32
    return %arg0, %c0_i32 : i32, i32
  }
  func.func @transform_1(%arg0: i32, %arg1: i32) -> (i32, i32) {
    %c0_i32 = arith.constant 0 : i32
    %c0_i32_0 = arith.constant 0 : i32
    %c0_i32_1 = arith.constant 0 : i32
    return %c0_i32, %c0_i32_0 : i32, i32
  }
  func.func @transform_2(%arg0: i32, %arg1: i32) -> (i32, i32) {
    %c0_i32 = arith.constant 0 : i32
    %c0_i32_0 = arith.constant 0 : i32
    %c0_i32_1 = arith.constant 0 : i32
    return %c0_i32, %c0_i32_0 : i32, i32
  }
  func.func @transform_3(%arg0: i32, %arg1: i32) -> (i32, i32) {
    %c0_i32 = arith.constant 0 : i32
    %c0_i32_0 = arith.constant 0 : i32
    %c0_i32_1 = arith.constant 0 : i32
    return %c0_i32, %c0_i32_0 : i32, i32
  }
  func.func @transform_4(%arg0: i32, %arg1: i32) -> (i32, i32) {
    %c0_i32 = arith.constant 0 : i32
    %c0_i32_0 = arith.constant 0 : i32
    %c0_i32_1 = arith.constant 0 : i32
    return %c0_i32, %c0_i32_0 : i32, i32
  }
  func.func @transform_5(%arg0: i32, %arg1: i32) -> (i32, i32) {
    %c0_i32 = arith.constant 0 : i32
    %c0_i32_0 = arith.constant 0 : i32
    return %c0_i32, %arg1 : i32, i32
  }
  func.func @transform_6(%arg0: i32, %arg1: i32) -> (i32, i32) {
    %c0_i32 = arith.constant 0 : i32
    %c0_i32_0 = arith.constant 0 : i32
    return %c0_i32, %arg1 : i32, i32
  }
  func.func @transform_7(%arg0: i32, %arg1: i32) -> (i32, i32) {
    %c0_i32 = arith.constant 0 : i32
    return %arg0, %arg1 : i32, i32
  }
}

</mosaic_0001>

<llo_original>
// kernel: mlp_decoder_forward.1
$region0: #{mlp_decoder_forward.1}
  #allocation0 [shape = 'u32[]', space=smem, size = 0x4, offset = 0x4, fixed_abs, tag = 'smem constant byte address 0x4 - core index']
  #allocation1 [shape = 'u32[144,128]{1,0:T(1,128)}', space=vmem, size = 0x12000, scoped, tag = 'internal scratch']
  #allocation2 [shape = 'bf16[128,1024]{1,0:T(16,128)(2,1)}', space=vmem, size = 0x40000, scoped, tag = 'scratch operand']
  %s0 = inlined_call_operand.vmem [shape: f32[256,128], index: 0, kind: input, shape index: {}]
  %s1 = inlined_call_operand.hbm [shape: bf16[128,512], index: 1, kind: input, shape index: {}]
  %s2 = inlined_call_operand.vmem [shape: f32[1,512], index: 2, kind: input, shape index: {}]
  %s3 = inlined_call_operand.hbm [shape: bf16[512,1024], index: 3, kind: input, shape index: {}]
  %s4 = inlined_call_operand.vmem [shape: f32[1,1024], index: 4, kind: input, shape index: {}]
  %s5 = inlined_call_operand.vmem [shape: bf16[1024,128], index: 5, kind: input, shape index: {}]
  %s6 = inlined_call_operand.vmem [shape: f32[1,128], index: 6, kind: input, shape index: {}]
  %s7 = inlined_call_operand.vmem [shape: f32[256,128], index: 7, kind: output, shape index: {}]
  %s8 = sld [smem:[#allocation0]]
  $region73: #{mlp_decoder_forward.1} parent=0
    _
  %s10 = ssub.s32 1, %s8
  %s11 = scalar_select 0, %s10, %s8
  $region1: #{mlp_decoder_forward.1} parent=0
    #allocation3 [shape = 'u8[131072]{0}', space=vmem, size = 0x20000, scoped, tag = 'input window, operand 1, single buffered']
    #allocation4 [shape = 's32[2]{0}', space=sflag, size = 0x8, scoped, tag = 'scoped memory for mlp_decoder_forward.1']
    #allocation5 [shape = 'u8[1048576]{0}', space=vmem, size = 0x100000, scoped, tag = 'input window, operand 3, single buffered']
    #allocation6 [shape = 's32[1]{0}', space=sflag, size = 0x4, scoped, tag = 'scoped memory for mlp_decoder_forward.1']
    %12 = vsyncpa [#allocation4], 0
    %13 = vsyncpa [#allocation6], 0
    loop: start=0, step=1, limit=4
    $region2: #{mlp_decoder_forward.1} parent=1 // loop_pre_header
      _
    $region3: #{mlp_decoder_forward.1} parent=1 // loop_header
      %s15 = sphi 0, %s19
      %p16 = scmp.ge.s32.totalorder %s15, 4
      %s22 = sphi 0, %s34
      %s23 = sphi 0, %s30
      %s24 = sphi 0, %s22
      %s25 = sphi 0, %s23
      %s26 = sphi 0, %s24
      %s27 = sphi 0, %s25
      %s37 = sphi 0, %s39
      %s40 = sphi 0, %s37
      %s41 = sphi 0, %s40
      %s57 = sphi 0, %s41
      %s61 = sphi 0, %s61
      %s63 = sphi 0, %s61
      %s64 = sphi 0, %s63
      %s78 = sphi 0, %s64
      %s82 = sphi 0, %s82
      %s84 = sphi 0, %s82
      %s85 = sphi 0, %s84
      %s99 = sphi 0, %s85
      %s103 = sphi 0, %s103
      %s105 = sphi 0, %s103
      %s106 = sphi 0, %s105
      %s120 = sphi 0, %s106
      %s124 = sphi 0, %s124
      %s126 = sphi 0, %s124
      %s127 = sphi 0, %s126
      %s141 = sphi 0, %s127
      %s147 = sphi 0, %s149
      %s150 = sphi 0, %s147
      %s151 = sphi 0, %s150
      %s167 = sphi 0, %s151
      %s173 = sphi 0, %s175
      %s176 = sphi 0, %s173
      %s177 = sphi 0, %s176
      %s193 = sphi 0, %s177
      %s201 = sphi 0, %s203
      %s204 = sphi 0, %s201
      %s205 = sphi 0, %s204
      %s221 = sphi 0, %s205
    $region4: #{mlp_decoder_forward.1} parent=1 // loop_header_branch
      %18 = sbr.rel (%p16) target = $region8
    $region5: #{mlp_decoder_forward.1} parent=1 // loop_body
      %s20 = ssub.s32 %s15, 1
      %s21 = ssub.s32 %s15, 2
      %s28 = sadd.s32 1, %s23
      %p29 = scmp.ge.s32.totalorder %s28, 1
      %s30 = scalar_select %p29, 0, %s28
      %s31 = sadd.s32 1, %s22
      %s32 = scalar_select %p29, %s31, %s22
      %p33 = scmp.ge.s32.totalorder %s32, 2
      %s34 = scalar_select %p33, 0, %s32
      %s35 = ssub.s32 %s22, %s34
      %p36 = scmp.eq.s32.totalorder %s35, 0
      %s38 = sadd.s32 %s37, 1
      %s39 = scalar_select %p36, %s37, %s38
      %p42 = pneg %p36
      %p43 = scmp.eq.s32.totalorder %s15, 1
      %p44 = por %p42, %p43
      %p45 = scmp.ne.s32.totalorder %s37, %s40
      %p46 = scmp.eq.s32.totalorder %s15, 0
      %p47 = por %p45, %p46
      %p48 = scmp.ne.s32.totalorder %s37, %s40
      %p49 = scmp.eq.s32.totalorder %s20, 1
      %p50 = por %p48, %p49
      %p51 = scmp.ne.s32.totalorder %s40, %s41
      %p52 = scmp.eq.s32.totalorder %s20, 0
      %p53 = por %p51, %p52
      %p54 = scmp.ne.s32.totalorder %s40, %s41
      %p55 = scmp.eq.s32.totalorder %s21, 1
      %p56 = por %p54, %p55
      %p58 = scmp.ne.s32.totalorder %s41, %s57
      %p59 = scmp.eq.s32.totalorder %s21, 0
      %p60 = por %p58, %p59
      %s62 = sadd.s32 %s61, 1
      %p65 = scmp.eq.s32.totalorder %s15, 1
      %p66 = scmp.ne.s32.totalorder %s61, %s63
      %p67 = scmp.eq.s32.totalorder %s15, 0
      %p68 = por %p66, %p67
      %p69 = scmp.ne.s32.totalorder %s61, %s63
      %p70 = scmp.eq.s32.totalorder %s20, 1
      %p71 = por %p69, %p70
      %p72 = scmp.ne.s32.totalorder %s63, %s64
      %p73 = scmp.eq.s32.totalorder %s20, 0
      %p74 = por %p72, %p73
      %p75 = scmp.ne.s32.totalorder %s63, %s64
      %p76 = scmp.eq.s32.totalorder %s21, 1
      %p77 = por %p75, %p76
      %p79 = scmp.ne.s32.totalorder %s64, %s78
      %p80 = scmp.eq.s32.totalorder %s21, 0
      %p81 = por %p79, %p80
      %s83 = sadd.s32 %s82, 1
      %p86 = scmp.eq.s32.totalorder %s15, 1
      %p87 = scmp.ne.s32.totalorder %s82, %s84
      %p88 = scmp.eq.s32.totalorder %s15, 0
      %p89 = por %p87, %p88
      %p90 = scmp.ne.s32.totalorder %s82, %s84
      %p91 = scmp.eq.s32.totalorder %s20, 1
      %p92 = por %p90, %p91
      %p93 = scmp.ne.s32.totalorder %s84, %s85
      %p94 = scmp.eq.s32.totalorder %s20, 0
      %p95 = por %p93, %p94
      %p96 = scmp.ne.s32.totalorder %s84, %s85
      %p97 = scmp.eq.s32.totalorder %s21, 1
      %p98 = por %p96, %p97
      %p100 = scmp.ne.s32.totalorder %s85, %s99
      %p101 = scmp.eq.s32.totalorder %s21, 0
      %p102 = por %p100, %p101
      %s104 = sadd.s32 %s103, 1
      %p107 = scmp.eq.s32.totalorder %s15, 1
      %p108 = scmp.ne.s32.totalorder %s103, %s105
      %p109 = scmp.eq.s32.totalorder %s15, 0
      %p110 = por %p108, %p109
      %p111 = scmp.ne.s32.totalorder %s103, %s105
      %p112 = scmp.eq.s32.totalorder %s20, 1
      %p113 = por %p111, %p112
      %p114 = scmp.ne.s32.totalorder %s105, %s106
      %p115 = scmp.eq.s32.totalorder %s20, 0
      %p116 = por %p114, %p115
      %p117 = scmp.ne.s32.totalorder %s105, %s106
      %p118 = scmp.eq.s32.totalorder %s21, 1
      %p119 = por %p117, %p118
      %p121 = scmp.ne.s32.totalorder %s106, %s120
      %p122 = scmp.eq.s32.totalorder %s21, 0
      %p123 = por %p121, %p122
      %s125 = sadd.s32 %s124, 1
      %p128 = scmp.eq.s32.totalorder %s15, 1
      %p129 = scmp.ne.s32.totalorder %s124, %s126
      %p130 = scmp.eq.s32.totalorder %s15, 0
      %p131 = por %p129, %p130
      %p132 = scmp.ne.s32.totalorder %s124, %s126
      %p133 = scmp.eq.s32.totalorder %s20, 1
      %p134 = por %p132, %p133
      %p135 = scmp.ne.s32.totalorder %s126, %s127
      %p136 = scmp.eq.s32.totalorder %s20, 0
      %p137 = por %p135, %p136
      %p138 = scmp.ne.s32.totalorder %s126, %s127
      %p139 = scmp.eq.s32.totalorder %s21, 1
      %p140 = por %p138, %p139
      %p142 = scmp.ne.s32.totalorder %s127, %s141
      %p143 = scmp.eq.s32.totalorder %s21, 0
      %p144 = por %p142, %p143
      %s145 = ssub.s32 %s23, %s30
      %p146 = scmp.eq.s32.totalorder %s145, 0
      %s148 = sadd.s32 %s147, 1
      %s149 = scalar_select %p146, %s147, %s148
      %p152 = pneg %p146
      %p153 = scmp.eq.s32.totalorder %s15, 1
      %p154 = por %p152, %p153
      %p155 = scmp.ne.s32.totalorder %s147, %s150
      %p156 = scmp.eq.s32.totalorder %s15, 0
      %p157 = por %p155, %p156
      %p158 = scmp.ne.s32.totalorder %s147, %s150
      %p159 = scmp.eq.s32.totalorder %s20, 1
      %p160 = por %p158, %p159
      %p161 = scmp.ne.s32.totalorder %s150, %s151
      %p162 = scmp.eq.s32.totalorder %s20, 0
      %p163 = por %p161, %p162
      %p164 = scmp.ne.s32.totalorder %s150, %s151
      %p165 = scmp.eq.s32.totalorder %s21, 1
      %p166 = por %p164, %p165
      %p168 = scmp.ne.s32.totalorder %s151, %s167
      %p169 = scmp.eq.s32.totalorder %s21, 0
      %p170 = por %p168, %p169
      %s171 = ssub.s32 %s23, %s30
      %p172 = scmp.eq.s32.totalorder %s171, 0
      %s174 = sadd.s32 %s173, 1
      %s175 = scalar_select %p172, %s173, %s174
      %p178 = pneg %p172
      %p179 = scmp.eq.s32.totalorder %s15, 1
      %p180 = por %p178, %p179
      %p181 = scmp.ne.s32.totalorder %s173, %s176
      %p182 = scmp.eq.s32.totalorder %s15, 0
      %p183 = por %p181, %p182
      %p184 = scmp.ne.s32.totalorder %s173, %s176
      %p185 = scmp.eq.s32.totalorder %s20, 1
      %p186 = por %p184, %p185
      %p187 = scmp.ne.s32.totalorder %s176, %s177
      %p188 = scmp.eq.s32.totalorder %s20, 0
      %p189 = por %p187, %p188
      %p190 = scmp.ne.s32.totalorder %s176, %s177
      %p191 = scmp.eq.s32.totalorder %s21, 1
      %p192 = por %p190, %p191
      %p194 = scmp.ne.s32.totalorder %s177, %s193
      %p195 = scmp.eq.s32.totalorder %s21, 0
      %p196 = por %p194, %p195
      %s197 = ssub.s32 %s22, %s34
      %s198 = ssub.s32 %s23, %s30
      %s199 = sor.u32 %s197, %s198
      %p200 = scmp.eq.s32.totalorder %s199, 0
      %s202 = sadd.s32 %s201, 1
      %s203 = scalar_select %p200, %s201, %s202
      %p206 = pneg %p200
      %p207 = scmp.eq.s32.totalorder %s15, 1
      %p208 = por %p206, %p207
      %p209 = scmp.ne.s32.totalorder %s201, %s204
      %p210 = scmp.eq.s32.totalorder %s15, 0
      %p211 = por %p209, %p210
      %p212 = scmp.ne.s32.totalorder %s201, %s204
      %p213 = scmp.eq.s32.totalorder %s20, 1
      %p214 = por %p212, %p213
      %p215 = scmp.ne.s32.totalorder %s204, %s205
      %p216 = scmp.eq.s32.totalorder %s20, 0
      %p217 = por %p215, %p216
      %p218 = scmp.ne.s32.totalorder %s204, %s205
      %p219 = scmp.eq.s32.totalorder %s21, 1
      %p220 = por %p218, %p219
      %p222 = scmp.ne.s32.totalorder %s205, %s221
      %p223 = scmp.eq.s32.totalorder %s21, 0
      %p224 = por %p222, %p223
      %p225 = scmp.le.s32.totalorder 1, %s15
      %p226 = scmp.lt.s32.totalorder %s15, 3
      %p227 = pnand %p225, %p226
      %p228 = pneg %p227
      // Predicated region
      $region9: #{mlp_decoder_forward.1} parent=5 // pred_check
        _
      $region10: #{mlp_decoder_forward.1} parent=5 // pred_check_branch
        %230 = sbr.rel (%p227) target = $region12
      $region11: #{mlp_decoder_forward.1} parent=5 // pred_region
        %s231 = ssub.s32 %s15, 1
        // Predicated region
        $region13: #{mlp_decoder_forward.1} parent=11 // pred_check
          %p232 = pneg %p74
        $region14: #{mlp_decoder_forward.1} parent=11 // pred_check_branch
          %234 = sbr.rel (%p232) target = $region16
        $region15: #{mlp_decoder_forward.1} parent=11 // pred_region
          %s236 = ssub.s32 4096, 4096
          %237 = vsyncadd [#allocation4], %s236
          %s238 = sshll.u32 [#allocation3], 4
          %s239 = int_to_ptr.vmem [resolvable:$true] %s238
          %244 = dma.hbm_to_vmem [thread:$0]  %s1, 4096, %s239, [#allocation4], 256, 256, 16
        $region16: #{mlp_decoder_forward.1} parent=11 // pred_fallthru
          _
        // Predicated region
        $region17: #{mlp_decoder_forward.1} parent=11 // pred_check
          %p245 = pneg %p95
        $region18: #{mlp_decoder_forward.1} parent=11 // pred_check_branch
          %247 = sbr.rel (%p245) target = $region20
        $region19: #{mlp_decoder_forward.1} parent=11 // pred_region
          _
        $region20: #{mlp_decoder_forward.1} parent=11 // pred_fallthru
          _
        // Predicated region
        $region21: #{mlp_decoder_forward.1} parent=11 // pred_check
          %p248 = pneg %p116
        $region22: #{mlp_decoder_forward.1} parent=11 // pred_check_branch
          %250 = sbr.rel (%p248) target = $region24
        $region23: #{mlp_decoder_forward.1} parent=11 // pred_region
          %s252 = ssub.s32 32768, 32768
          %253 = vsyncadd [#allocation6], %s252
          %s254 = sshll.u32 [#allocation5], 4
          %s255 = int_to_ptr.vmem [resolvable:$true] %s254
          %260 = dma.hbm_to_vmem [thread:$0]  %s3, 32768, %s255, [#allocation6], 512, 512, 32
        $region24: #{mlp_decoder_forward.1} parent=11 // pred_fallthru
          _
        // Predicated region
        $region25: #{mlp_decoder_forward.1} parent=11 // pred_check
          %p261 = pneg %p137
        $region26: #{mlp_decoder_forward.1} parent=11 // pred_check_branch
          %263 = sbr.rel (%p261) target = $region28
        $region27: #{mlp_decoder_forward.1} parent=11 // pred_region
          _
        $region28: #{mlp_decoder_forward.1} parent=11 // pred_fallthru
          _
        // Predicated region
        $region29: #{mlp_decoder_forward.1} parent=11 // pred_check
          %p264 = pneg %p163
        $region30: #{mlp_decoder_forward.1} parent=11 // pred_check_branch
          %266 = sbr.rel (%p264) target = $region32
        $region31: #{mlp_decoder_forward.1} parent=11 // pred_region
          %p267 = scmp.lt.s32.totalorder %s25, 0
          %s268 = scalar_select %p267, %s25, 0
          %s269 = smul.addr %s268, 4
          %s270 = scalar_lea.vmem %s5, %s269
        $region32: #{mlp_decoder_forward.1} parent=11 // pred_fallthru
          _
        // Predicated region
        $region33: #{mlp_decoder_forward.1} parent=11 // pred_check
          %p271 = pneg %p189
        $region34: #{mlp_decoder_forward.1} parent=11 // pred_check_branch
          %273 = sbr.rel (%p271) target = $region36
        $region35: #{mlp_decoder_forward.1} parent=11 // pred_region
          %p274 = scmp.lt.s32.totalorder %s25, 0
          %s275 = scalar_select %p274, %s25, 0
          %s276 = scalar_lea.vmem %s6, %s275
        $region36: #{mlp_decoder_forward.1} parent=11 // pred_fallthru
          _
      $region12: #{mlp_decoder_forward.1} parent=5 // pred_fallthru
        _
      %p277 = scmp.lt.s32.totalorder %s15, 2
      // Predicated region
      $region37: #{mlp_decoder_forward.1} parent=5 // pred_check
        %p278 = pneg %p277
      $region38: #{mlp_decoder_forward.1} parent=5 // pred_check_branch
        %280 = sbr.rel (%p278) target = $region40
      $region39: #{mlp_decoder_forward.1} parent=5 // pred_region
        // Predicated region
        $region41: #{mlp_decoder_forward.1} parent=39 // pred_check
          %p281 = pneg %p47
        $region42: #{mlp_decoder_forward.1} parent=39 // pred_check_branch
          %283 = sbr.rel (%p281) target = $region44
        $region43: #{mlp_decoder_forward.1} parent=39 // pred_region
          %s284 = smul.u32 16, %s22
          %p285 = scmp.lt.s32.totalorder %s284, 31
          %s286 = scalar_select %p285, %s284, 31
          %s287 = smul.addr %s286, 8
          %s288 = scalar_lea.vmem %s0, %s287
          %s289 = smul.u32 16, %s22
        $region44: #{mlp_decoder_forward.1} parent=39 // pred_fallthru
          _
      $region40: #{mlp_decoder_forward.1} parent=5 // pred_fallthru
        _
      %p290 = scmp.le.s32.totalorder 1, %s15
      %p291 = scmp.lt.s32.totalorder %s15, 3
      %p292 = pnand %p290, %p291
      %p293 = pneg %p292
      // Predicated region
      $region45: #{mlp_decoder_forward.1} parent=5 // pred_check
        _
      $region46: #{mlp_decoder_forward.1} parent=5 // pred_check_branch
        %295 = sbr.rel (%p292) target = $region48
      $region47: #{mlp_decoder_forward.1} parent=5 // pred_region
        %s296 = ssub.s32 %s15, 1
        // Predicated region
        $region49: #{mlp_decoder_forward.1} parent=47 // pred_check
          %p297 = pneg %p74
        $region50: #{mlp_decoder_forward.1} parent=47 // pred_check_branch
          %299 = sbr.rel (%p297) target = $region52
        $region51: #{mlp_decoder_forward.1} parent=47 // pred_region
          %300 = dma.done [#allocation4], 4096
        $region52: #{mlp_decoder_forward.1} parent=47 // pred_fallthru
          _
        // Predicated region
        $region53: #{mlp_decoder_forward.1} parent=47 // pred_check
          %p301 = pneg %p116
        $region54: #{mlp_decoder_forward.1} parent=47 // pred_check_branch
          %303 = sbr.rel (%p301) target = $region56
        $region55: #{mlp_decoder_forward.1} parent=47 // pred_region
          %304 = dma.done [#allocation6], 32768
        $region56: #{mlp_decoder_forward.1} parent=47 // pred_fallthru
          _
        %s305 = smul.u32 16, %s24
        %p306 = scmp.lt.s32.totalorder %s305, 31
        %s307 = scalar_select %p306, %s305, 31
        %s308 = smul.addr %s307, 8
        %s309 = scalar_lea.vmem %s0, %s308
        %p310 = pneg %p53
        %p311 = pneg %p50
        %p312 = pneg %p74
        %p313 = pneg %p71
        %p314 = pneg %p95
        %p315 = pneg %p92
        %p316 = pneg %p116
        %p317 = pneg %p113
        %p318 = pneg %p137
        %p319 = pneg %p134
        %p320 = scmp.lt.s32.totalorder %s25, 0
        %s321 = scalar_select %p320, %s25, 0
        %s322 = smul.addr %s321, 4
        %s323 = scalar_lea.vmem %s5, %s322
        %p324 = pneg %p163
        %p325 = pneg %p160
        %p326 = scmp.lt.s32.totalorder %s25, 0
        %s327 = scalar_select %p326, %s25, 0
        %s328 = scalar_lea.vmem %s6, %s327
        %p329 = pneg %p189
        %p330 = pneg %p186
        %p331 = pneg %p217
        %p332 = pneg %p214
        %s333 = smul.u32 16, %s24
        %p334 = scmp.lt.s32.totalorder %s333, 31
        %s335 = scalar_select %p334, %s333, 31
        %p336 = scmp.lt.s32.totalorder %s25, 0
        %s337 = scalar_select %p336, %s25, 0
        %s338 = sadd.s32 %s337, %s335
        %s339 = smul.addr %s338, 8
        %s340 = scalar_lea.vmem %s7, %s339
        %s341 = smul.u32 16, %s24
        %p342 = scmp.lt.s32.totalorder %s341, 31
        %s343 = scalar_select %p342, %s341, 31
        %s344 = smul.addr %s343, 8
        %s345 = scalar_lea.vmem %s0, %s344
        %s346 = smul.u32 16, %s24
        %p347 = scmp.lt.s32.totalorder %s25, 0
        %s348 = scalar_select %p347, %s25, 0
        %s349 = smul.addr %s348, 4
        %s350 = scalar_lea.vmem %s5, %s349
        %p351 = scmp.lt.s32.totalorder %s25, 0
        %s352 = scalar_select %p351, %s25, 0
        %s353 = scalar_lea.vmem %s6, %s352
        %s354 = smul.u32 16, %s24
        %p355 = scmp.lt.s32.totalorder %s354, 31
        %s356 = scalar_select %p355, %s354, 31
        %p357 = scmp.lt.s32.totalorder %s25, 0
        %s358 = scalar_select %p357, %s25, 0
        %s359 = sadd.s32 %s358, %s356
        %s360 = smul.addr %s359, 8
        %s361 = scalar_lea.vmem %s7, %s360
        %s362 = smul.u32 16, %s24
        %p364 = scmp.eq.s32.totalorder %s25, 0
        // Predicated region
        $region57: #{mlp_decoder_forward.1} parent=47 // pred_check
          %p365 = pneg %p364
        $region58: #{mlp_decoder_forward.1} parent=47 // pred_check_branch
          %367 = sbr.rel (%p365) target = $region60
        $region59: #{mlp_decoder_forward.1} parent=47 // pred_region
          %v368 = vld [vmem:[%s345] sm:$0xff]
          %v369 = vld [vmem:[%s345 + $0x8] sm:$0xff]
          %v370 = vld [vmem:[%s345 + $0x10] sm:$0xff]
          %v371 = vld [vmem:[%s345 + $0x18] sm:$0xff]
          %v372 = vld [vmem:[%s345 + $0x20] sm:$0xff]
          %v373 = vld [vmem:[%s345 + $0x28] sm:$0xff]
          %v374 = vld [vmem:[%s345 + $0x30] sm:$0xff]
          %v375 = vld [vmem:[%s345 + $0x38] sm:$0xff]
          %v376 = vld [vmem:[%s345 + $0x40] sm:$0xff]
          %v377 = vld [vmem:[%s345 + $0x48] sm:$0xff]
          %v378 = vld [vmem:[%s345 + $0x50] sm:$0xff]
          %v379 = vld [vmem:[%s345 + $0x58] sm:$0xff]
          %v380 = vld [vmem:[%s345 + $0x60] sm:$0xff]
          %v381 = vld [vmem:[%s345 + $0x68] sm:$0xff]
          %v382 = vld [vmem:[%s345 + $0x70] sm:$0xff]
          %v383 = vld [vmem:[%s345 + $0x78] sm:$0xff]
          %v384 = vpack.c.bf16 %v369, %v368
          %v385 = vpack.c.bf16 %v371, %v370
          %v386 = vpack.c.bf16 %v373, %v372
          %v387 = vpack.c.bf16 %v375, %v374
          %v388 = vpack.c.bf16 %v377, %v376
          %v389 = vpack.c.bf16 %v379, %v378
          %v390 = vpack.c.bf16 %v381, %v380
          %v391 = vpack.c.bf16 %v383, %v382
          %v392 = vld [vmem:[#allocation3] sm:$0xff]
          %v393 = vld [vmem:[#allocation3 + $0x8] sm:$0xff]
          %v394 = vld [vmem:[#allocation3 + $0x10] sm:$0xff]
          %v395 = vld [vmem:[#allocation3 + $0x18] sm:$0xff]
          %v396 = vld [vmem:[#allocation3 + $0x20] sm:$0xff]
          %v397 = vld [vmem:[#allocation3 + $0x28] sm:$0xff]
          %v398 = vld [vmem:[#allocation3 + $0x30] sm:$0xff]
          %v399 = vld [vmem:[#allocation3 + $0x38] sm:$0xff]
          %v400 = vld [vmem:[#allocation3 + $0x40] sm:$0xff]
          %v401 = vld [vmem:[#allocation3 + $0x48] sm:$0xff]
          %v402 = vld [vmem:[#allocation3 + $0x50] sm:$0xff]
          %v403 = vld [vmem:[#allocation3 + $0x58] sm:$0xff]
          %v404 = vld [vmem:[#allocation3 + $0x60] sm:$0xff]
          %v405 = vld [vmem:[#allocation3 + $0x68] sm:$0xff]
          %v406 = vld [vmem:[#allocation3 + $0x70] sm:$0xff]
          %v407 = vld [vmem:[#allocation3 + $0x78] sm:$0xff]
          %v408 = vld [vmem:[#allocation3 + $0x80] sm:$0xff]
          %v409 = vld [vmem:[#allocation3 + $0x88] sm:$0xff]
          %v410 = vld [vmem:[#allocation3 + $0x90] sm:$0xff]
          %v411 = vld [vmem:[#allocation3 + $0x98] sm:$0xff]
          %v412 = vld [vmem:[#allocation3 + $0xa0] sm:$0xff]
          %v413 = vld [vmem:[#allocation3 + $0xa8] sm:$0xff]
          %v414 = vld [vmem:[#allocation3 + $0xb0] sm:$0xff]
          %v415 = vld [vmem:[#allocation3 + $0xb8] sm:$0xff]
          %v416 = vld [vmem:[#allocation3 + $0xc0] sm:$0xff]
          %v417 = vld [vmem:[#allocation3 + $0xc8] sm:$0xff]
          %v418 = vld [vmem:[#allocation3 + $0xd0] sm:$0xff]
          %v419 = vld [vmem:[#allocation3 + $0xd8] sm:$0xff]
          %v420 = vld [vmem:[#allocation3 + $0xe0] sm:$0xff]
          %v421 = vld [vmem:[#allocation3 + $0xe8] sm:$0xff]
          %v422 = vld [vmem:[#allocation3 + $0xf0] sm:$0xff]
          %v423 = vld [vmem:[#allocation3 + $0xf8] sm:$0xff]
          %v424 = vld [vmem:[%s2] sm:$0xf]
          %v426 = vlaneseq
          %v427 = vshrl.u32 %v426, 7
          %v428 = vsub.s32 0, %v427
          %v429 = vrot.slane %v424, %v428
          %v430 = vlaneseq
          %v431 = vshrl.u32 %v430, 7
          %v432 = vsub.s32 1, %v431
          %v433 = vrot.slane %v424, %v432
          %v434 = vlaneseq
          %v435 = vshrl.u32 %v434, 7
          %v436 = vsub.s32 2, %v435
          %v437 = vrot.slane %v424, %v436
          %v438 = vlaneseq
          %v439 = vshrl.u32 %v438, 7
          %v440 = vsub.s32 3, %v439
          %v441 = vrot.slane %v424, %v440
          %v478 = vunpack.c.l.b16 %v392
          %v479 = vunpack.c.h.b16 %v392
          %v480 = vunpack.c.l.b16 %v393
          %v481 = vunpack.c.h.b16 %v393
          %v482 = vunpack.c.l.b16 %v394
          %v483 = vunpack.c.h.b16 %v394
          %v484 = vunpack.c.l.b16 %v395
          %v485 = vunpack.c.h.b16 %v395
          %v486 = vunpack.c.l.b16 %v396
          %v487 = vunpack.c.h.b16 %v396
          %v488 = vunpack.c.l.b16 %v397
          %v489 = vunpack.c.h.b16 %v397
          %v490 = vunpack.c.l.b16 %v398
          %v491 = vunpack.c.h.b16 %v398
          %v492 = vunpack.c.l.b16 %v399
          %v493 = vunpack.c.h.b16 %v399
          %v494 = vunpack.c.l.b16 %v400
          %v495 = vunpack.c.h.b16 %v400
          %v496 = vunpack.c.l.b16 %v401
          %v497 = vunpack.c.h.b16 %v401
          %v498 = vunpack.c.l.b16 %v402
          %v499 = vunpack.c.h.b16 %v402
          %v500 = vunpack.c.l.b16 %v403
          %v501 = vunpack.c.h.b16 %v403
          %v502 = vunpack.c.l.b16 %v404
          %v503 = vunpack.c.h.b16 %v404
          %v504 = vunpack.c.l.b16 %v405
          %v505 = vunpack.c.h.b16 %v405
          %v506 = vunpack.c.l.b16 %v406
          %v507 = vunpack.c.h.b16 %v406
          %v508 = vunpack.c.l.b16 %v407
          %v509 = vunpack.c.h.b16 %v407
          %v510 = vunpack.c.l.b16 %v408
          %v511 = vunpack.c.h.b16 %v408
          %v512 = vunpack.c.l.b16 %v409
          %v513 = vunpack.c.h.b16 %v409
          %v514 = vunpack.c.l.b16 %v410
          %v515 = vunpack.c.h.b16 %v410
          %v516 = vunpack.c.l.b16 %v411
          %v517 = vunpack.c.h.b16 %v411
          %v518 = vunpack.c.l.b16 %v412
          %v519 = vunpack.c.h.b16 %v412
          %v520 = vunpack.c.l.b16 %v413
          %v521 = vunpack.c.h.b16 %v413
          %v522 = vunpack.c.l.b16 %v414
          %v523 = vunpack.c.h.b16 %v414
          %v524 = vunpack.c.l.b16 %v415
          %v525 = vunpack.c.h.b16 %v415
          %v526 = vunpack.c.l.b16 %v416
          %v527 = vunpack.c.h.b16 %v416
          %v528 = vunpack.c.l.b16 %v417
          %v529 = vunpack.c.h.b16 %v417
          %v530 = vunpack.c.l.b16 %v418
          %v531 = vunpack.c.h.b16 %v418
          %v532 = vunpack.c.l.b16 %v419
          %v533 = vunpack.c.h.b16 %v419
          %v534 = vunpack.c.l.b16 %v420
          %v535 = vunpack.c.h.b16 %v420
          %v536 = vunpack.c.l.b16 %v421
          %v537 = vunpack.c.h.b16 %v421
          %v538 = vunpack.c.l.b16 %v422
          %v539 = vunpack.c.h.b16 %v422
          %v540 = vunpack.c.l.b16 %v423
          %v541 = vunpack.c.h.b16 %v423
          %v542 = vpack.c.b16 %v482, %v478
          %v543 = vpack.c.b16 %v483, %v479
          %v544 = vpack.c.b16 %v484, %v480
          %v545 = vpack.c.b16 %v485, %v481
          %v546 = vpack.c.b16 %v490, %v486
          %v547 = vpack.c.b16 %v491, %v487
          %v548 = vpack.c.b16 %v492, %v488
          %v549 = vpack.c.b16 %v493, %v489
          %v550 = vpack.c.b16 %v498, %v494
          %v551 = vpack.c.b16 %v499, %v495
          %v552 = vpack.c.b16 %v500, %v496
          %v553 = vpack.c.b16 %v501, %v497
          %v554 = vpack.c.b16 %v506, %v502
          %v555 = vpack.c.b16 %v507, %v503
          %v556 = vpack.c.b16 %v508, %v504
          %v557 = vpack.c.b16 %v509, %v505
          %v558 = vpack.c.b16 %v514, %v510
          %v559 = vpack.c.b16 %v515, %v511
          %v560 = vpack.c.b16 %v516, %v512
          %v561 = vpack.c.b16 %v517, %v513
          %v562 = vpack.c.b16 %v522, %v518
          %v563 = vpack.c.b16 %v523, %v519
          %v564 = vpack.c.b16 %v524, %v520
          %v565 = vpack.c.b16 %v525, %v521
          %v566 = vpack.c.b16 %v530, %v526
          %v567 = vpack.c.b16 %v531, %v527
          %v568 = vpack.c.b16 %v532, %v528
          %v569 = vpack.c.b16 %v533, %v529
          %v570 = vpack.c.b16 %v538, %v534
          %v571 = vpack.c.b16 %v539, %v535
          %v572 = vpack.c.b16 %v540, %v536
          %v573 = vpack.c.b16 %v541, %v537
          %606 = vmatprep.subr.bf16.mxu0 %v543
          %607 = vmatpush1.bf16.msra.mxu0 %v542
          %608 = vmatprep.subr.bf16.mxu0 %v547
          %609 = vmatpush1.bf16.msra.mxu0 %v546
          %610 = vmatprep.subr.bf16.mxu0 %v551
          %611 = vmatpush1.bf16.msra.mxu0 %v550
          %612 = vmatprep.subr.bf16.mxu0 %v555
          %613 = vmatpush1.bf16.msra.mxu0 %v554
          %614 = vmatprep.subr.bf16.mxu0 %v559
          %615 = vmatpush1.bf16.msra.mxu0 %v558
          %616 = vmatprep.subr.bf16.mxu0 %v563
          %617 = vmatpush1.bf16.msra.mxu0 %v562
          %618 = vmatprep.subr.bf16.mxu0 %v567
          %619 = vmatpush1.bf16.msra.mxu0 %v566
          %620 = vmatprep.subr.bf16.mxu0 %v571
          %621 = vmatpush1.bf16.msra.mxu0 %v570
          %622 = vmatprep.subr.bf16.mxu0 0
          %623 = vmatpush1.bf16.msra.mxu0 0
          %624 = vmatprep.subr.bf16.mxu0 0
          %625 = vmatpush1.bf16.msra.mxu0 0
          %626 = vmatprep.subr.bf16.mxu0 0
          %627 = vmatpush1.bf16.msra.mxu0 0
          %628 = vmatprep.subr.bf16.mxu0 0
          %629 = vmatpush1.bf16.msra.mxu0 0
          %630 = vmatprep.subr.bf16.mxu0 0
          %631 = vmatpush1.bf16.msra.mxu0 0
          %632 = vmatprep.subr.bf16.mxu0 0
          %633 = vmatpush1.bf16.msra.mxu0 0
          %634 = vmatprep.subr.bf16.mxu0 0
          %635 = vmatpush1.bf16.msra.mxu0 0
          %636 = vmatprep.subr.bf16.mxu0 0
          %637 = vmatpush1.bf16.msra.mxu0 0
          %638 = vmatprep.mubr.bf16.mxu0 0
          %639 = vmatmul.mubr.bf16.gmra.mrb[0].mxu0 %v384
          %v640 = vpop.f32.mrb[0].mxu0
          %v641 = vadd.f32 %v429, %v640
          %v642 = vpop.f32.mrb[0].mxu0
          %v643 = vadd.f32 %v433, %v642
          %v644 = vpop.f32.mrb[0].mxu0
          %v645 = vadd.f32 %v429, %v644
          %v646 = vpop.f32.mrb[0].mxu0
          %v647 = vadd.f32 %v433, %v646
          %648 = vmatprep.mubr.bf16.mxu0 0
          %649 = vmatmul.mubr.bf16.gmra.mrb[0].mxu0 %v385
          %v650 = vpop.f32.mrb[0].mxu0
          %v651 = vadd.f32 %v429, %v650
          %v652 = vpop.f32.mrb[0].mxu0
          %v653 = vadd.f32 %v433, %v652
          %v654 = vpop.f32.mrb[0].mxu0
          %v655 = vadd.f32 %v429, %v654
          %v656 = vpop.f32.mrb[0].mxu0
          %v657 = vadd.f32 %v433, %v656
          %658 = vmatprep.mubr.bf16.mxu0 0
          %659 = vmatmul.mubr.bf16.gmra.mrb[0].mxu0 %v386
          %v660 = vpop.f32.mrb[0].mxu0
          %v661 = vadd.f32 %v429, %v660
          %v662 = vpop.f32.mrb[0].mxu0
          %v663 = vadd.f32 %v433, %v662
          %v664 = vpop.f32.mrb[0].mxu0
          %v665 = vadd.f32 %v429, %v664
          %v666 = vpop.f32.mrb[0].mxu0
          %v667 = vadd.f32 %v433, %v666
          %668 = vmatprep.mubr.bf16.mxu0 0
          %669 = vmatmul.mubr.bf16.gmra.mrb[0].mxu0 %v387
          %v670 = vpop.f32.mrb[0].mxu0
          %v671 = vadd.f32 %v429, %v670
          %v672 = vpop.f32.mrb[0].mxu0
          %v673 = vadd.f32 %v433, %v672
          %v674 = vpop.f32.mrb[0].mxu0
          %v675 = vadd.f32 %v429, %v674
          %v676 = vpop.f32.mrb[0].mxu0
          %v677 = vadd.f32 %v433, %v676
          %678 = vmatprep.mubr.bf16.mxu0 0
          %679 = vmatmul.mubr.bf16.gmra.mrb[0].mxu0 %v388
          %v680 = vpop.f32.mrb[0].mxu0
          %v681 = vadd.f32 %v429, %v680
          %v682 = vpop.f32.mrb[0].mxu0
          %v683 = vadd.f32 %v433, %v682
          %v684 = vpop.f32.mrb[0].mxu0
          %v685 = vadd.f32 %v429, %v684
          %v686 = vpop.f32.mrb[0].mxu0
          %v687 = vadd.f32 %v433, %v686
          %688 = vmatprep.mubr.bf16.mxu0 0
          %689 = vmatmul.mubr.bf16.gmra.mrb[0].mxu0 %v389
          %v690 = vpop.f32.mrb[0].mxu0
          %v691 = vadd.f32 %v429, %v690
          %v692 = vpop.f32.mrb[0].mxu0
          %v693 = vadd.f32 %v433, %v692
          %v694 = vpop.f32.mrb[0].mxu0
          %v695 = vadd.f32 %v429, %v694
          %v696 = vpop.f32.mrb[0].mxu0
          %v697 = vadd.f32 %v433, %v696
          %698 = vmatprep.mubr.bf16.mxu0 0
          %699 = vmatmul.mubr.bf16.gmra.mrb[0].mxu0 %v390
          %v700 = vpop.f32.mrb[0].mxu0
          %v701 = vadd.f32 %v429, %v700
          %v702 = vpop.f32.mrb[0].mxu0
          %v703 = vadd.f32 %v433, %v702
          %v704 = vpop.f32.mrb[0].mxu0
          %v705 = vadd.f32 %v429, %v704
          %v706 = vpop.f32.mrb[0].mxu0
          %v707 = vadd.f32 %v433, %v706
          %708 = vmatprep.mubr.bf16.mxu0 0
          %709 = vmatmul.mubr.bf16.gmra.mrb[0].mxu0 %v391
          %v710 = vpop.f32.mrb[0].mxu0
          %v711 = vadd.f32 %v429, %v710
          %v712 = vpop.f32.mrb[0].mxu0
          %v713 = vadd.f32 %v433, %v712
          %v714 = vpop.f32.mrb[0].mxu0
          %v715 = vadd.f32 %v429, %v714
          %v716 = vpop.f32.mrb[0].mxu0
          %v717 = vadd.f32 %v433, %v716
          %718 = vdwg.mxu0
          %719 = vmatprep.subr.bf16.mxu0 %v545
          %720 = vmatpush1.bf16.msra.mxu0 %v544
          %721 = vmatprep.subr.bf16.mxu0 %v549
          %722 = vmatpush1.bf16.msra.mxu0 %v548
          %723 = vmatprep.subr.bf16.mxu0 %v553
          %724 = vmatpush1.bf16.msra.mxu0 %v552
          %725 = vmatprep.subr.bf16.mxu0 %v557
          %726 = vmatpush1.bf16.msra.mxu0 %v556
          %727 = vmatprep.subr.bf16.mxu0 %v561
          %728 = vmatpush1.bf16.msra.mxu0 %v560
          %729 = vmatprep.subr.bf16.mxu0 %v565
          %730 = vmatpush1.bf16.msra.mxu0 %v564
          %731 = vmatprep.subr.bf16.mxu0 %v569
          %732 = vmatpush1.bf16.msra.mxu0 %v568
          %733 = vmatprep.subr.bf16.mxu0 %v573
          %734 = vmatpush1.bf16.msra.mxu0 %v572
          %735 = vmatprep.subr.bf16.mxu0 0
          %736 = vmatpush1.bf16.msra.mxu0 0
          %737 = vmatprep.subr.bf16.mxu0 0
          %738 = vmatpush1.bf16.msra.mxu0 0
          %739 = vmatprep.subr.bf16.mxu0 0
          %740 = vmatpush1.bf16.msra.mxu0 0
          %741 = vmatprep.subr.bf16.mxu0 0
          %742 = vmatpush1.bf16.msra.mxu0 0
          %743 = vmatprep.subr.bf16.mxu0 0
          %744 = vmatpush1.bf16.msra.mxu0 0
          %745 = vmatprep.subr.bf16.mxu0 0
          %746 = vmatpush1.bf16.msra.mxu0 0
          %747 = vmatprep.subr.bf16.mxu0 0
          %748 = vmatpush1.bf16.msra.mxu0 0
          %749 = vmatprep.subr.bf16.mxu0 0
          %750 = vmatpush1.bf16.msra.mxu0 0
          %751 = vmatprep.mubr.bf16.mxu0 0
          %752 = vmatmul.mubr.bf16.gmra.mrb[0].mxu0 %v384
          %v753 = vpop.f32.mrb[0].mxu0
          %v754 = vadd.f32 %v437, %v753
          %v755 = vpop.f32.mrb[0].mxu0
          %v756 = vadd.f32 %v441, %v755
          %v757 = vpop.f32.mrb[0].mxu0
          %v758 = vadd.f32 %v437, %v757
          %v759 = vpop.f32.mrb[0].mxu0
          %v760 = vadd.f32 %v441, %v759
          %761 = vmatprep.mubr.bf16.mxu0 0
          %762 = vmatmul.mubr.bf16.gmra.mrb[0].mxu0 %v385
          %v763 = vpop.f32.mrb[0].mxu0
          %v764 = vadd.f32 %v437, %v763
          %v765 = vpop.f32.mrb[0].mxu0
          %v766 = vadd.f32 %v441, %v765
          %v767 = vpop.f32.mrb[0].mxu0
          %v768 = vadd.f32 %v437, %v767
          %v769 = vpop.f32.mrb[0].mxu0
          %v770 = vadd.f32 %v441, %v769
          %771 = vmatprep.mubr.bf16.mxu0 0
          %772 = vmatmul.mubr.bf16.gmra.mrb[0].mxu0 %v386
          %v773 = vpop.f32.mrb[0].mxu0
          %v774 = vadd.f32 %v437, %v773
          %v775 = vpop.f32.mrb[0].mxu0
          %v776 = vadd.f32 %v441, %v775
          %v777 = vpop.f32.mrb[0].mxu0
          %v778 = vadd.f32 %v437, %v777
          %v779 = vpop.f32.mrb[0].mxu0
          %v780 = vadd.f32 %v441, %v779
          %781 = vmatprep.mubr.bf16.mxu0 0
          %782 = vmatmul.mubr.bf16.gmra.mrb[0].mxu0 %v387
          %v783 = vpop.f32.mrb[0].mxu0
          %v784 = vadd.f32 %v437, %v783
          %v785 = vpop.f32.mrb[0].mxu0
          %v786 = vadd.f32 %v441, %v785
          %v787 = vpop.f32.mrb[0].mxu0
          %v788 = vadd.f32 %v437, %v787
          %v789 = vpop.f32.mrb[0].mxu0
          %v790 = vadd.f32 %v441, %v789
          %791 = vmatprep.mubr.bf16.mxu0 0
          %792 = vmatmul.mubr.bf16.gmra.mrb[0].mxu0 %v388
          %v793 = vpop.f32.mrb[0].mxu0
          %v794 = vadd.f32 %v437, %v793
          %v795 = vpop.f32.mrb[0].mxu0
          %v796 = vadd.f32 %v441, %v795
          %v797 = vpop.f32.mrb[0].mxu0
          %v798 = vadd.f32 %v437, %v797
          %v799 = vpop.f32.mrb[0].mxu0
          %v800 = vadd.f32 %v441, %v799
          %801 = vmatprep.mubr.bf16.mxu0 0
          %802 = vmatmul.mubr.bf16.gmra.mrb[0].mxu0 %v389
          %v803 = vpop.f32.mrb[0].mxu0
          %v804 = vadd.f32 %v437, %v803
          %v805 = vpop.f32.mrb[0].mxu0
          %v806 = vadd.f32 %v441, %v805
          %v807 = vpop.f32.mrb[0].mxu0
          %v808 = vadd.f32 %v437, %v807
          %v809 = vpop.f32.mrb[0].mxu0
          %v810 = vadd.f32 %v441, %v809
          %811 = vmatprep.mubr.bf16.mxu0 0
          %812 = vmatmul.mubr.bf16.gmra.mrb[0].mxu0 %v390
          %v813 = vpop.f32.mrb[0].mxu0
          %v814 = vadd.f32 %v437, %v813
          %v815 = vpop.f32.mrb[0].mxu0
          %v816 = vadd.f32 %v441, %v815
          %v817 = vpop.f32.mrb[0].mxu0
          %v818 = vadd.f32 %v437, %v817
          %v819 = vpop.f32.mrb[0].mxu0
          %v820 = vadd.f32 %v441, %v819
          %821 = vmatprep.mubr.bf16.mxu0 0
          %822 = vmatmul.mubr.bf16.gmra.mrb[0].mxu0 %v391
          %v823 = vpop.f32.mrb[0].mxu0
          %v824 = vadd.f32 %v437, %v823
          %v825 = vpop.f32.mrb[0].mxu0
          %v826 = vadd.f32 %v441, %v825
          %v827 = vpop.f32.mrb[0].mxu0
          %v828 = vadd.f32 %v437, %v827
          %v829 = vpop.f32.mrb[0].mxu0
          %v830 = vadd.f32 %v441, %v829
          %831 = vdwg.mxu0
          %v832 = vmax.f32 %v641, 0.0
          %v833 = vmax.f32 %v643, 0.0
          %v834 = vmax.f32 %v754, 0.0
          %v835 = vmax.f32 %v756, 0.0
          %v836 = vmax.f32 %v645, 0.0
          %v837 = vmax.f32 %v647, 0.0
          %v838 = vmax.f32 %v758, 0.0
          %v839 = vmax.f32 %v760, 0.0
          %v840 = vmax.f32 %v651, 0.0
          %v841 = vmax.f32 %v653, 0.0
          %v842 = vmax.f32 %v764, 0.0
          %v843 = vmax.f32 %v766, 0.0
          %v844 = vmax.f32 %v655, 0.0
          %v845 = vmax.f32 %v657, 0.0
          %v846 = vmax.f32 %v768, 0.0
          %v847 = vmax.f32 %v770, 0.0
          %v848 = vmax.f32 %v661, 0.0
          %v849 = vmax.f32 %v663, 0.0
          %v850 = vmax.f32 %v774, 0.0
          %v851 = vmax.f32 %v776, 0.0
          %v852 = vmax.f32 %v665, 0.0
          %v853 = vmax.f32 %v667, 0.0
          %v854 = vmax.f32 %v778, 0.0
          %v855 = vmax.f32 %v780, 0.0
          %v856 = vmax.f32 %v671, 0.0
          %v857 = vmax.f32 %v673, 0.0
          %v858 = vmax.f32 %v784, 0.0
          %v859 = vmax.f32 %v786, 0.0
          %v860 = vmax.f32 %v675, 0.0
          %v861 = vmax.f32 %v677, 0.0
          %v862 = vmax.f32 %v788, 0.0
          %v863 = vmax.f32 %v790, 0.0
          %v864 = vmax.f32 %v681, 0.0
          %v865 = vmax.f32 %v683, 0.0
          %v866 = vmax.f32 %v794, 0.0
          %v867 = vmax.f32 %v796, 0.0
          %v868 = vmax.f32 %v685, 0.0
          %v869 = vmax.f32 %v687, 0.0
          %v870 = vmax.f32 %v798, 0.0
          %v871 = vmax.f32 %v800, 0.0
          %v872 = vmax.f32 %v691, 0.0
          %v873 = vmax.f32 %v693, 0.0
          %v874 = vmax.f32 %v804, 0.0
          %v875 = vmax.f32 %v806, 0.0
          %v876 = vmax.f32 %v695, 0.0
          %v877 = vmax.f32 %v697, 0.0
          %v878 = vmax.f32 %v808, 0.0
          %v879 = vmax.f32 %v810, 0.0
          %v880 = vmax.f32 %v701, 0.0
          %v881 = vmax.f32 %v703, 0.0
          %v882 = vmax.f32 %v814, 0.0
          %v883 = vmax.f32 %v816, 0.0
          %v884 = vmax.f32 %v705, 0.0
          %v885 = vmax.f32 %v707, 0.0
          %v886 = vmax.f32 %v818, 0.0
          %v887 = vmax.f32 %v820, 0.0
          %v888 = vmax.f32 %v711, 0.0
          %v889 = vmax.f32 %v713, 0.0
          %v890 = vmax.f32 %v824, 0.0
          %v891 = vmax.f32 %v826, 0.0
          %v892 = vmax.f32 %v715, 0.0
          %v893 = vmax.f32 %v717, 0.0
          %v894 = vmax.f32 %v828, 0.0
          %v895 = vmax.f32 %v830, 0.0
          %v896 = vpack.c.bf16 %v836, %v832
          %v897 = vpack.c.bf16 %v837, %v833
          %v898 = vpack.c.bf16 %v838, %v834
          %v899 = vpack.c.bf16 %v839, %v835
          %v900 = vpack.c.bf16 %v844, %v840
          %v901 = vpack.c.bf16 %v845, %v841
          %v902 = vpack.c.bf16 %v846, %v842
          %v903 = vpack.c.bf16 %v847, %v843
          %v904 = vpack.c.bf16 %v852, %v848
          %v905 = vpack.c.bf16 %v853, %v849
          %v906 = vpack.c.bf16 %v854, %v850
          %v907 = vpack.c.bf16 %v855, %v851
          %v908 = vpack.c.bf16 %v860, %v856
          %v909 = vpack.c.bf16 %v861, %v857
          %v910 = vpack.c.bf16 %v862, %v858
          %v911 = vpack.c.bf16 %v863, %v859
          %v912 = vpack.c.bf16 %v868, %v864
          %v913 = vpack.c.bf16 %v869, %v865
          %v914 = vpack.c.bf16 %v870, %v866
          %v915 = vpack.c.bf16 %v871, %v867
          %v916 = vpack.c.bf16 %v876, %v872
          %v917 = vpack.c.bf16 %v877, %v873
          %v918 = vpack.c.bf16 %v878, %v874
          %v919 = vpack.c.bf16 %v879, %v875
          %v920 = vpack.c.bf16 %v884, %v880
          %v921 = vpack.c.bf16 %v885, %v881
          %v922 = vpack.c.bf16 %v886, %v882
          %v923 = vpack.c.bf16 %v887, %v883
          %v924 = vpack.c.bf16 %v892, %v888
          %v925 = vpack.c.bf16 %v893, %v889
          %v926 = vpack.c.bf16 %v894, %v890
          %v927 = vpack.c.bf16 %v895, %v891
          %v928 = vld [vmem:[#allocation5] sm:$0xff]
          %v929 = vld [vmem:[#allocation5 + $0x8] sm:$0xff]
          %v930 = vld [vmem:[#allocation5 + $0x10] sm:$0xff]
          %v931 = vld [vmem:[#allocation5 + $0x18] sm:$0xff]
          %v932 = vld [vmem:[#allocation5 + $0x20] sm:$0xff]
          %v933 = vld [vmem:[#allocation5 + $0x28] sm:$0xff]
          %v934 = vld [vmem:[#allocation5 + $0x30] sm:$0xff]
          %v935 = vld [vmem:[#allocation5 + $0x38] sm:$0xff]
          %v936 = vld [vmem:[#allocation5 + $0x40] sm:$0xff]
          %v937 = vld [vmem:[#allocation5 + $0x48] sm:$0xff]
          %v938 = vld [vmem:[#allocation5 + $0x50] sm:$0xff]
          %v939 = vld [vmem:[#allocation5 + $0x58] sm:$0xff]
          %v940 = vld [vmem:[#allocation5 + $0x60] sm:$0xff]
          %v941 = vld [vmem:[#allocation5 + $0x68] sm:$0xff]
          %v942 = vld [vmem:[#allocation5 + $0x70] sm:$0xff]
          %v943 = vld [vmem:[#allocation5 + $0x78] sm:$0xff]
          %v944 = vld [vmem:[#allocation5 + $0x80] sm:$0xff]
          %v945 = vld [vmem:[#allocation5 + $0x88] sm:$0xff]
          %v946 = vld [vmem:[#allocation5 + $0x90] sm:$0xff]
          %v947 = vld [vmem:[#allocation5 + $0x98] sm:$0xff]
          %v948 = vld [vmem:[#allocation5 + $0xa0] sm:$0xff]
          %v949 = vld [vmem:[#allocation5 + $0xa8] sm:$0xff]
          %v950 = vld [vmem:[#allocation5 + $0xb0] sm:$0xff]
          %v951 = vld [vmem:[#allocation5 + $0xb8] sm:$0xff]
          %v952 = vld [vmem:[#allocation5 + $0xc0] sm:$0xff]
          %v953 = vld [vmem:[#allocation5 + $0xc8] sm:$0xff]
          %v954 = vld [vmem:[#allocation5 + $0xd0] sm:$0xff]
          %v955 = vld [vmem:[#allocation5 + $0xd8] sm:$0xff]
          %v956 = vld [vmem:[#allocation5 + $0xe0] sm:$0xff]
          %v957 = vld [vmem:[#allocation5 + $0xe8] sm:$0xff]
          %v958 = vld [vmem:[#allocation5 + $0xf0] sm:$0xff]
          %v959 = vld [vmem:[#allocation5 + $0xf8] sm:$0xff]
          %v960 = vld [vmem:[#allocation5 + $0x100] sm:$0xff]
          %v961 = vld [vmem:[#allocation5 + $0x108] sm:$0xff]
          %v962 = vld [vmem:[#allocation5 + $0x110] sm:$0xff]
          %v963 = vld [vmem:[#allocation5 + $0x118] sm:$0xff]
          %v964 = vld [vmem:[#allocation5 + $0x120] sm:$0xff]
          %v965 = vld [vmem:[#allocation5 + $0x128] sm:$0xff]
          %v966 = vld [vmem:[#allocation5 + $0x130] sm:$0xff]
          %v967 = vld [vmem:[#allocation5 + $0x138] sm:$0xff]
          %v968 = vld [vmem:[#allocation5 + $0x140] sm:$0xff]
          %v969 = vld [vmem:[#allocation5 + $0x148] sm:$0xff]
          %v970 = vld [vmem:[#allocation5 + $0x150] sm:$0xff]
          %v971 = vld [vmem:[#allocation5 + $0x158] sm:$0xff]
          %v972 = vld [vmem:[#allocation5 + $0x160] sm:$0xff]
          %v973 = vld [vmem:[#allocation5 + $0x168] sm:$0xff]
          %v974 = vld [vmem:[#allocation5 + $0x170] sm:$0xff]
          %v975 = vld [vmem:[#allocation5 + $0x178] sm:$0xff]
          %v976 = vld [vmem:[#allocation5 + $0x180] sm:$0xff]
          %v977 = vld [vmem:[#allocation5 + $0x188] sm:$0xff]
          %v978 = vld [vmem:[#allocation5 + $0x190] sm:$0xff]
          %v979 = vld [vmem:[#allocation5 + $0x198] sm:$0xff]
          %v980 = vld [vmem:[#allocation5 + $0x1a0] sm:$0xff]
          %v981 = vld [vmem:[#allocation5 + $0x1a8] sm:$0xff]
          %v982 = vld [vmem:[#allocation5 + $0x1b0] sm:$0xff]
          %v983 = vld [vmem:[#allocation5 + $0x1b8] sm:$0xff]
          %v984 = vld [vmem:[#allocation5 + $0x1c0] sm:$0xff]
          %v985 = vld [vmem:[#allocation5 + $0x1c8] sm:$0xff]
          %v986 = vld [vmem:[#allocation5 + $0x1d0] sm:$0xff]
          %v987 = vld [vmem:[#allocation5 + $0x1d8] sm:$0xff]
          %v988 = vld [vmem:[#allocation5 + $0x1e0] sm:$0xff]
          %v989 = vld [vmem:[#allocation5 + $0x1e8] sm:$0xff]
          %v990 = vld [vmem:[#allocation5 + $0x1f0] sm:$0xff]
          %v991 = vld [vmem:[#allocation5 + $0x1f8] sm:$0xff]
          %v992 = vld [vmem:[#allocation5 + $0x200] sm:$0xff]
          %v993 = vld [vmem:[#allocation5 + $0x208] sm:$0xff]
          %v994 = vld [vmem:[#allocation5 + $0x210] sm:$0xff]
          %v995 = vld [vmem:[#allocation5 + $0x218] sm:$0xff]
          %v996 = vld [vmem:[#allocation5 + $0x220] sm:$0xff]
          %v997 = vld [vmem:[#allocation5 + $0x228] sm:$0xff]
          %v998 = vld [vmem:[#allocation5 + $0x230] sm:$0xff]
          %v999 = vld [vmem:[#allocation5 + $0x238] sm:$0xff]
          %v1000 = vld [vmem:[#allocation5 + $0x240] sm:$0xff]
          %v1001 = vld [vmem:[#allocation5 + $0x248] sm:$0xff]
          %v1002 = vld [vmem:[#allocation5 + $0x250] sm:$0xff]
          %v1003 = vld [vmem:[#allocation5 + $0x258] sm:$0xff]
          %v1004 = vld [vmem:[#allocation5 + $0x260] sm:$0xff]
          %v1005 = vld [vmem:[#allocation5 + $0x268] sm:$0xff]
          %v1006 = vld [vmem:[#allocation5 + $0x270] sm:$0xff]
          %v1007 = vld [vmem:[#allocation5 + $0x278] sm:$0xff]
          %v1008 = vld [vmem:[#allocation5 + $0x280] sm:$0xff]
          %v1009 = vld [vmem:[#allocation5 + $0x288] sm:$0xff]
          %v1010 = vld [vmem:[#allocation5 + $0x290] sm:$0xff]
          %v1011 = vld [vmem:[#allocation5 + $0x298] sm:$0xff]
          %v1012 = vld [vmem:[#allocation5 + $0x2a0] sm:$0xff]
          %v1013 = vld [vmem:[#allocation5 + $0x2a8] sm:$0xff]
          %v1014 = vld [vmem:[#allocation5 + $0x2b0] sm:$0xff]
          %v1015 = vld [vmem:[#allocation5 + $0x2b8] sm:$0xff]
          %v1016 = vld [vmem:[#allocation5 + $0x2c0] sm:$0xff]
          %v1017 = vld [vmem:[#allocation5 + $0x2c8] sm:$0xff]
          %v1018 = vld [vmem:[#allocation5 + $0x2d0] sm:$0xff]
          %v1019 = vld [vmem:[#allocation5 + $0x2d8] sm:$0xff]
          %v1020 = vld [vmem:[#allocation5 + $0x2e0] sm:$0xff]
          %v1021 = vld [vmem:[#allocation5 + $0x2e8] sm:$0xff]
          %v1022 = vld [vmem:[#allocation5 + $0x2f0] sm:$0xff]
          %v1023 = vld [vmem:[#allocation5 + $0x2f8] sm:$0xff]
          %v1024 = vld [vmem:[#allocation5 + $0x300] sm:$0xff]
          %v1025 = vld [vmem:[#allocation5 + $0x308] sm:$0xff]
          %v1026 = vld [vmem:[#allocation5 + $0x310] sm:$0xff]
          %v1027 = vld [vmem:[#allocation5 + $0x318] sm:$0xff]
          %v1028 = vld [vmem:[#allocation5 + $0x320] sm:$0xff]
          %v1029 = vld [vmem:[#allocation5 + $0x328] sm:$0xff]
          %v1030 = vld [vmem:[#allocation5 + $0x330] sm:$0xff]
          %v1031 = vld [vmem:[#allocation5 + $0x338] sm:$0xff]
          %v1032 = vld [vmem:[#allocation5 + $0x340] sm:$0xff]
          %v1033 = vld [vmem:[#allocation5 + $0x348] sm:$0xff]
          %v1034 = vld [vmem:[#allocation5 + $0x350] sm:$0xff]
          %v1035 = vld [vmem:[#allocation5 + $0x358] sm:$0xff]
          %v1036 = vld [vmem:[#allocation5 + $0x360] sm:$0xff]
          %v1037 = vld [vmem:[#allocation5 + $0x368] sm:$0xff]
          %v1038 = vld [vmem:[#allocation5 + $0x370] sm:$0xff]
          %v1039 = vld [vmem:[#allocation5 + $0x378] sm:$0xff]
          %v1040 = vld [vmem:[#allocation5 + $0x380] sm:$0xff]
          %v1041 = vld [vmem:[#allocation5 + $0x388] sm:$0xff]
          %v1042 = vld [vmem:[#allocation5 + $0x390] sm:$0xff]
          %v1043 = vld [vmem:[#allocation5 + $0x398] sm:$0xff]
          %v1044 = vld [vmem:[#allocation5 + $0x3a0] sm:$0xff]
          %v1045 = vld [vmem:[#allocation5 + $0x3a8] sm:$0xff]
          %v1046 = vld [vmem:[#allocation5 + $0x3b0] sm:$0xff]
          %v1047 = vld [vmem:[#allocation5 + $0x3b8] sm:$0xff]
          %v1048 = vld [vmem:[#allocation5 + $0x3c0] sm:$0xff]
          %v1049 = vld [vmem:[#allocation5 + $0x3c8] sm:$0xff]
          %v1050 = vld [vmem:[#allocation5 + $0x3d0] sm:$0xff]
          %v1051 = vld [vmem:[#allocation5 + $0x3d8] sm:$0xff]
          %v1052 = vld [vmem:[#allocation5 + $0x3e0] sm:$0xff]
          %v1053 = vld [vmem:[#allocation5 + $0x3e8] sm:$0xff]
          %v1054 = vld [vmem:[#allocation5 + $0x3f0] sm:$0xff]
          %v1055 = vld [vmem:[#allocation5 + $0x3f8] sm:$0xff]
          %v1056 = vld [vmem:[#allocation5 + $0x400] sm:$0xff]
          %v1057 = vld [vmem:[#allocation5 + $0x408] sm:$0xff]
          %v1058 = vld [vmem:[#allocation5 + $0x410] sm:$0xff]
          %v1059 = vld [vmem:[#allocation5 + $0x418] sm:$0xff]
          %v1060 = vld [vmem:[#allocation5 + $0x420] sm:$0xff]
          %v1061 = vld [vmem:[#allocation5 + $0x428] sm:$0xff]
          %v1062 = vld [vmem:[#allocation5 + $0x430] sm:$0xff]
          %v1063 = vld [vmem:[#allocation5 + $0x438] sm:$0xff]
          %v1064 = vld [vmem:[#allocation5 + $0x440] sm:$0xff]
          %v1065 = vld [vmem:[#allocation5 + $0x448] sm:$0xff]
          %v1066 = vld [vmem:[#allocation5 + $0x450] sm:$0xff]
          %v1067 = vld [vmem:[#allocation5 + $0x458] sm:$0xff]
          %v1068 = vld [vmem:[#allocation5 + $0x460] sm:$0xff]
          %v1069 = vld [vmem:[#allocation5 + $0x468] sm:$0xff]
          %v1070 = vld [vmem:[#allocation5 + $0x470] sm:$0xff]
          %v1071 = vld [vmem:[#allocation5 + $0x478] sm:$0xff]
          %v1072 = vld [vmem:[#allocation5 + $0x480] sm:$0xff]
          %v1073 = vld [vmem:[#allocation5 + $0x488] sm:$0xff]
          %v1074 = vld [vmem:[#allocation5 + $0x490] sm:$0xff]
          %v1075 = vld [vmem:[#allocation5 + $0x498] sm:$0xff]
          %v1076 = vld [vmem:[#allocation5 + $0x4a0] sm:$0xff]
          %v1077 = vld [vmem:[#allocation5 + $0x4a8] sm:$0xff]
          %v1078 = vld [vmem:[#allocation5 + $0x4b0] sm:$0xff]
          %v1079 = vld [vmem:[#allocation5 + $0x4b8] sm:$0xff]
          %v1080 = vld [vmem:[#allocation5 + $0x4c0] sm:$0xff]
          %v1081 = vld [vmem:[#allocation5 + $0x4c8] sm:$0xff]
          %v1082 = vld [vmem:[#allocation5 + $0x4d0] sm:$0xff]
          %v1083 = vld [vmem:[#allocation5 + $0x4d8] sm:$0xff]
          %v1084 = vld [vmem:[#allocation5 + $0x4e0] sm:$0xff]
          %v1085 = vld [vmem:[#allocation5 + $0x4e8] sm:$0xff]
          %v1086 = vld [vmem:[#allocation5 + $0x4f0] sm:$0xff]
          %v1087 = vld [vmem:[#allocation5 + $0x4f8] sm:$0xff]
          %v1088 = vld [vmem:[#allocation5 + $0x500] sm:$0xff]
          %v1089 = vld [vmem:[#allocation5 + $0x508] sm:$0xff]
          %v1090 = vld [vmem:[#allocation5 + $0x510] sm:$0xff]
          %v1091 = vld [vmem:[#allocation5 + $0x518] sm:$0xff]
          %v1092 = vld [vmem:[#allocation5 + $0x520] sm:$0xff]
          %v1093 = vld [vmem:[#allocation5 + $0x528] sm:$0xff]
          %v1094 = vld [vmem:[#allocation5 + $0x530] sm:$0xff]
          %v1095 = vld [vmem:[#allocation5 + $0x538] sm:$0xff]
          %v1096 = vld [vmem:[#allocation5 + $0x540] sm:$0xff]
          %v1097 = vld [vmem:[#allocation5 + $0x548] sm:$0xff]
          %v1098 = vld [vmem:[#allocation5 + $0x550] sm:$0xff]
          %v1099 = vld [vmem:[#allocation5 + $0x558] sm:$0xff]
          %v1100 = vld [vmem:[#allocation5 + $0x560] sm:$0xff]
          %v1101 = vld [vmem:[#allocation5 + $0x568] sm:$0xff]
          %v1102 = vld [vmem:[#allocation5 + $0x570] sm:$0xff]
          %v1103 = vld [vmem:[#allocation5 + $0x578] sm:$0xff]
          %v1104 = vld [vmem:[#allocation5 + $0x580] sm:$0xff]
          %v1105 = vld [vmem:[#allocation5 + $0x588] sm:$0xff]
          %v1106 = vld [vmem:[#allocation5 + $0x590] sm:$0xff]
          %v1107 = vld [vmem:[#allocation5 + $0x598] sm:$0xff]
          %v1108 = vld [vmem:[#allocation5 + $0x5a0] sm:$0xff]
          %v1109 = vld [vmem:[#allocation5 + $0x5a8] sm:$0xff]
          %v1110 = vld [vmem:[#allocation5 + $0x5b0] sm:$0xff]
          %v1111 = vld [vmem:[#allocation5 + $0x5b8] sm:$0xff]
          %v1112 = vld [vmem:[#allocation5 + $0x5c0] sm:$0xff]
          %v1113 = vld [vmem:[#allocation5 + $0x5c8] sm:$0xff]
          %v1114 = vld [vmem:[#allocation5 + $0x5d0] sm:$0xff]
          %v1115 = vld [vmem:[#allocation5 + $0x5d8] sm:$0xff]
          %v1116 = vld [vmem:[#allocation5 + $0x5e0] sm:$0xff]
          %v1117 = vld [vmem:[#allocation5 + $0x5e8] sm:$0xff]
          %v1118 = vld [vmem:[#allocation5 + $0x5f0] sm:$0xff]
          %v1119 = vld [vmem:[#allocation5 + $0x5f8] sm:$0xff]
          %v1120 = vld [vmem:[#allocation5 + $0x600] sm:$0xff]
          %v1121 = vld [vmem:[#allocation5 + $0x608] sm:$0xff]
          %v1122 = vld [vmem:[#allocation5 + $0x610] sm:$0xff]
          %v1123 = vld [vmem:[#allocation5 + $0x618] sm:$0xff]
          %v1124 = vld [vmem:[#allocation5 + $0x620] sm:$0xff]
          %v1125 = vld [vmem:[#allocation5 + $0x628] sm:$0xff]
          %v1126 = vld [vmem:[#allocation5 + $0x630] sm:$0xff]
          %v1127 = vld [vmem:[#allocation5 + $0x638] sm:$0xff]
          %v1128 = vld [vmem:[#allocation5 + $0x640] sm:$0xff]
          %v1129 = vld [vmem:[#allocation5 + $0x648] sm:$0xff]
          %v1130 = vld [vmem:[#allocation5 + $0x650] sm:$0xff]
          %v1131 = vld [vmem:[#allocation5 + $0x658] sm:$0xff]
          %v1132 = vld [vmem:[#allocation5 + $0x660] sm:$0xff]
          %v1133 = vld [vmem:[#allocation5 + $0x668] sm:$0xff]
          %v1134 = vld [vmem:[#allocation5 + $0x670] sm:$0xff]
          %v1135 = vld [vmem:[#allocation5 + $0x678] sm:$0xff]
          %v1136 = vld [vmem:[#allocation5 + $0x680] sm:$0xff]
          %v1137 = vld [vmem:[#allocation5 + $0x688] sm:$0xff]
          %v1138 = vld [vmem:[#allocation5 + $0x690] sm:$0xff]
          %v1139 = vld [vmem:[#allocation5 + $0x698] sm:$0xff]
          %v1140 = vld [vmem:[#allocation5 + $0x6a0] sm:$0xff]
          %v1141 = vld [vmem:[#allocation5 + $0x6a8] sm:$0xff]
          %v1142 = vld [vmem:[#allocation5 + $0x6b0] sm:$0xff]
          %v1143 = vld [vmem:[#allocation5 + $0x6b8] sm:$0xff]
          %v1144 = vld [vmem:[#allocation5 + $0x6c0] sm:$0xff]
          %v1145 = vld [vmem:[#allocation5 + $0x6c8] sm:$0xff]
          %v1146 = vld [vmem:[#allocation5 + $0x6d0] sm:$0xff]
          %v1147 = vld [vmem:[#allocation5 + $0x6d8] sm:$0xff]
          %v1148 = vld [vmem:[#allocation5 + $0x6e0] sm:$0xff]
          %v1149 = vld [vmem:[#allocation5 + $0x6e8] sm:$0xff]
          %v1150 = vld [vmem:[#allocation5 + $0x6f0] sm:$0xff]
          %v1151 = vld [vmem:[#allocation5 + $0x6f8] sm:$0xff]
          %v1152 = vld [vmem:[#allocation5 + $0x700] sm:$0xff]
          %v1153 = vld [vmem:[#allocation5 + $0x708] sm:$0xff]
          %v1154 = vld [vmem:[#allocation5 + $0x710] sm:$0xff]
          %v1155 = vld [vmem:[#allocation5 + $0x718] sm:$0xff]
          %v1156 = vld [vmem:[#allocation5 + $0x720] sm:$0xff]
          %v1157 = vld [vmem:[#allocation5 + $0x728] sm:$0xff]
          %v1158 = vld [vmem:[#allocation5 + $0x730] sm:$0xff]
          %v1159 = vld [vmem:[#allocation5 + $0x738] sm:$0xff]
          %v1160 = vld [vmem:[#allocation5 + $0x740] sm:$0xff]
          %v1161 = vld [vmem:[#allocation5 + $0x748] sm:$0xff]
          %v1162 = vld [vmem:[#allocation5 + $0x750] sm:$0xff]
          %v1163 = vld [vmem:[#allocation5 + $0x758] sm:$0xff]
          %v1164 = vld [vmem:[#allocation5 + $0x760] sm:$0xff]
          %v1165 = vld [vmem:[#allocation5 + $0x768] sm:$0xff]
          %v1166 = vld [vmem:[#allocation5 + $0x770] sm:$0xff]
          %v1167 = vld [vmem:[#allocation5 + $0x778] sm:$0xff]
          %v1168 = vld [vmem:[#allocation5 + $0x780] sm:$0xff]
          %v1169 = vld [vmem:[#allocation5 + $0x788] sm:$0xff]
          %v1170 = vld [vmem:[#allocation5 + $0x790] sm:$0xff]
          %v1171 = vld [vmem:[#allocation5 + $0x798] sm:$0xff]
          %v1172 = vld [vmem:[#allocation5 + $0x7a0] sm:$0xff]
          %v1173 = vld [vmem:[#allocation5 + $0x7a8] sm:$0xff]
          %v1174 = vld [vmem:[#allocation5 + $0x7b0] sm:$0xff]
          %v1175 = vld [vmem:[#allocation5 + $0x7b8] sm:$0xff]
          %v1176 = vld [vmem:[#allocation5 + $0x7c0] sm:$0xff]
          %v1177 = vld [vmem:[#allocation5 + $0x7c8] sm:$0xff]
          %v1178 = vld [vmem:[#allocation5 + $0x7d0] sm:$0xff]
          %v1179 = vld [vmem:[#allocation5 + $0x7d8] sm:$0xff]
          %v1180 = vld [vmem:[#allocation5 + $0x7e0] sm:$0xff]
          %v1181 = vld [vmem:[#allocation5 + $0x7e8] sm:$0xff]
          %v1182 = vld [vmem:[#allocation5 + $0x7f0] sm:$0xff]
          %v1183 = vld [vmem:[#allocation5 + $0x7f8] sm:$0xff]
          %v1184 = vld [vmem:[%s4] sm:$0xff]
          %v1186 = vlaneseq
          %v1187 = vshrl.u32 %v1186, 7
          %v1188 = vsub.s32 0, %v1187
          %v1189 = vrot.slane %v1184, %v1188
          %v1190 = vlaneseq
          %v1191 = vshrl.u32 %v1190, 7
          %v1192 = vsub.s32 1, %v1191
          %v1193 = vrot.slane %v1184, %v1192
          %v1194 = vlaneseq
          %v1195 = vshrl.u32 %v1194, 7
          %v1196 = vsub.s32 2, %v1195
          %v1197 = vrot.slane %v1184, %v1196
          %v1198 = vlaneseq
          %v1199 = vshrl.u32 %v1198, 7
          %v1200 = vsub.s32 3, %v1199
          %v1201 = vrot.slane %v1184, %v1200
          %v1202 = vlaneseq
          %v1203 = vshrl.u32 %v1202, 7
          %v1204 = vsub.s32 4, %v1203
          %v1205 = vrot.slane %v1184, %v1204
          %v1206 = vlaneseq
          %v1207 = vshrl.u32 %v1206, 7
          %v1208 = vsub.s32 5, %v1207
          %v1209 = vrot.slane %v1184, %v1208
          %v1210 = vlaneseq
          %v1211 = vshrl.u32 %v1210, 7
          %v1212 = vsub.s32 6, %v1211
          %v1213 = vrot.slane %v1184, %v1212
          %v1214 = vlaneseq
          %v1215 = vshrl.u32 %v1214, 7
          %v1216 = vsub.s32 7, %v1215
          %v1217 = vrot.slane %v1184, %v1216
          %v1482 = vunpack.c.l.b16 %v928
          %v1483 = vunpack.c.h.b16 %v928
          %v1484 = vunpack.c.l.b16 %v929
          %v1485 = vunpack.c.h.b16 %v929
          %v1486 = vunpack.c.l.b16 %v930
          %v1487 = vunpack.c.h.b16 %v930
          %v1488 = vunpack.c.l.b16 %v931
          %v1489 = vunpack.c.h.b16 %v931
          %v1490 = vunpack.c.l.b16 %v932
          %v1491 = vunpack.c.h.b16 %v932
          %v1492 = vunpack.c.l.b16 %v933
          %v1493 = vunpack.c.h.b16 %v933
          %v1494 = vunpack.c.l.b16 %v934
          %v1495 = vunpack.c.h.b16 %v934
          %v1496 = vunpack.c.l.b16 %v935
          %v1497 = vunpack.c.h.b16 %v935
          %v1498 = vunpack.c.l.b16 %v936
          %v1499 = vunpack.c.h.b16 %v936
          %v1500 = vunpack.c.l.b16 %v937
          %v1501 = vunpack.c.h.b16 %v937
          %v1502 = vunpack.c.l.b16 %v938
          %v1503 = vunpack.c.h.b16 %v938
          %v1504 = vunpack.c.l.b16 %v939
          %v1505 = vunpack.c.h.b16 %v939
          %v1506 = vunpack.c.l.b16 %v940
          %v1507 = vunpack.c.h.b16 %v940
          %v1508 = vunpack.c.l.b16 %v941
          %v1509 = vunpack.c.h.b16 %v941
          %v1510 = vunpack.c.l.b16 %v942
          %v1511 = vunpack.c.h.b16 %v942
          %v1512 = vunpack.c.l.b16 %v943
          %v1513 = vunpack.c.h.b16 %v943
          %v1514 = vunpack.c.l.b16 %v944
          %v1515 = vunpack.c.h.b16 %v944
          %v1516 = vunpack.c.l.b16 %v945
          %v1517 = vunpack.c.h.b16 %v945
          %v1518 = vunpack.c.l.b16 %v946
          %v1519 = vunpack.c.h.b16 %v946
          %v1520 = vunpack.c.l.b16 %v947
          %v1521 = vunpack.c.h.b16 %v947
          %v1522 = vunpack.c.l.b16 %v948
          %v1523 = vunpack.c.h.b16 %v948
          %v1524 = vunpack.c.l.b16 %v949
          %v1525 = vunpack.c.h.b16 %v949
          %v1526 = vunpack.c.l.b16 %v950
          %v1527 = vunpack.c.h.b16 %v950
          %v1528 = vunpack.c.l.b16 %v951
          %v1529 = vunpack.c.h.b16 %v951
          %v1530 = vunpack.c.l.b16 %v952
          %v1531 = vunpack.c.h.b16 %v952
          %v1532 = vunpack.c.l.b16 %v953
          %v1533 = vunpack.c.h.b16 %v953
          %v1534 = vunpack.c.l.b16 %v954
          %v1535 = vunpack.c.h.b16 %v954
          %v1536 = vunpack.c.l.b16 %v955
          %v1537 = vunpack.c.h.b16 %v955
          %v1538 = vunpack.c.l.b16 %v956
          %v1539 = vunpack.c.h.b16 %v956
          %v1540 = vunpack.c.l.b16 %v957
          %v1541 = vunpack.c.h.b16 %v957
          %v1542 = vunpack.c.l.b16 %v958
          %v1543 = vunpack.c.h.b16 %v958
          %v1544 = vunpack.c.l.b16 %v959
          %v1545 = vunpack.c.h.b16 %v959
          %v1546 = vunpack.c.l.b16 %v960
          %v1547 = vunpack.c.h.b16 %v960
          %v1548 = vunpack.c.l.b16 %v961
          %v1549 = vunpack.c.h.b16 %v961
          %v1550 = vunpack.c.l.b16 %v962
          %v1551 = vunpack.c.h.b16 %v962
          %v1552 = vunpack.c.l.b16 %v963
          %v1553 = vunpack.c.h.b16 %v963
          %v1554 = vunpack.c.l.b16 %v964
          %v1555 = vunpack.c.h.b16 %v964
          %v1556 = vunpack.c.l.b16 %v965
          %v1557 = vunpack.c.h.b16 %v965
          %v1558 = vunpack.c.l.b16 %v966
          %v1559 = vunpack.c.h.b16 %v966
          %v1560 = vunpack.c.l.b16 %v967
          %v1561 = vunpack.c.h.b16 %v967
          %v1562 = vunpack.c.l.b16 %v968
          %v1563 = vunpack.c.h.b16 %v968
          %v1564 = vunpack.c.l.b16 %v969
          %v1565 = vunpack.c.h.b16 %v969
          %v1566 = vunpack.c.l.b16 %v970
          %v1567 = vunpack.c.h.b16 %v970
          %v1568 = vunpack.c.l.b16 %v971
          %v1569 = vunpack.c.h.b16 %v971
          %v1570 = vunpack.c.l.b16 %v972
          %v1571 = vunpack.c.h.b16 %v972
          %v1572 = vunpack.c.l.b16 %v973
          %v1573 = vunpack.c.h.b16 %v973
          %v1574 = vunpack.c.l.b16 %v974
          %v1575 = vunpack.c.h.b16 %v974
          %v1576 = vunpack.c.l.b16 %v975
          %v1577 = vunpack.c.h.b16 %v975
          %v1578 = vunpack.c.l.b16 %v976
          %v1579 = vunpack.c.h.b16 %v976
          %v1580 = vunpack.c.l.b16 %v977
          %v1581 = vunpack.c.h.b16 %v977
          %v1582 = vunpack.c.l.b16 %v978
          %v1583 = vunpack.c.h.b16 %v978
          %v1584 = vunpack.c.l.b16 %v979
          %v1585 = vunpack.c.h.b16 %v979
          %v1586 = vunpack.c.l.b16 %v980
          %v1587 = vunpack.c.h.b16 %v980
          %v1588 = vunpack.c.l.b16 %v981
          %v1589 = vunpack.c.h.b16 %v981
          %v1590 = vunpack.c.l.b16 %v982
          %v1591 = vunpack.c.h.b16 %v982
          %v1592 = vunpack.c.l.b16 %v983
          %v1593 = vunpack.c.h.b16 %v983
          %v1594 = vunpack.c.l.b16 %v984
          %v1595 = vunpack.c.h.b16 %v984
          %v1596 = vunpack.c.l.b16 %v985
          %v1597 = vunpack.c.h.b16 %v985
          %v1598 = vunpack.c.l.b16 %v986
          %v1599 = vunpack.c.h.b16 %v986
          %v1600 = vunpack.c.l.b16 %v987
          %v1601 = vunpack.c.h.b16 %v987
          %v1602 = vunpack.c.l.b16 %v988
          %v1603 = vunpack.c.h.b16 %v988
          %v1604 = vunpack.c.l.b16 %v989
          %v1605 = vunpack.c.h.b16 %v989
          %v1606 = vunpack.c.l.b16 %v990
          %v1607 = vunpack.c.h.b16 %v990
          %v1608 = vunpack.c.l.b16 %v991
          %v1609 = vunpack.c.h.b16 %v991
          %v1610 = vunpack.c.l.b16 %v992
          %v1611 = vunpack.c.h.b16 %v992
          %v1612 = vunpack.c.l.b16 %v993
          %v1613 = vunpack.c.h.b16 %v993
          %v1614 = vunpack.c.l.b16 %v994
          %v1615 = vunpack.c.h.b16 %v994
          %v1616 = vunpack.c.l.b16 %v995
          %v1617 = vunpack.c.h.b16 %v995
          %v1618 = vunpack.c.l.b16 %v996
          %v1619 = vunpack.c.h.b16 %v996
          %v1620 = vunpack.c.l.b16 %v997
          %v1621 = vunpack.c.h.b16 %v997
          %v1622 = vunpack.c.l.b16 %v998
          %v1623 = vunpack.c.h.b16 %v998
          %v1624 = vunpack.c.l.b16 %v999
          %v1625 = vunpack.c.h.b16 %v999
          %v1626 = vunpack.c.l.b16 %v1000
          %v1627 = vunpack.c.h.b16 %v1000
          %v1628 = vunpack.c.l.b16 %v1001
          %v1629 = vunpack.c.h.b16 %v1001
          %v1630 = vunpack.c.l.b16 %v1002
          %v1631 = vunpack.c.h.b16 %v1002
          %v1632 = vunpack.c.l.b16 %v1003
          %v1633 = vunpack.c.h.b16 %v1003
          %v1634 = vunpack.c.l.b16 %v1004
          %v1635 = vunpack.c.h.b16 %v1004
          %v1636 = vunpack.c.l.b16 %v1005
          %v1637 = vunpack.c.h.b16 %v1005
          %v1638 = vunpack.c.l.b16 %v1006
          %v1639 = vunpack.c.h.b16 %v1006
          %v1640 = vunpack.c.l.b16 %v1007
          %v1641 = vunpack.c.h.b16 %v1007
          %v1642 = vunpack.c.l.b16 %v1008
          %v1643 = vunpack.c.h.b16 %v1008
          %v1644 = vunpack.c.l.b16 %v1009
          %v1645 = vunpack.c.h.b16 %v1009
          %v1646 = vunpack.c.l.b16 %v1010
          %v1647 = vunpack.c.h.b16 %v1010
          %v1648 = vunpack.c.l.b16 %v1011
          %v1649 = vunpack.c.h.b16 %v1011
          %v1650 = vunpack.c.l.b16 %v1012
          %v1651 = vunpack.c.h.b16 %v1012
          %v1652 = vunpack.c.l.b16 %v1013
          %v1653 = vunpack.c.h.b16 %v1013
          %v1654 = vunpack.c.l.b16 %v1014
          %v1655 = vunpack.c.h.b16 %v1014
          %v1656 = vunpack.c.l.b16 %v1015
          %v1657 = vunpack.c.h.b16 %v1015
          %v1658 = vunpack.c.l.b16 %v1016
          %v1659 = vunpack.c.h.b16 %v1016
          %v1660 = vunpack.c.l.b16 %v1017
          %v1661 = vunpack.c.h.b16 %v1017
          %v1662 = vunpack.c.l.b16 %v1018
          %v1663 = vunpack.c.h.b16 %v1018
          %v1664 = vunpack.c.l.b16 %v1019
          %v1665 = vunpack.c.h.b16 %v1019
          %v1666 = vunpack.c.l.b16 %v1020
          %v1667 = vunpack.c.h.b16 %v1020
          %v1668 = vunpack.c.l.b16 %v1021
          %v1669 = vunpack.c.h.b16 %v1021
          %v1670 = vunpack.c.l.b16 %v1022
          %v1671 = vunpack.c.h.b16 %v1022
          %v1672 = vunpack.c.l.b16 %v1023
          %v1673 = vunpack.c.h.b16 %v1023
          %v1674 = vunpack.c.l.b16 %v1024
          %v1675 = vunpack.c.h.b16 %v1024
          %v1676 = vunpack.c.l.b16 %v1025
          %v1677 = vunpack.c.h.b16 %v1025
          %v1678 = vunpack.c.l.b16 %v1026
          %v1679 = vunpack.c.h.b16 %v1026
          %v1680 = vunpack.c.l.b16 %v1027
          %v1681 = vunpack.c.h.b16 %v1027
          %v1682 = vunpack.c.l.b16 %v1028
          %v1683 = vunpack.c.h.b16 %v1028
          %v1684 = vunpack.c.l.b16 %v1029
          %v1685 = vunpack.c.h.b16 %v1029
          %v1686 = vunpack.c.l.b16 %v1030
          %v1687 = vunpack.c.h.b16 %v1030
          %v1688 = vunpack.c.l.b16 %v1031
          %v1689 = vunpack.c.h.b16 %v1031
          %v1690 = vunpack.c.l.b16 %v1032
          %v1691 = vunpack.c.h.b16 %v1032
          %v1692 = vunpack.c.l.b16 %v1033
          %v1693 = vunpack.c.h.b16 %v1033
          %v1694 = vunpack.c.l.b16 %v1034
          %v1695 = vunpack.c.h.b16 %v1034
          %v1696 = vunpack.c.l.b16 %v1035
          %v1697 = vunpack.c.h.b16 %v1035
          %v1698 = vunpack.c.l.b16 %v1036
          %v1699 = vunpack.c.h.b16 %v1036
          %v1700 = vunpack.c.l.b16 %v1037
          %v1701 = vunpack.c.h.b16 %v1037
          %v1702 = vunpack.c.l.b16 %v1038
          %v1703 = vunpack.c.h.b16 %v1038
          %v1704 = vunpack.c.l.b16 %v1039
          %v1705 = vunpack.c.h.b16 %v1039
          %v1706 = vunpack.c.l.b16 %v1040
          %v1707 = vunpack.c.h.b16 %v1040
          %v1708 = vunpack.c.l.b16 %v1041
          %v1709 = vunpack.c.h.b16 %v1041
          %v1710 = vunpack.c.l.b16 %v1042
          %v1711 = vunpack.c.h.b16 %v1042
          %v1712 = vunpack.c.l.b16 %v1043
          %v1713 = vunpack.c.h.b16 %v1043
          %v1714 = vunpack.c.l.b16 %v1044
          %v1715 = vunpack.c.h.b16 %v1044
          %v1716 = vunpack.c.l.b16 %v1045
          %v1717 = vunpack.c.h.b16 %v1045
          %v1718 = vunpack.c.l.b16 %v1046
          %v1719 = vunpack.c.h.b16 %v1046
          %v1720 = vunpack.c.l.b16 %v1047
          %v1721 = vunpack.c.h.b16 %v1047
          %v1722 = vunpack.c.l.b16 %v1048
          %v1723 = vunpack.c.h.b16 %v1048
          %v1724 = vunpack.c.l.b16 %v1049
          %v1725 = vunpack.c.h.b16 %v1049
          %v1726 = vunpack.c.l.b16 %v1050
          %v1727 = vunpack.c.h.b16 %v1050
          %v1728 = vunpack.c.l.b16 %v1051
          %v1729 = vunpack.c.h.b16 %v1051
          %v1730 = vunpack.c.l.b16 %v1052
          %v1731 = vunpack.c.h.b16 %v1052
          %v1732 = vunpack.c.l.b16 %v1053
          %v1733 = vunpack.c.h.b16 %v1053
          %v1734 = vunpack.c.l.b16 %v1054
          %v1735 = vunpack.c.h.b16 %v1054
          %v1736 = vunpack.c.l.b16 %v1055
          %v1737 = vunpack.c.h.b16 %v1055
          %v1738 = vunpack.c.l.b16 %v1056
          %v1739 = vunpack.c.h.b16 %v1056
          %v1740 = vunpack.c.l.b16 %v1057
          %v1741 = vunpack.c.h.b16 %v1057
          %v1742 = vunpack.c.l.b16 %v1058
          %v1743 = vunpack.c.h.b16 %v1058
          %v1744 = vunpack.c.l.b16 %v1059
          %v1745 = vunpack.c.h.b16 %v1059
          %v1746 = vunpack.c.l.b16 %v1060
          %v1747 = vunpack.c.h.b16 %v1060
          %v1748 = vunpack.c.l.b16 %v1061
          %v1749 = vunpack.c.h.b16 %v1061
          %v1750 = vunpack.c.l.b16 %v1062
          %v1751 = vunpack.c.h.b16 %v1062
          %v1752 = vunpack.c.l.b16 %v1063
          %v1753 = vunpack.c.h.b16 %v1063
          %v1754 = vunpack.c.l.b16 %v1064
          %v1755 = vunpack.c.h.b16 %v1064
          %v1756 = vunpack.c.l.b16 %v1065
          %v1757 = vunpack.c.h.b16 %v1065
          %v1758 = vunpack.c.l.b16 %v1066
          %v1759 = vunpack.c.h.b16 %v1066
          %v1760 = vunpack.c.l.b16 %v1067
          %v1761 = vunpack.c.h.b16 %v1067
          %v1762 = vunpack.c.l.b16 %v1068
          %v1763 = vunpack.c.h.b16 %v1068
          %v1764 = vunpack.c.l.b16 %v1069
          %v1765 = vunpack.c.h.b16 %v1069
          %v1766 = vunpack.c.l.b16 %v1070
          %v1767 = vunpack.c.h.b16 %v1070
          %v1768 = vunpack.c.l.b16 %v1071
          %v1769 = vunpack.c.h.b16 %v1071
          %v1770 = vunpack.c.l.b16 %v1072
          %v1771 = vunpack.c.h.b16 %v1072
          %v1772 = vunpack.c.l.b16 %v1073
          %v1773 = vunpack.c.h.b16 %v1073
          %v1774 = vunpack.c.l.b16 %v1074
          %v1775 = vunpack.c.h.b16 %v1074
          %v1776 = vunpack.c.l.b16 %v1075
          %v1777 = vunpack.c.h.b16 %v1075
          %v1778 = vunpack.c.l.b16 %v1076
          %v1779 = vunpack.c.h.b16 %v1076
          %v1780 = vunpack.c.l.b16 %v1077
          %v1781 = vunpack.c.h.b16 %v1077
          %v1782 = vunpack.c.l.b16 %v1078
          %v1783 = vunpack.c.h.b16 %v1078
          %v1784 = vunpack.c.l.b16 %v1079
          %v1785 = vunpack.c.h.b16 %v1079
          %v1786 = vunpack.c.l.b16 %v1080
          %v1787 = vunpack.c.h.b16 %v1080
          %v1788 = vunpack.c.l.b16 %v1081
          %v1789 = vunpack.c.h.b16 %v1081
          %v1790 = vunpack.c.l.b16 %v1082
          %v1791 = vunpack.c.h.b16 %v1082
          %v1792 = vunpack.c.l.b16 %v1083
          %v1793 = vunpack.c.h.b16 %v1083
          %v1794 = vunpack.c.l.b16 %v1084
          %v1795 = vunpack.c.h.b16 %v1084
          %v1796 = vunpack.c.l.b16 %v1085
          %v1797 = vunpack.c.h.b16 %v1085
          %v1798 = vunpack.c.l.b16 %v1086
          %v1799 = vunpack.c.h.b16 %v1086
          %v1800 = vunpack.c.l.b16 %v1087
          %v1801 = vunpack.c.h.b16 %v1087
          %v1802 = vunpack.c.l.b16 %v1088
          %v1803 = vunpack.c.h.b16 %v1088
          %v1804 = vunpack.c.l.b16 %v1089
          %v1805 = vunpack.c.h.b16 %v1089
          %v1806 = vunpack.c.l.b16 %v1090
          %v1807 = vunpack.c.h.b16 %v1090
          %v1808 = vunpack.c.l.b16 %v1091
          %v1809 = vunpack.c.h.b16 %v1091
          %v1810 = vunpack.c.l.b16 %v1092
          %v1811 = vunpack.c.h.b16 %v1092
          %v1812 = vunpack.c.l.b16 %v1093
          %v1813 = vunpack.c.h.b16 %v1093
          %v1814 = vunpack.c.l.b16 %v1094
          %v1815 = vunpack.c.h.b16 %v1094
          %v1816 = vunpack.c.l.b16 %v1095
          %v1817 = vunpack.c.h.b16 %v1095
          %v1818 = vunpack.c.l.b16 %v1096
          %v1819 = vunpack.c.h.b16 %v1096
          %v1820 = vunpack.c.l.b16 %v1097
          %v1821 = vunpack.c.h.b16 %v1097
          %v1822 = vunpack.c.l.b16 %v1098
          %v1823 = vunpack.c.h.b16 %v1098
          %v1824 = vunpack.c.l.b16 %v1099
          %v1825 = vunpack.c.h.b16 %v1099
          %v1826 = vunpack.c.l.b16 %v1100
          %v1827 = vunpack.c.h.b16 %v1100
          %v1828 = vunpack.c.l.b16 %v1101
          %v1829 = vunpack.c.h.b16 %v1101
          %v1830 = vunpack.c.l.b16 %v1102
          %v1831 = vunpack.c.h.b16 %v1102
          %v1832 = vunpack.c.l.b16 %v1103
          %v1833 = vunpack.c.h.b16 %v1103
          %v1834 = vunpack.c.l.b16 %v1104
          %v1835 = vunpack.c.h.b16 %v1104
          %v1836 = vunpack.c.l.b16 %v1105
          %v1837 = vunpack.c.h.b16 %v1105
          %v1838 = vunpack.c.l.b16 %v1106
          %v1839 = vunpack.c.h.b16 %v1106
          %v1840 = vunpack.c.l.b16 %v1107
          %v1841 = vunpack.c.h.b16 %v1107
          %v1842 = vunpack.c.l.b16 %v1108
          %v1843 = vunpack.c.h.b16 %v1108
          %v1844 = vunpack.c.l.b16 %v1109
          %v1845 = vunpack.c.h.b16 %v1109
          %v1846 = vunpack.c.l.b16 %v1110
          %v1847 = vunpack.c.h.b16 %v1110
          %v1848 = vunpack.c.l.b16 %v1111
          %v1849 = vunpack.c.h.b16 %v1111
          %v1850 = vunpack.c.l.b16 %v1112
          %v1851 = vunpack.c.h.b16 %v1112
          %v1852 = vunpack.c.l.b16 %v1113
          %v1853 = vunpack.c.h.b16 %v1113
          %v1854 = vunpack.c.l.b16 %v1114
          %v1855 = vunpack.c.h.b16 %v1114
          %v1856 = vunpack.c.l.b16 %v1115
          %v1857 = vunpack.c.h.b16 %v1115
          %v1858 = vunpack.c.l.b16 %v1116
          %v1859 = vunpack.c.h.b16 %v1116
          %v1860 = vunpack.c.l.b16 %v1117
          %v1861 = vunpack.c.h.b16 %v1117
          %v1862 = vunpack.c.l.b16 %v1118
          %v1863 = vunpack.c.h.b16 %v1118
          %v1864 = vunpack.c.l.b16 %v1119
          %v1865 = vunpack.c.h.b16 %v1119
          %v1866 = vunpack.c.l.b16 %v1120
          %v1867 = vunpack.c.h.b16 %v1120
          %v1868 = vunpack.c.l.b16 %v1121
          %v1869 = vunpack.c.h.b16 %v1121
          %v1870 = vunpack.c.l.b16 %v1122
          %v1871 = vunpack.c.h.b16 %v1122
          %v1872 = vunpack.c.l.b16 %v1123
          %v1873 = vunpack.c.h.b16 %v1123
          %v1874 = vunpack.c.l.b16 %v1124
          %v1875 = vunpack.c.h.b16 %v1124
          %v1876 = vunpack.c.l.b16 %v1125
          %v1877 = vunpack.c.h.b16 %v1125
          %v1878 = vunpack.c.l.b16 %v1126
          %v1879 = vunpack.c.h.b16 %v1126
          %v1880 = vunpack.c.l.b16 %v1127
          %v1881 = vunpack.c.h.b16 %v1127
          %v1882 = vunpack.c.l.b16 %v1128
          %v1883 = vunpack.c.h.b16 %v1128
          %v1884 = vunpack.c.l.b16 %v1129
          %v1885 = vunpack.c.h.b16 %v1129
          %v1886 = vunpack.c.l.b16 %v1130
          %v1887 = vunpack.c.h.b16 %v1130
          %v1888 = vunpack.c.l.b16 %v1131
          %v1889 = vunpack.c.h.b16 %v1131
          %v1890 = vunpack.c.l.b16 %v1132
          %v1891 = vunpack.c.h.b16 %v1132
          %v1892 = vunpack.c.l.b16 %v1133
          %v1893 = vunpack.c.h.b16 %v1133
          %v1894 = vunpack.c.l.b16 %v1134
          %v1895 = vunpack.c.h.b16 %v1134
          %v1896 = vunpack.c.l.b16 %v1135
          %v1897 = vunpack.c.h.b16 %v1135
          %v1898 = vunpack.c.l.b16 %v1136
          %v1899 = vunpack.c.h.b16 %v1136
          %v1900 = vunpack.c.l.b16 %v1137
          %v1901 = vunpack.c.h.b16 %v1137
          %v1902 = vunpack.c.l.b16 %v1138
          %v1903 = vunpack.c.h.b16 %v1138
          %v1904 = vunpack.c.l.b16 %v1139
          %v1905 = vunpack.c.h.b16 %v1139
          %v1906 = vunpack.c.l.b16 %v1140
          %v1907 = vunpack.c.h.b16 %v1140
          %v1908 = vunpack.c.l.b16 %v1141
          %v1909 = vunpack.c.h.b16 %v1141
          %v1910 = vunpack.c.l.b16 %v1142
          %v1911 = vunpack.c.h.b16 %v1142
          %v1912 = vunpack.c.l.b16 %v1143
          %v1913 = vunpack.c.h.b16 %v1143
          %v1914 = vunpack.c.l.b16 %v1144
          %v1915 = vunpack.c.h.b16 %v1144
          %v1916 = vunpack.c.l.b16 %v1145
          %v1917 = vunpack.c.h.b16 %v1145
          %v1918 = vunpack.c.l.b16 %v1146
          %v1919 = vunpack.c.h.b16 %v1146
          %v1920 = vunpack.c.l.b16 %v1147
          %v1921 = vunpack.c.h.b16 %v1147
          %v1922 = vunpack.c.l.b16 %v1148
          %v1923 = vunpack.c.h.b16 %v1148
          %v1924 = vunpack.c.l.b16 %v1149
          %v1925 = vunpack.c.h.b16 %v1149
          %v1926 = vunpack.c.l.b16 %v1150
          %v1927 = vunpack.c.h.b16 %v1150
          %v1928 = vunpack.c.l.b16 %v1151
          %v1929 = vunpack.c.h.b16 %v1151
          %v1930 = vunpack.c.l.b16 %v1152
          %v1931 = vunpack.c.h.b16 %v1152
          %v1932 = vunpack.c.l.b16 %v1153
          %v1933 = vunpack.c.h.b16 %v1153
          %v1934 = vunpack.c.l.b16 %v1154
          %v1935 = vunpack.c.h.b16 %v1154
          %v1936 = vunpack.c.l.b16 %v1155
          %v1937 = vunpack.c.h.b16 %v1155
          %v1938 = vunpack.c.l.b16 %v1156
          %v1939 = vunpack.c.h.b16 %v1156
          %v1940 = vunpack.c.l.b16 %v1157
          %v1941 = vunpack.c.h.b16 %v1157
          %v1942 = vunpack.c.l.b16 %v1158
          %v1943 = vunpack.c.h.b16 %v1158
          %v1944 = vunpack.c.l.b16 %v1159
          %v1945 = vunpack.c.h.b16 %v1159
          %v1946 = vunpack.c.l.b16 %v1160
          %v1947 = vunpack.c.h.b16 %v1160
          %v1948 = vunpack.c.l.b16 %v1161
          %v1949 = vunpack.c.h.b16 %v1161
          %v1950 = vunpack.c.l.b16 %v1162
          %v1951 = vunpack.c.h.b16 %v1162
          %v1952 = vunpack.c.l.b16 %v1163
          %v1953 = vunpack.c.h.b16 %v1163
          %v1954 = vunpack.c.l.b16 %v1164
          %v1955 = vunpack.c.h.b16 %v1164
          %v1956 = vunpack.c.l.b16 %v1165
          %v1957 = vunpack.c.h.b16 %v1165
          %v1958 = vunpack.c.l.b16 %v1166
          %v1959 = vunpack.c.h.b16 %v1166
          %v1960 = vunpack.c.l.b16 %v1167
          %v1961 = vunpack.c.h.b16 %v1167
          %v1962 = vunpack.c.l.b16 %v1168
          %v1963 = vunpack.c.h.b16 %v1168
          %v1964 = vunpack.c.l.b16 %v1169
          %v1965 = vunpack.c.h.b16 %v1169
          %v1966 = vunpack.c.l.b16 %v1170
          %v1967 = vunpack.c.h.b16 %v1170
          %v1968 = vunpack.c.l.b16 %v1171
          %v1969 = vunpack.c.h.b16 %v1171
          %v1970 = vunpack.c.l.b16 %v1172
          %v1971 = vunpack.c.h.b16 %v1172
          %v1972 = vunpack.c.l.b16 %v1173
          %v1973 = vunpack.c.h.b16 %v1173
          %v1974 = vunpack.c.l.b16 %v1174
          %v1975 = vunpack.c.h.b16 %v1174
          %v1976 = vunpack.c.l.b16 %v1175
          %v1977 = vunpack.c.h.b16 %v1175
          %v1978 = vunpack.c.l.b16 %v1176
          %v1979 = vunpack.c.h.b16 %v1176
          %v1980 = vunpack.c.l.b16 %v1177
          %v1981 = vunpack.c.h.b16 %v1177
          %v1982 = vunpack.c.l.b16 %v1178
          %v1983 = vunpack.c.h.b16 %v1178
          %v1984 = vunpack.c.l.b16 %v1179
          %v1985 = vunpack.c.h.b16 %v1179
          %v1986 = vunpack.c.l.b16 %v1180
          %v1987 = vunpack.c.h.b16 %v1180
          %v1988 = vunpack.c.l.b16 %v1181
          %v1989 = vunpack.c.h.b16 %v1181
          %v1990 = vunpack.c.l.b16 %v1182
          %v1991 = vunpack.c.h.b16 %v1182
          %v1992 = vunpack.c.l.b16 %v1183
          %v1993 = vunpack.c.h.b16 %v1183
          %v1994 = vpack.c.b16 %v1490, %v1482
          %v1995 = vpack.c.b16 %v1491, %v1483
          %v1996 = vpack.c.b16 %v1492, %v1484
          %v1997 = vpack.c.b16 %v1493, %v1485
          %v1998 = vpack.c.b16 %v1494, %v1486
          %v1999 = vpack.c.b16 %v1495, %v1487
          %v2000 = vpack.c.b16 %v1496, %v1488
          %v2001 = vpack.c.b16 %v1497, %v1489
          %v2002 = vpack.c.b16 %v1506, %v1498
          %v2003 = vpack.c.b16 %v1507, %v1499
          %v2004 = vpack.c.b16 %v1508, %v1500
          %v2005 = vpack.c.b16 %v1509, %v1501
          %v2006 = vpack.c.b16 %v1510, %v1502
          %v2007 = vpack.c.b16 %v1511, %v1503
          %v2008 = vpack.c.b16 %v1512, %v1504
          %v2009 = vpack.c.b16 %v1513, %v1505
          %v2010 = vpack.c.b16 %v1522, %v1514
          %v2011 = vpack.c.b16 %v1523, %v1515
          %v2012 = vpack.c.b16 %v1524, %v1516
          %v2013 = vpack.c.b16 %v1525, %v1517
          %v2014 = vpack.c.b16 %v1526, %v1518
          %v2015 = vpack.c.b16 %v1527, %v1519
          %v2016 = vpack.c.b16 %v1528, %v1520
          %v2017 = vpack.c.b16 %v1529, %v1521
          %v2018 = vpack.c.b16 %v1538, %v1530
          %v2019 = vpack.c.b16 %v1539, %v1531
          %v2020 = vpack.c.b16 %v1540, %v1532
          %v2021 = vpack.c.b16 %v1541, %v1533
          %v2022 = vpack.c.b16 %v1542, %v1534
          %v2023 = vpack.c.b16 %v1543, %v1535
          %v2024 = vpack.c.b16 %v1544, %v1536
          %v2025 = vpack.c.b16 %v1545, %v1537
          %v2026 = vpack.c.b16 %v1554, %v1546
          %v2027 = vpack.c.b16 %v1555, %v1547
          %v2028 = vpack.c.b16 %v1556, %v1548
          %v2029 = vpack.c.b16 %v1557, %v1549
          %v2030 = vpack.c.b16 %v1558, %v1550
          %v2031 = vpack.c.b16 %v1559, %v1551
          %v2032 = vpack.c.b16 %v1560, %v1552
          %v2033 = vpack.c.b16 %v1561, %v1553
          %v2034 = vpack.c.b16 %v1570, %v1562
          %v2035 = vpack.c.b16 %v1571, %v1563
          %v2036 = vpack.c.b16 %v1572, %v1564
          %v2037 = vpack.c.b16 %v1573, %v1565
          %v2038 = vpack.c.b16 %v1574, %v1566
          %v2039 = vpack.c.b16 %v1575, %v1567
          %v2040 = vpack.c.b16 %v1576, %v1568
          %v2041 = vpack.c.b16 %v1577, %v1569
          %v2042 = vpack.c.b16 %v1586, %v1578
          %v2043 = vpack.c.b16 %v1587, %v1579
          %v2044 = vpack.c.b16 %v1588, %v1580
          %v2045 = vpack.c.b16 %v1589, %v1581
          %v2046 = vpack.c.b16 %v1590, %v1582
          %v2047 = vpack.c.b16 %v1591, %v1583
          %v2048 = vpack.c.b16 %v1592, %v1584
          %v2049 = vpack.c.b16 %v1593, %v1585
          %v2050 = vpack.c.b16 %v1602, %v1594
          %v2051 = vpack.c.b16 %v1603, %v1595
          %v2052 = vpack.c.b16 %v1604, %v1596
          %v2053 = vpack.c.b16 %v1605, %v1597
          %v2054 = vpack.c.b16 %v1606, %v1598
          %v2055 = vpack.c.b16 %v1607, %v1599
          %v2056 = vpack.c.b16 %v1608, %v1600
          %v2057 = vpack.c.b16 %v1609, %v1601
          %v2058 = vpack.c.b16 %v1618, %v1610
          %v2059 = vpack.c.b16 %v1619, %v1611
          %v2060 = vpack.c.b16 %v1620, %v1612
          %v2061 = vpack.c.b16 %v1621, %v1613
          %v2062 = vpack.c.b16 %v1622, %v1614
          %v2063 = vpack.c.b16 %v1623, %v1615
          %v2064 = vpack.c.b16 %v1624, %v1616
          %v2065 = vpack.c.b16 %v1625, %v1617
          %v2066 = vpack.c.b16 %v1634, %v1626
          %v2067 = vpack.c.b16 %v1635, %v1627
          %v2068 = vpack.c.b16 %v1636, %v1628
          %v2069 = vpack.c.b16 %v1637, %v1629
          %v2070 = vpack.c.b16 %v1638, %v1630
          %v2071 = vpack.c.b16 %v1639, %v1631
          %v2072 = vpack.c.b16 %v1640, %v1632
          %v2073 = vpack.c.b16 %v1641, %v1633
          %v2074 = vpack.c.b16 %v1650, %v1642
          %v2075 = vpack.c.b16 %v1651, %v1643
          %v2076 = vpack.c.b16 %v1652, %v1644
          %v2077 = vpack.c.b16 %v1653, %v1645
          %v2078 = vpack.c.b16 %v1654, %v1646
          %v2079 = vpack.c.b16 %v1655, %v1647
          %v2080 = vpack.c.b16 %v1656, %v1648
          %v2081 = vpack.c.b16 %v1657, %v1649
          %v2082 = vpack.c.b16 %v1666, %v1658
          %v2083 = vpack.c.b16 %v1667, %v1659
          %v2084 = vpack.c.b16 %v1668, %v1660
          %v2085 = vpack.c.b16 %v1669, %v1661
          %v2086 = vpack.c.b16 %v1670, %v1662
          %v2087 = vpack.c.b16 %v1671, %v1663
          %v2088 = vpack.c.b16 %v1672, %v1664
          %v2089 = vpack.c.b16 %v1673, %v1665
          %v2090 = vpack.c.b16 %v1682, %v1674
          %v2091 = vpack.c.b16 %v1683, %v1675
          %v2092 = vpack.c.b16 %v1684, %v1676
          %v2093 = vpack.c.b16 %v1685, %v1677
          %v2094 = vpack.c.b16 %v1686, %v1678
          %v2095 = vpack.c.b16 %v1687, %v1679
          %v2096 = vpack.c.b16 %v1688, %v1680
          %v2097 = vpack.c.b16 %v1689, %v1681
          %v2098 = vpack.c.b16 %v1698, %v1690
          %v2099 = vpack.c.b16 %v1699, %v1691
          %v2100 = vpack.c.b16 %v1700, %v1692
          %v2101 = vpack.c.b16 %v1701, %v1693
          %v2102 = vpack.c.b16 %v1702, %v1694
          %v2103 = vpack.c.b16 %v1703, %v1695
          %v2104 = vpack.c.b16 %v1704, %v1696
          %v2105 = vpack.c.b16 %v1705, %v1697
          %v2106 = vpack.c.b16 %v1714, %v1706
          %v2107 = vpack.c.b16 %v1715, %v1707
          %v2108 = vpack.c.b16 %v1716, %v1708
          %v2109 = vpack.c.b16 %v1717, %v1709
          %v2110 = vpack.c.b16 %v1718, %v1710
          %v2111 = vpack.c.b16 %v1719, %v1711
          %v2112 = vpack.c.b16 %v1720, %v1712
          %v2113 = vpack.c.b16 %v1721, %v1713
          %v2114 = vpack.c.b16 %v1730, %v1722
          %v2115 = vpack.c.b16 %v1731, %v1723
          %v2116 = vpack.c.b16 %v1732, %v1724
          %v2117 = vpack.c.b16 %v1733, %v1725
          %v2118 = vpack.c.b16 %v1734, %v1726
          %v2119 = vpack.c.b16 %v1735, %v1727
          %v2120 = vpack.c.b16 %v1736, %v1728
          %v2121 = vpack.c.b16 %v1737, %v1729
          %v2122 = vpack.c.b16 %v1746, %v1738
          %v2123 = vpack.c.b16 %v1747, %v1739
          %v2124 = vpack.c.b16 %v1748, %v1740
          %v2125 = vpack.c.b16 %v1749, %v1741
          %v2126 = vpack.c.b16 %v1750, %v1742
          %v2127 = vpack.c.b16 %v1751, %v1743
          %v2128 = vpack.c.b16 %v1752, %v1744
          %v2129 = vpack.c.b16 %v1753, %v1745
          %v2130 = vpack.c.b16 %v1762, %v1754
          %v2131 = vpack.c.b16 %v1763, %v1755
          %v2132 = vpack.c.b16 %v1764, %v1756
          %v2133 = vpack.c.b16 %v1765, %v1757
          %v2134 = vpack.c.b16 %v1766, %v1758
          %v2135 = vpack.c.b16 %v1767, %v1759
          %v2136 = vpack.c.b16 %v1768, %v1760
          %v2137 = vpack.c.b16 %v1769, %v1761
          %v2138 = vpack.c.b16 %v1778, %v1770
          %v2139 = vpack.c.b16 %v1779, %v1771
          %v2140 = vpack.c.b16 %v1780, %v1772
          %v2141 = vpack.c.b16 %v1781, %v1773
          %v2142 = vpack.c.b16 %v1782, %v1774
          %v2143 = vpack.c.b16 %v1783, %v1775
          %v2144 = vpack.c.b16 %v1784, %v1776
          %v2145 = vpack.c.b16 %v1785, %v1777
          %v2146 = vpack.c.b16 %v1794, %v1786
          %v2147 = vpack.c.b16 %v1795, %v1787
          %v2148 = vpack.c.b16 %v1796, %v1788
          %v2149 = vpack.c.b16 %v1797, %v1789
          %v2150 = vpack.c.b16 %v1798, %v1790
          %v2151 = vpack.c.b16 %v1799, %v1791
          %v2152 = vpack.c.b16 %v1800, %v1792
          %v2153 = vpack.c.b16 %v1801, %v1793
          %v2154 = vpack.c.b16 %v1810, %v1802
          %v2155 = vpack.c.b16 %v1811, %v1803
          %v2156 = vpack.c.b16 %v1812, %v1804
          %v2157 = vpack.c.b16 %v1813, %v1805
          %v2158 = vpack.c.b16 %v1814, %v1806
          %v2159 = vpack.c.b16 %v1815, %v1807
          %v2160 = vpack.c.b16 %v1816, %v1808
          %v2161 = vpack.c.b16 %v1817, %v1809
          %v2162 = vpack.c.b16 %v1826, %v1818
          %v2163 = vpack.c.b16 %v1827, %v1819
          %v2164 = vpack.c.b16 %v1828, %v1820
          %v2165 = vpack.c.b16 %v1829, %v1821
          %v2166 = vpack.c.b16 %v1830, %v1822
          %v2167 = vpack.c.b16 %v1831, %v1823
          %v2168 = vpack.c.b16 %v1832, %v1824
          %v2169 = vpack.c.b16 %v1833, %v1825
          %v2170 = vpack.c.b16 %v1842, %v1834
          %v2171 = vpack.c.b16 %v1843, %v1835
          %v2172 = vpack.c.b16 %v1844, %v1836
          %v2173 = vpack.c.b16 %v1845, %v1837
          %v2174 = vpack.c.b16 %v1846, %v1838
          %v2175 = vpack.c.b16 %v1847, %v1839
          %v2176 = vpack.c.b16 %v1848, %v1840
          %v2177 = vpack.c.b16 %v1849, %v1841
          %v2178 = vpack.c.b16 %v1858, %v1850
          %v2179 = vpack.c.b16 %v1859, %v1851
          %v2180 = vpack.c.b16 %v1860, %v1852
          %v2181 = vpack.c.b16 %v1861, %v1853
          %v2182 = vpack.c.b16 %v1862, %v1854
          %v2183 = vpack.c.b16 %v1863, %v1855
          %v2184 = vpack.c.b16 %v1864, %v1856
          %v2185 = vpack.c.b16 %v1865, %v1857
          %v2186 = vpack.c.b16 %v1874, %v1866
          %v2187 = vpack.c.b16 %v1875, %v1867
          %v2188 = vpack.c.b16 %v1876, %v1868
          %v2189 = vpack.c.b16 %v1877, %v1869
          %v2190 = vpack.c.b16 %v1878, %v1870
          %v2191 = vpack.c.b16 %v1879, %v1871
          %v2192 = vpack.c.b16 %v1880, %v1872
          %v2193 = vpack.c.b16 %v1881, %v1873
          %v2194 = vpack.c.b16 %v1890, %v1882
          %v2195 = vpack.c.b16 %v1891, %v1883
          %v2196 = vpack.c.b16 %v1892, %v1884
          %v2197 = vpack.c.b16 %v1893, %v1885
          %v2198 = vpack.c.b16 %v1894, %v1886
          %v2199 = vpack.c.b16 %v1895, %v1887
          %v2200 = vpack.c.b16 %v1896, %v1888
          %v2201 = vpack.c.b16 %v1897, %v1889
          %v2202 = vpack.c.b16 %v1906, %v1898
          %v2203 = vpack.c.b16 %v1907, %v1899
          %v2204 = vpack.c.b16 %v1908, %v1900
          %v2205 = vpack.c.b16 %v1909, %v1901
          %v2206 = vpack.c.b16 %v1910, %v1902
          %v2207 = vpack.c.b16 %v1911, %v1903
          %v2208 = vpack.c.b16 %v1912, %v1904
          %v2209 = vpack.c.b16 %v1913, %v1905
          %v2210 = vpack.c.b16 %v1922, %v1914
          %v2211 = vpack.c.b16 %v1923, %v1915
          %v2212 = vpack.c.b16 %v1924, %v1916
          %v2213 = vpack.c.b16 %v1925, %v1917
          %v2214 = vpack.c.b16 %v1926, %v1918
          %v2215 = vpack.c.b16 %v1927, %v1919
          %v2216 = vpack.c.b16 %v1928, %v1920
          %v2217 = vpack.c.b16 %v1929, %v1921
          %v2218 = vpack.c.b16 %v1938, %v1930
          %v2219 = vpack.c.b16 %v1939, %v1931
          %v2220 = vpack.c.b16 %v1940, %v1932
          %v2221 = vpack.c.b16 %v1941, %v1933
          %v2222 = vpack.c.b16 %v1942, %v1934
          %v2223 = vpack.c.b16 %v1943, %v1935
          %v2224 = vpack.c.b16 %v1944, %v1936
          %v2225 = vpack.c.b16 %v1945, %v1937
          %v2226 = vpack.c.b16 %v1954, %v1946
          %v2227 = vpack.c.b16 %v1955, %v1947
          %v2228 = vpack.c.b16 %v1956, %v1948
          %v2229 = vpack.c.b16 %v1957, %v1949
          %v2230 = vpack.c.b16 %v1958, %v1950
          %v2231 = vpack.c.b16 %v1959, %v1951
          %v2232 = vpack.c.b16 %v1960, %v1952
          %v2233 = vpack.c.b16 %v1961, %v1953
          %v2234 = vpack.c.b16 %v1970, %v1962
          %v2235 = vpack.c.b16 %v1971, %v1963
          %v2236 = vpack.c.b16 %v1972, %v1964
          %v2237 = vpack.c.b16 %v1973, %v1965
          %v2238 = vpack.c.b16 %v1974, %v1966
          %v2239 = vpack.c.b16 %v1975, %v1967
          %v2240 = vpack.c.b16 %v1976, %v1968
          %v2241 = vpack.c.b16 %v1977, %v1969
          %v2242 = vpack.c.b16 %v1986, %v1978
          %v2243 = vpack.c.b16 %v1987, %v1979
          %v2244 = vpack.c.b16 %v1988, %v1980
          %v2245 = vpack.c.b16 %v1989, %v1981
          %v2246 = vpack.c.b16 %v1990, %v1982
          %v2247 = vpack.c.b16 %v1991, %v1983
          %v2248 = vpack.c.b16 %v1992, %v1984
          %v2249 = vpack.c.b16 %v1993, %v1985
          %2506 = vmatprep.subr.bf16.mxu0 %v1995
          %2507 = vmatpush1.bf16.msra.mxu0 %v1994
          %2508 = vmatprep.subr.bf16.mxu0 %v2003
          %2509 = vmatpush1.bf16.msra.mxu0 %v2002
          %2510 = vmatprep.subr.bf16.mxu0 %v2011
          %2511 = vmatpush1.bf16.msra.mxu0 %v2010
          %2512 = vmatprep.subr.bf16.mxu0 %v2019
          %2513 = vmatpush1.bf16.msra.mxu0 %v2018
          %2514 = vmatprep.subr.bf16.mxu0 %v2027
          %2515 = vmatpush1.bf16.msra.mxu0 %v2026
          %2516 = vmatprep.subr.bf16.mxu0 %v2035
          %2517 = vmatpush1.bf16.msra.mxu0 %v2034
          %2518 = vmatprep.subr.bf16.mxu0 %v2043
          %2519 = vmatpush1.bf16.msra.mxu0 %v2042
          %2520 = vmatprep.subr.bf16.mxu0 %v2051
          %2521 = vmatpush1.bf16.msra.mxu0 %v2050
          %2522 = vmatprep.subr.bf16.mxu0 %v2059
          %2523 = vmatpush1.bf16.msra.mxu0 %v2058
          %2524 = vmatprep.subr.bf16.mxu0 %v2067
          %2525 = vmatpush1.bf16.msra.mxu0 %v2066
          %2526 = vmatprep.subr.bf16.mxu0 %v2075
          %2527 = vmatpush1.bf16.msra.mxu0 %v2074
          %2528 = vmatprep.subr.bf16.mxu0 %v2083
          %2529 = vmatpush1.bf16.msra.mxu0 %v2082
          %2530 = vmatprep.subr.bf16.mxu0 %v2091
          %2531 = vmatpush1.bf16.msra.mxu0 %v2090
          %2532 = vmatprep.subr.bf16.mxu0 %v2099
          %2533 = vmatpush1.bf16.msra.mxu0 %v2098
          %2534 = vmatprep.subr.bf16.mxu0 %v2107
          %2535 = vmatpush1.bf16.msra.mxu0 %v2106
          %2536 = vmatprep.subr.bf16.mxu0 %v2115
          %2537 = vmatpush1.bf16.msra.mxu0 %v2114
          %2538 = vmatprep.mubr.bf16.mxu0 %v897
          %2539 = vmatmul.mubr.bf16.gmra.mrb[0].mxu0 %v896
          %v2540 = vpop.f32.mrb[0].mxu0
          %v2541 = vadd.f32 %v1189, %v2540
          %v2542 = vpop.f32.mrb[0].mxu0
          %v2543 = vadd.f32 %v1193, %v2542
          %v2544 = vpop.f32.mrb[0].mxu0
          %v2545 = vadd.f32 %v1189, %v2544
          %v2546 = vpop.f32.mrb[0].mxu0
          %v2547 = vadd.f32 %v1193, %v2546
          %2548 = vmatprep.mubr.bf16.mxu0 %v901
          %2549 = vmatmul.mubr.bf16.gmra.mrb[0].mxu0 %v900
          %v2550 = vpop.f32.mrb[0].mxu0
          %v2551 = vadd.f32 %v1189, %v2550
          %v2552 = vpop.f32.mrb[0].mxu0
          %v2553 = vadd.f32 %v1193, %v2552
          %v2554 = vpop.f32.mrb[0].mxu0
          %v2555 = vadd.f32 %v1189, %v2554
          %v2556 = vpop.f32.mrb[0].mxu0
          %v2557 = vadd.f32 %v1193, %v2556
          %2558 = vmatprep.mubr.bf16.mxu0 %v905
          %2559 = vmatmul.mubr.bf16.gmra.mrb[0].mxu0 %v904
          %v2560 = vpop.f32.mrb[0].mxu0
          %v2561 = vadd.f32 %v1189, %v2560
          %v2562 = vpop.f32.mrb[0].mxu0
          %v2563 = vadd.f32 %v1193, %v2562
          %v2564 = vpop.f32.mrb[0].mxu0
          %v2565 = vadd.f32 %v1189, %v2564
          %v2566 = vpop.f32.mrb[0].mxu0
          %v2567 = vadd.f32 %v1193, %v2566
          %2568 = vmatprep.mubr.bf16.mxu0 %v909
          %2569 = vmatmul.mubr.bf16.gmra.mrb[0].mxu0 %v908
          %v2570 = vpop.f32.mrb[0].mxu0
          %v2571 = vadd.f32 %v1189, %v2570
          %v2572 = vpop.f32.mrb[0].mxu0
          %v2573 = vadd.f32 %v1193, %v2572
          %v2574 = vpop.f32.mrb[0].mxu0
          %v2575 = vadd.f32 %v1189, %v2574
          %v2576 = vpop.f32.mrb[0].mxu0
          %v2577 = vadd.f32 %v1193, %v2576
          %2578 = vmatprep.mubr.bf16.mxu0 %v913
          %2579 = vmatmul.mubr.bf16.gmra.mrb[0].mxu0 %v912
          %v2580 = vpop.f32.mrb[0].mxu0
          %v2581 = vadd.f32 %v1189, %v2580
          %v2582 = vpop.f32.mrb[0].mxu0
          %v2583 = vadd.f32 %v1193, %v2582
          %v2584 = vpop.f32.mrb[0].mxu0
          %v2585 = vadd.f32 %v1189, %v2584
          %v2586 = vpop.f32.mrb[0].mxu0
          %v2587 = vadd.f32 %v1193, %v2586
          %2588 = vmatprep.mubr.bf16.mxu0 %v917
          %2589 = vmatmul.mubr.bf16.gmra.mrb[0].mxu0 %v916
          %v2590 = vpop.f32.mrb[0].mxu0
          %v2591 = vadd.f32 %v1189, %v2590
          %v2592 = vpop.f32.mrb[0].mxu0
          %v2593 = vadd.f32 %v1193, %v2592
          %v2594 = vpop.f32.mrb[0].mxu0
          %v2595 = vadd.f32 %v1189, %v2594
          %v2596 = vpop.f32.mrb[0].mxu0
          %v2597 = vadd.f32 %v1193, %v2596
          %2598 = vmatprep.mubr.bf16.mxu0 %v921
          %2599 = vmatmul.mubr.bf16.gmra.mrb[0].mxu0 %v920
          %v2600 = vpop.f32.mrb[0].mxu0
          %v2601 = vadd.f32 %v1189, %v2600
          %v2602 = vpop.f32.mrb[0].mxu0
          %v2603 = vadd.f32 %v1193, %v2602
          %v2604 = vpop.f32.mrb[0].mxu0
          %v2605 = vadd.f32 %v1189, %v2604
          %v2606 = vpop.f32.mrb[0].mxu0
          %v2607 = vadd.f32 %v1193, %v2606
          %2608 = vmatprep.mubr.bf16.mxu0 %v925
          %2609 = vmatmul.mubr.bf16.gmra.mrb[0].mxu0 %v924
          %v2610 = vpop.f32.mrb[0].mxu0
          %v2611 = vadd.f32 %v1189, %v2610
          %v2612 = vpop.f32.mrb[0].mxu0
          %v2613 = vadd.f32 %v1193, %v2612
          %v2614 = vpop.f32.mrb[0].mxu0
          %v2615 = vadd.f32 %v1189, %v2614
          %v2616 = vpop.f32.mrb[0].mxu0
          %v2617 = vadd.f32 %v1193, %v2616
          %2618 = vdwg.mxu0
          %2619 = vmatprep.subr.bf16.mxu0 %v2123
          %2620 = vmatpush1.bf16.msra.mxu0 %v2122
          %2621 = vmatprep.subr.bf16.mxu0 %v2131
          %2622 = vmatpush1.bf16.msra.mxu0 %v2130
          %2623 = vmatprep.subr.bf16.mxu0 %v2139
          %2624 = vmatpush1.bf16.msra.mxu0 %v2138
          %2625 = vmatprep.subr.bf16.mxu0 %v2147
          %2626 = vmatpush1.bf16.msra.mxu0 %v2146
          %2627 = vmatprep.subr.bf16.mxu0 %v2155
          %2628 = vmatpush1.bf16.msra.mxu0 %v2154
          %2629 = vmatprep.subr.bf16.mxu0 %v2163
          %2630 = vmatpush1.bf16.msra.mxu0 %v2162
          %2631 = vmatprep.subr.bf16.mxu0 %v2171
          %2632 = vmatpush1.bf16.msra.mxu0 %v2170
          %2633 = vmatprep.subr.bf16.mxu0 %v2179
          %2634 = vmatpush1.bf16.msra.mxu0 %v2178
          %2635 = vmatprep.subr.bf16.mxu0 %v2187
          %2636 = vmatpush1.bf16.msra.mxu0 %v2186
          %2637 = vmatprep.subr.bf16.mxu0 %v2195
          %2638 = vmatpush1.bf16.msra.mxu0 %v2194
          %2639 = vmatprep.subr.bf16.mxu0 %v2203
          %2640 = vmatpush1.bf16.msra.mxu0 %v2202
          %2641 = vmatprep.subr.bf16.mxu0 %v2211
          %2642 = vmatpush1.bf16.msra.mxu0 %v2210
          %2643 = vmatprep.subr.bf16.mxu0 %v2219
          %2644 = vmatpush1.bf16.msra.mxu0 %v2218
          %2645 = vmatprep.subr.bf16.mxu0 %v2227
          %2646 = vmatpush1.bf16.msra.mxu0 %v2226
          %2647 = vmatprep.subr.bf16.mxu0 %v2235
          %2648 = vmatpush1.bf16.msra.mxu0 %v2234
          %2649 = vmatprep.subr.bf16.mxu0 %v2243
          %2650 = vmatpush1.bf16.msra.mxu0 %v2242
          %2651 = vmatprep.mubr.bf16.mxu0 %v899
          %2652 = vmatmul.mubr.bf16.gmra.mrb[0].mxu0 %v898
          %v2653 = vpop.f32.mrb[0].mxu0
          %v2654 = vadd.f32 %v2541, %v2653
          %v2655 = vpop.f32.mrb[0].mxu0
          %v2656 = vadd.f32 %v2543, %v2655
          %v2657 = vpop.f32.mrb[0].mxu0
          %v2658 = vadd.f32 %v2545, %v2657
          %v2659 = vpop.f32.mrb[0].mxu0
          %v2660 = vadd.f32 %v2547, %v2659
          %2661 = vmatprep.mubr.bf16.mxu0 %v903
          %2662 = vmatmul.mubr.bf16.gmra.mrb[0].mxu0 %v902
          %v2663 = vpop.f32.mrb[0].mxu0
          %v2664 = vadd.f32 %v2551, %v2663
          %v2665 = vpop.f32.mrb[0].mxu0
          %v2666 = vadd.f32 %v2553, %v2665
          %v2667 = vpop.f32.mrb[0].mxu0
          %v2668 = vadd.f32 %v2555, %v2667
          %v2669 = vpop.f32.mrb[0].mxu0
          %v2670 = vadd.f32 %v2557, %v2669
          %2671 = vmatprep.mubr.bf16.mxu0 %v907
          %2672 = vmatmul.mubr.bf16.gmra.mrb[0].mxu0 %v906
          %v2673 = vpop.f32.mrb[0].mxu0
          %v2674 = vadd.f32 %v2561, %v2673
          %v2675 = vpop.f32.mrb[0].mxu0
          %v2676 = vadd.f32 %v2563, %v2675
          %v2677 = vpop.f32.mrb[0].mxu0
          %v2678 = vadd.f32 %v2565, %v2677
          %v2679 = vpop.f32.mrb[0].mxu0
          %v2680 = vadd.f32 %v2567, %v2679
          %2681 = vmatprep.mubr.bf16.mxu0 %v911
          %2682 = vmatmul.mubr.bf16.gmra.mrb[0].mxu0 %v910
          %v2683 = vpop.f32.mrb[0].mxu0
          %v2684 = vadd.f32 %v2571, %v2683
          %v2685 = vpop.f32.mrb[0].mxu0
          %v2686 = vadd.f32 %v2573, %v2685
          %v2687 = vpop.f32.mrb[0].mxu0
          %v2688 = vadd.f32 %v2575, %v2687
          %v2689 = vpop.f32.mrb[0].mxu0
          %v2690 = vadd.f32 %v2577, %v2689
          %2691 = vmatprep.mubr.bf16.mxu0 %v915
          %2692 = vmatmul.mubr.bf16.gmra.mrb[0].mxu0 %v914
          %v2693 = vpop.f32.mrb[0].mxu0
          %v2694 = vadd.f32 %v2581, %v2693
          %v2695 = vpop.f32.mrb[0].mxu0
          %v2696 = vadd.f32 %v2583, %v2695
          %v2697 = vpop.f32.mrb[0].mxu0
          %v2698 = vadd.f32 %v2585, %v2697
          %v2699 = vpop.f32.mrb[0].mxu0
          %v2700 = vadd.f32 %v2587, %v2699
          %2701 = vmatprep.mubr.bf16.mxu0 %v919
          %2702 = vmatmul.mubr.bf16.gmra.mrb[0].mxu0 %v918
          %v2703 = vpop.f32.mrb[0].mxu0
          %v2704 = vadd.f32 %v2591, %v2703
          %v2705 = vpop.f32.mrb[0].mxu0
          %v2706 = vadd.f32 %v2593, %v2705
          %v2707 = vpop.f32.mrb[0].mxu0
          %v2708 = vadd.f32 %v2595, %v2707
          %v2709 = vpop.f32.mrb[0].mxu0
          %v2710 = vadd.f32 %v2597, %v2709
          %2711 = vmatprep.mubr.bf16.mxu0 %v923
          %2712 = vmatmul.mubr.bf16.gmra.mrb[0].mxu0 %v922
          %v2713 = vpop.f32.mrb[0].mxu0
          %v2714 = vadd.f32 %v2601, %v2713
          %v2715 = vpop.f32.mrb[0].mxu0
          %v2716 = vadd.f32 %v2603, %v2715
          %v2717 = vpop.f32.mrb[0].mxu0
          %v2718 = vadd.f32 %v2605, %v2717
          %v2719 = vpop.f32.mrb[0].mxu0
          %v2720 = vadd.f32 %v2607, %v2719
          %2721 = vmatprep.mubr.bf16.mxu0 %v927
          %2722 = vmatmul.mubr.bf16.gmra.mrb[0].mxu0 %v926
          %v2723 = vpop.f32.mrb[0].mxu0
          %v2724 = vadd.f32 %v2611, %v2723
          %v2725 = vpop.f32.mrb[0].mxu0
          %v2726 = vadd.f32 %v2613, %v2725
          %v2727 = vpop.f32.mrb[0].mxu0
          %v2728 = vadd.f32 %v2615, %v2727
          %v2729 = vpop.f32.mrb[0].mxu0
          %v2730 = vadd.f32 %v2617, %v2729
          %2731 = vdwg.mxu0
          %2732 = vmatprep.subr.bf16.mxu0 %v1997
          %2733 = vmatpush1.bf16.msra.mxu0 %v1996
          %2734 = vmatprep.subr.bf16.mxu0 %v2005
          %2735 = vmatpush1.bf16.msra.mxu0 %v2004
          %2736 = vmatprep.subr.bf16.mxu0 %v2013
          %2737 = vmatpush1.bf16.msra.mxu0 %v2012
          %2738 = vmatprep.subr.bf16.mxu0 %v2021
          %2739 = vmatpush1.bf16.msra.mxu0 %v2020
          %2740 = vmatprep.subr.bf16.mxu0 %v2029
          %2741 = vmatpush1.bf16.msra.mxu0 %v2028
          %2742 = vmatprep.subr.bf16.mxu0 %v2037
          %2743 = vmatpush1.bf16.msra.mxu0 %v2036
          %2744 = vmatprep.subr.bf16.mxu0 %v2045
          %2745 = vmatpush1.bf16.msra.mxu0 %v2044
          %2746 = vmatprep.subr.bf16.mxu0 %v2053
          %2747 = vmatpush1.bf16.msra.mxu0 %v2052
          %2748 = vmatprep.subr.bf16.mxu0 %v2061
          %2749 = vmatpush1.bf16.msra.mxu0 %v2060
          %2750 = vmatprep.subr.bf16.mxu0 %v2069
          %2751 = vmatpush1.bf16.msra.mxu0 %v2068
          %2752 = vmatprep.subr.bf16.mxu0 %v2077
          %2753 = vmatpush1.bf16.msra.mxu0 %v2076
          %2754 = vmatprep.subr.bf16.mxu0 %v2085
          %2755 = vmatpush1.bf16.msra.mxu0 %v2084
          %2756 = vmatprep.subr.bf16.mxu0 %v2093
          %2757 = vmatpush1.bf16.msra.mxu0 %v2092
          %2758 = vmatprep.subr.bf16.mxu0 %v2101
          %2759 = vmatpush1.bf16.msra.mxu0 %v2100
          %2760 = vmatprep.subr.bf16.mxu0 %v2109
          %2761 = vmatpush1.bf16.msra.mxu0 %v2108
          %2762 = vmatprep.subr.bf16.mxu0 %v2117
          %2763 = vmatpush1.bf16.msra.mxu0 %v2116
          %2764 = vmatprep.mubr.bf16.mxu0 %v897
          %2765 = vmatmul.mubr.bf16.gmra.mrb[0].mxu0 %v896
          %v2766 = vpop.f32.mrb[0].mxu0
          %v2767 = vadd.f32 %v1197, %v2766
          %v2768 = vpop.f32.mrb[0].mxu0
          %v2769 = vadd.f32 %v1201, %v2768
          %v2770 = vpop.f32.mrb[0].mxu0
          %v2771 = vadd.f32 %v1197, %v2770
          %v2772 = vpop.f32.mrb[0].mxu0
          %v2773 = vadd.f32 %v1201, %v2772
          %2774 = vmatprep.mubr.bf16.mxu0 %v901
          %2775 = vmatmul.mubr.bf16.gmra.mrb[0].mxu0 %v900
          %v2776 = vpop.f32.mrb[0].mxu0
          %v2777 = vadd.f32 %v1197, %v2776
          %v2778 = vpop.f32.mrb[0].mxu0
          %v2779 = vadd.f32 %v1201, %v2778
          %v2780 = vpop.f32.mrb[0].mxu0
          %v2781 = vadd.f32 %v1197, %v2780
          %v2782 = vpop.f32.mrb[0].mxu0
          %v2783 = vadd.f32 %v1201, %v2782
          %2784 = vmatprep.mubr.bf16.mxu0 %v905
          %2785 = vmatmul.mubr.bf16.gmra.mrb[0].mxu0 %v904
          %v2786 = vpop.f32.mrb[0].mxu0
          %v2787 = vadd.f32 %v1197, %v2786
          %v2788 = vpop.f32.mrb[0].mxu0
          %v2789 = vadd.f32 %v1201, %v2788
          %v2790 = vpop.f32.mrb[0].mxu0
          %v2791 = vadd.f32 %v1197, %v2790
          %v2792 = vpop.f32.mrb[0].mxu0
          %v2793 = vadd.f32 %v1201, %v2792
          %2794 = vmatprep.mubr.bf16.mxu0 %v909
          %2795 = vmatmul.mubr.bf16.gmra.mrb[0].mxu0 %v908
          %v2796 = vpop.f32.mrb[0].mxu0
          %v2797 = vadd.f32 %v1197, %v2796
          %v2798 = vpop.f32.mrb[0].mxu0
          %v2799 = vadd.f32 %v1201, %v2798
          %v2800 = vpop.f32.mrb[0].mxu0
          %v2801 = vadd.f32 %v1197, %v2800
          %v2802 = vpop.f32.mrb[0].mxu0
          %v2803 = vadd.f32 %v1201, %v2802
          %2804 = vmatprep.mubr.bf16.mxu0 %v913
          %2805 = vmatmul.mubr.bf16.gmra.mrb[0].mxu0 %v912
          %v2806 = vpop.f32.mrb[0].mxu0
          %v2807 = vadd.f32 %v1197, %v2806
          %v2808 = vpop.f32.mrb[0].mxu0
          %v2809 = vadd.f32 %v1201, %v2808
          %v2810 = vpop.f32.mrb[0].mxu0
          %v2811 = vadd.f32 %v1197, %v2810
          %v2812 = vpop.f32.mrb[0].mxu0
          %v2813 = vadd.f32 %v1201, %v2812
          %2814 = vmatprep.mubr.bf16.mxu0 %v917
          %2815 = vmatmul.mubr.bf16.gmra.mrb[0].mxu0 %v916
          %v2816 = vpop.f32.mrb[0].mxu0
          %v2817 = vadd.f32 %v1197, %v2816
          %v2818 = vpop.f32.mrb[0].mxu0
          %v2819 = vadd.f32 %v1201, %v2818
          %v2820 = vpop.f32.mrb[0].mxu0
          %v2821 = vadd.f32 %v1197, %v2820
          %v2822 = vpop.f32.mrb[0].mxu0
          %v2823 = vadd.f32 %v1201, %v2822
          %2824 = vmatprep.mubr.bf16.mxu0 %v921
          %2825 = vmatmul.mubr.bf16.gmra.mrb[0].mxu0 %v920
          %v2826 = vpop.f32.mrb[0].mxu0
          %v2827 = vadd.f32 %v1197, %v2826
          %v2828 = vpop.f32.mrb[0].mxu0
          %v2829 = vadd.f32 %v1201, %v2828
          %v2830 = vpop.f32.mrb[0].mxu0
          %v2831 = vadd.f32 %v1197, %v2830
          %v2832 = vpop.f32.mrb[0].mxu0
          %v2833 = vadd.f32 %v1201, %v2832
          %2834 = vmatprep.mubr.bf16.mxu0 %v925
          %2835 = vmatmul.mubr.bf16.gmra.mrb[0].mxu0 %v924
          %v2836 = vpop.f32.mrb[0].mxu0
          %v2837 = vadd.f32 %v1197, %v2836
          %v2838 = vpop.f32.mrb[0].mxu0
          %v2839 = vadd.f32 %v1201, %v2838
          %v2840 = vpop.f32.mrb[0].mxu0
          %v2841 = vadd.f32 %v1197, %v2840
          %v2842 = vpop.f32.mrb[0].mxu0
          %v2843 = vadd.f32 %v1201, %v2842
          %2844 = vdwg.mxu0
          %2845 = vmatprep.subr.bf16.mxu0 %v2125
          %2846 = vmatpush1.bf16.msra.mxu0 %v2124
          %2847 = vmatprep.subr.bf16.mxu0 %v2133
          %2848 = vmatpush1.bf16.msra.mxu0 %v2132
          %2849 = vmatprep.subr.bf16.mxu0 %v2141
          %2850 = vmatpush1.bf16.msra.mxu0 %v2140
          %2851 = vmatprep.subr.bf16.mxu0 %v2149
          %2852 = vmatpush1.bf16.msra.mxu0 %v2148
          %2853 = vmatprep.subr.bf16.mxu0 %v2157
          %2854 = vmatpush1.bf16.msra.mxu0 %v2156
          %2855 = vmatprep.subr.bf16.mxu0 %v2165
          %2856 = vmatpush1.bf16.msra.mxu0 %v2164
          %2857 = vmatprep.subr.bf16.mxu0 %v2173
          %2858 = vmatpush1.bf16.msra.mxu0 %v2172
          %2859 = vmatprep.subr.bf16.mxu0 %v2181
          %2860 = vmatpush1.bf16.msra.mxu0 %v2180
          %2861 = vmatprep.subr.bf16.mxu0 %v2189
          %2862 = vmatpush1.bf16.msra.mxu0 %v2188
          %2863 = vmatprep.subr.bf16.mxu0 %v2197
          %2864 = vmatpush1.bf16.msra.mxu0 %v2196
          %2865 = vmatprep.subr.bf16.mxu0 %v2205
          %2866 = vmatpush1.bf16.msra.mxu0 %v2204
          %2867 = vmatprep.subr.bf16.mxu0 %v2213
          %2868 = vmatpush1.bf16.msra.mxu0 %v2212
          %2869 = vmatprep.subr.bf16.mxu0 %v2221
          %2870 = vmatpush1.bf16.msra.mxu0 %v2220
          %2871 = vmatprep.subr.bf16.mxu0 %v2229
          %2872 = vmatpush1.bf16.msra.mxu0 %v2228
          %2873 = vmatprep.subr.bf16.mxu0 %v2237
          %2874 = vmatpush1.bf16.msra.mxu0 %v2236
          %2875 = vmatprep.subr.bf16.mxu0 %v2245
          %2876 = vmatpush1.bf16.msra.mxu0 %v2244
          %2877 = vmatprep.mubr.bf16.mxu0 %v899
          %2878 = vmatmul.mubr.bf16.gmra.mrb[0].mxu0 %v898
          %v2879 = vpop.f32.mrb[0].mxu0
          %v2880 = vadd.f32 %v2767, %v2879
          %v2881 = vpop.f32.mrb[0].mxu0
          %v2882 = vadd.f32 %v2769, %v2881
          %v2883 = vpop.f32.mrb[0].mxu0
          %v2884 = vadd.f32 %v2771, %v2883
          %v2885 = vpop.f32.mrb[0].mxu0
          %v2886 = vadd.f32 %v2773, %v2885
          %2887 = vmatprep.mubr.bf16.mxu0 %v903
          %2888 = vmatmul.mubr.bf16.gmra.mrb[0].mxu0 %v902
          %v2889 = vpop.f32.mrb[0].mxu0
          %v2890 = vadd.f32 %v2777, %v2889
          %v2891 = vpop.f32.mrb[0].mxu0
          %v2892 = vadd.f32 %v2779, %v2891
          %v2893 = vpop.f32.mrb[0].mxu0
          %v2894 = vadd.f32 %v2781, %v2893
          %v2895 = vpop.f32.mrb[0].mxu0
          %v2896 = vadd.f32 %v2783, %v2895
          %2897 = vmatprep.mubr.bf16.mxu0 %v907
          %2898 = vmatmul.mubr.bf16.gmra.mrb[0].mxu0 %v906
          %v2899 = vpop.f32.mrb[0].mxu0
          %v2900 = vadd.f32 %v2787, %v2899
          %v2901 = vpop.f32.mrb[0].mxu0
          %v2902 = vadd.f32 %v2789, %v2901
          %v2903 = vpop.f32.mrb[0].mxu0
          %v2904 = vadd.f32 %v2791, %v2903
          %v2905 = vpop.f32.mrb[0].mxu0
          %v2906 = vadd.f32 %v2793, %v2905
          %2907 = vmatprep.mubr.bf16.mxu0 %v911
          %2908 = vmatmul.mubr.bf16.gmra.mrb[0].mxu0 %v910
          %v2909 = vpop.f32.mrb[0].mxu0
          %v2910 = vadd.f32 %v2797, %v2909
          %v2911 = vpop.f32.mrb[0].mxu0
          %v2912 = vadd.f32 %v2799, %v2911
          %v2913 = vpop.f32.mrb[0].mxu0
          %v2914 = vadd.f32 %v2801, %v2913
          %v2915 = vpop.f32.mrb[0].mxu0
          %v2916 = vadd.f32 %v2803, %v2915
          %2917 = vmatprep.mubr.bf16.mxu0 %v915
          %2918 = vmatmul.mubr.bf16.gmra.mrb[0].mxu0 %v914
          %v2919 = vpop.f32.mrb[0].mxu0
          %v2920 = vadd.f32 %v2807, %v2919
          %v2921 = vpop.f32.mrb[0].mxu0
          %v2922 = vadd.f32 %v2809, %v2921
          %v2923 = vpop.f32.mrb[0].mxu0
          %v2924 = vadd.f32 %v2811, %v2923
          %v2925 = vpop.f32.mrb[0].mxu0
          %v2926 = vadd.f32 %v2813, %v2925
          %2927 = vmatprep.mubr.bf16.mxu0 %v919
          %2928 = vmatmul.mubr.bf16.gmra.mrb[0].mxu0 %v918
          %v2929 = vpop.f32.mrb[0].mxu0
          %v2930 = vadd.f32 %v2817, %v2929
          %v2931 = vpop.f32.mrb[0].mxu0
          %v2932 = vadd.f32 %v2819, %v2931
          %v2933 = vpop.f32.mrb[0].mxu0
          %v2934 = vadd.f32 %v2821, %v2933
          %v2935 = vpop.f32.mrb[0].mxu0
          %v2936 = vadd.f32 %v2823, %v2935
          %2937 = vmatprep.mubr.bf16.mxu0 %v923
          %2938 = vmatmul.mubr.bf16.gmra.mrb[0].mxu0 %v922
          %v2939 = vpop.f32.mrb[0].mxu0
          %v2940 = vadd.f32 %v2827, %v2939
          %v2941 = vpop.f32.mrb[0].mxu0
          %v2942 = vadd.f32 %v2829, %v2941
          %v2943 = vpop.f32.mrb[0].mxu0
          %v2944 = vadd.f32 %v2831, %v2943
          %v2945 = vpop.f32.mrb[0].mxu0
          %v2946 = vadd.f32 %v2833, %v2945
          %2947 = vmatprep.mubr.bf16.mxu0 %v927
          %2948 = vmatmul.mubr.bf16.gmra.mrb[0].mxu0 %v926
          %v2949 = vpop.f32.mrb[0].mxu0
          %v2950 = vadd.f32 %v2837, %v2949
          %v2951 = vpop.f32.mrb[0].mxu0
          %v2952 = vadd.f32 %v2839, %v2951
          %v2953 = vpop.f32.mrb[0].mxu0
          %v2954 = vadd.f32 %v2841, %v2953
          %v2955 = vpop.f32.mrb[0].mxu0
          %v2956 = vadd.f32 %v2843, %v2955
          %2957 = vdwg.mxu0
          %2958 = vmatprep.subr.bf16.mxu0 %v1999
          %2959 = vmatpush1.bf16.msra.mxu0 %v1998
          %2960 = vmatprep.subr.bf16.mxu0 %v2007
          %2961 = vmatpush1.bf16.msra.mxu0 %v2006
          %2962 = vmatprep.subr.bf16.mxu0 %v2015
          %2963 = vmatpush1.bf16.msra.mxu0 %v2014
          %2964 = vmatprep.subr.bf16.mxu0 %v2023
          %2965 = vmatpush1.bf16.msra.mxu0 %v2022
          %2966 = vmatprep.subr.bf16.mxu0 %v2031
          %2967 = vmatpush1.bf16.msra.mxu0 %v2030
          %2968 = vmatprep.subr.bf16.mxu0 %v2039
          %2969 = vmatpush1.bf16.msra.mxu0 %v2038
          %2970 = vmatprep.subr.bf16.mxu0 %v2047
          %2971 = vmatpush1.bf16.msra.mxu0 %v2046
          %2972 = vmatprep.subr.bf16.mxu0 %v2055
          %2973 = vmatpush1.bf16.msra.mxu0 %v2054
          %2974 = vmatprep.subr.bf16.mxu0 %v2063
          %2975 = vmatpush1.bf16.msra.mxu0 %v2062
          %2976 = vmatprep.subr.bf16.mxu0 %v2071
          %2977 = vmatpush1.bf16.msra.mxu0 %v2070
          %2978 = vmatprep.subr.bf16.mxu0 %v2079
          %2979 = vmatpush1.bf16.msra.mxu0 %v2078
          %2980 = vmatprep.subr.bf16.mxu0 %v2087
          %2981 = vmatpush1.bf16.msra.mxu0 %v2086
          %2982 = vmatprep.subr.bf16.mxu0 %v2095
          %2983 = vmatpush1.bf16.msra.mxu0 %v2094
          %2984 = vmatprep.subr.bf16.mxu0 %v2103
          %2985 = vmatpush1.bf16.msra.mxu0 %v2102
          %2986 = vmatprep.subr.bf16.mxu0 %v2111
          %2987 = vmatpush1.bf16.msra.mxu0 %v2110
          %2988 = vmatprep.subr.bf16.mxu0 %v2119
          %2989 = vmatpush1.bf16.msra.mxu0 %v2118
          %2990 = vmatprep.mubr.bf16.mxu0 %v897
          %2991 = vmatmul.mubr.bf16.gmra.mrb[0].mxu0 %v896
          %v2992 = vpop.f32.mrb[0].mxu0
          %v2993 = vadd.f32 %v1205, %v2992
          %v2994 = vpop.f32.mrb[0].mxu0
          %v2995 = vadd.f32 %v1209, %v2994
          %v2996 = vpop.f32.mrb[0].mxu0
          %v2997 = vadd.f32 %v1205, %v2996
          %v2998 = vpop.f32.mrb[0].mxu0
          %v2999 = vadd.f32 %v1209, %v2998
          %3000 = vmatprep.mubr.bf16.mxu0 %v901
          %3001 = vmatmul.mubr.bf16.gmra.mrb[0].mxu0 %v900
          %v3002 = vpop.f32.mrb[0].mxu0
          %v3003 = vadd.f32 %v1205, %v3002
          %v3004 = vpop.f32.mrb[0].mxu0
          %v3005 = vadd.f32 %v1209, %v3004
          %v3006 = vpop.f32.mrb[0].mxu0
          %v3007 = vadd.f32 %v1205, %v3006
          %v3008 = vpop.f32.mrb[0].mxu0
          %v3009 = vadd.f32 %v1209, %v3008
          %3010 = vmatprep.mubr.bf16.mxu0 %v905
          %3011 = vmatmul.mubr.bf16.gmra.mrb[0].mxu0 %v904
          %v3012 = vpop.f32.mrb[0].mxu0
          %v3013 = vadd.f32 %v1205, %v3012
          %v3014 = vpop.f32.mrb[0].mxu0
          %v3015 = vadd.f32 %v1209, %v3014
          %v3016 = vpop.f32.mrb[0].mxu0
          %v3017 = vadd.f32 %v1205, %v3016
          %v3018 = vpop.f32.mrb[0].mxu0
          %v3019 = vadd.f32 %v1209, %v3018
          %3020 = vmatprep.mubr.bf16.mxu0 %v909
          %3021 = vmatmul.mubr.bf16.gmra.mrb[0].mxu0 %v908
          %v3022 = vpop.f32.mrb[0].mxu0
          %v3023 = vadd.f32 %v1205, %v3022
          %v3024 = vpop.f32.mrb[0].mxu0
          %v3025 = vadd.f32 %v1209, %v3024
          %v3026 = vpop.f32.mrb[0].mxu0
          %v3027 = vadd.f32 %v1205, %v3026
          %v3028 = vpop.f32.mrb[0].mxu0
          %v3029 = vadd.f32 %v1209, %v3028
          %3030 = vmatprep.mubr.bf16.mxu0 %v913
          %3031 = vmatmul.mubr.bf16.gmra.mrb[0].mxu0 %v912
          %v3032 = vpop.f32.mrb[0].mxu0
          %v3033 = vadd.f32 %v1205, %v3032
          %v3034 = vpop.f32.mrb[0].mxu0
          %v3035 = vadd.f32 %v1209, %v3034
          %v3036 = vpop.f32.mrb[0].mxu0
          %v3037 = vadd.f32 %v1205, %v3036
          %v3038 = vpop.f32.mrb[0].mxu0
          %v3039 = vadd.f32 %v1209, %v3038
          %3040 = vmatprep.mubr.bf16.mxu0 %v917
          %3041 = vmatmul.mubr.bf16.gmra.mrb[0].mxu0 %v916
          %v3042 = vpop.f32.mrb[0].mxu0
          %v3043 = vadd.f32 %v1205, %v3042
          %v3044 = vpop.f32.mrb[0].mxu0
          %v3045 = vadd.f32 %v1209, %v3044
          %v3046 = vpop.f32.mrb[0].mxu0
          %v3047 = vadd.f32 %v1205, %v3046
          %v3048 = vpop.f32.mrb[0].mxu0
          %v3049 = vadd.f32 %v1209, %v3048
          %3050 = vmatprep.mubr.bf16.mxu0 %v921
          %3051 = vmatmul.mubr.bf16.gmra.mrb[0].mxu0 %v920
          %v3052 = vpop.f32.mrb[0].mxu0
          %v3053 = vadd.f32 %v1205, %v3052
          %v3054 = vpop.f32.mrb[0].mxu0
          %v3055 = vadd.f32 %v1209, %v3054
          %v3056 = vpop.f32.mrb[0].mxu0
          %v3057 = vadd.f32 %v1205, %v3056
          %v3058 = vpop.f32.mrb[0].mxu0
          %v3059 = vadd.f32 %v1209, %v3058
          %3060 = vmatprep.mubr.bf16.mxu0 %v925
          %3061 = vmatmul.mubr.bf16.gmra.mrb[0].mxu0 %v924
          %v3062 = vpop.f32.mrb[0].mxu0
          %v3063 = vadd.f32 %v1205, %v3062
          %v3064 = vpop.f32.mrb[0].mxu0
          %v3065 = vadd.f32 %v1209, %v3064
          %v3066 = vpop.f32.mrb[0].mxu0
          %v3067 = vadd.f32 %v1205, %v3066
          %v3068 = vpop.f32.mrb[0].mxu0
          %v3069 = vadd.f32 %v1209, %v3068
          %3070 = vdwg.mxu0
          %3071 = vmatprep.subr.bf16.mxu0 %v2127
          %3072 = vmatpush1.bf16.msra.mxu0 %v2126
          %3073 = vmatprep.subr.bf16.mxu0 %v2135
          %3074 = vmatpush1.bf16.msra.mxu0 %v2134
          %3075 = vmatprep.subr.bf16.mxu0 %v2143
          %3076 = vmatpush1.bf16.msra.mxu0 %v2142
          %3077 = vmatprep.subr.bf16.mxu0 %v2151
          %3078 = vmatpush1.bf16.msra.mxu0 %v2150
          %3079 = vmatprep.subr.bf16.mxu0 %v2159
          %3080 = vmatpush1.bf16.msra.mxu0 %v2158
          %3081 = vmatprep.subr.bf16.mxu0 %v2167
          %3082 = vmatpush1.bf16.msra.mxu0 %v2166
          %3083 = vmatprep.subr.bf16.mxu0 %v2175
          %3084 = vmatpush1.bf16.msra.mxu0 %v2174
          %3085 = vmatprep.subr.bf16.mxu0 %v2183
          %3086 = vmatpush1.bf16.msra.mxu0 %v2182
          %3087 = vmatprep.subr.bf16.mxu0 %v2191
          %3088 = vmatpush1.bf16.msra.mxu0 %v2190
          %3089 = vmatprep.subr.bf16.mxu0 %v2199
          %3090 = vmatpush1.bf16.msra.mxu0 %v2198
          %3091 = vmatprep.subr.bf16.mxu0 %v2207
          %3092 = vmatpush1.bf16.msra.mxu0 %v2206
          %3093 = vmatprep.subr.bf16.mxu0 %v2215
          %3094 = vmatpush1.bf16.msra.mxu0 %v2214
          %3095 = vmatprep.subr.bf16.mxu0 %v2223
          %3096 = vmatpush1.bf16.msra.mxu0 %v2222
          %3097 = vmatprep.subr.bf16.mxu0 %v2231
          %3098 = vmatpush1.bf16.msra.mxu0 %v2230
          %3099 = vmatprep.subr.bf16.mxu0 %v2239
          %3100 = vmatpush1.bf16.msra.mxu0 %v2238
          %3101 = vmatprep.subr.bf16.mxu0 %v2247
          %3102 = vmatpush1.bf16.msra.mxu0 %v2246
          %3103 = vmatprep.mubr.bf16.mxu0 %v899
          %3104 = vmatmul.mubr.bf16.gmra.mrb[0].mxu0 %v898
          %v3105 = vpop.f32.mrb[0].mxu0
          %v3106 = vadd.f32 %v2993, %v3105
          %v3107 = vpop.f32.mrb[0].mxu0
          %v3108 = vadd.f32 %v2995, %v3107
          %v3109 = vpop.f32.mrb[0].mxu0
          %v3110 = vadd.f32 %v2997, %v3109
          %v3111 = vpop.f32.mrb[0].mxu0
          %v3112 = vadd.f32 %v2999, %v3111
          %3113 = vmatprep.mubr.bf16.mxu0 %v903
          %3114 = vmatmul.mubr.bf16.gmra.mrb[0].mxu0 %v902
          %v3115 = vpop.f32.mrb[0].mxu0
          %v3116 = vadd.f32 %v3003, %v3115
          %v3117 = vpop.f32.mrb[0].mxu0
          %v3118 = vadd.f32 %v3005, %v3117
          %v3119 = vpop.f32.mrb[0].mxu0
          %v3120 = vadd.f32 %v3007, %v3119
          %v3121 = vpop.f32.mrb[0].mxu0
          %v3122 = vadd.f32 %v3009, %v3121
          %3123 = vmatprep.mubr.bf16.mxu0 %v907
          %3124 = vmatmul.mubr.bf16.gmra.mrb[0].mxu0 %v906
          %v3125 = vpop.f32.mrb[0].mxu0
          %v3126 = vadd.f32 %v3013, %v3125
          %v3127 = vpop.f32.mrb[0].mxu0
          %v3128 = vadd.f32 %v3015, %v3127
          %v3129 = vpop.f32.mrb[0].mxu0
          %v3130 = vadd.f32 %v3017, %v3129
          %v3131 = vpop.f32.mrb[0].mxu0
          %v3132 = vadd.f32 %v3019, %v3131
          %3133 = vmatprep.mubr.bf16.mxu0 %v911
          %3134 = vmatmul.mubr.bf16.gmra.mrb[0].mxu0 %v910
          %v3135 = vpop.f32.mrb[0].mxu0
          %v3136 = vadd.f32 %v3023, %v3135
          %v3137 = vpop.f32.mrb[0].mxu0
          %v3138 = vadd.f32 %v3025, %v3137
          %v3139 = vpop.f32.mrb[0].mxu0
          %v3140 = vadd.f32 %v3027, %v3139
          %v3141 = vpop.f32.mrb[0].mxu0
          %v3142 = vadd.f32 %v3029, %v3141
          %3143 = vmatprep.mubr.bf16.mxu0 %v915
          %3144 = vmatmul.mubr.bf16.gmra.mrb[0].mxu0 %v914
          %v3145 = vpop.f32.mrb[0].mxu0
          %v3146 = vadd.f32 %v3033, %v3145
          %v3147 = vpop.f32.mrb[0].mxu0
          %v3148 = vadd.f32 %v3035, %v3147
          %v3149 = vpop.f32.mrb[0].mxu0
          %v3150 = vadd.f32 %v3037, %v3149
          %v3151 = vpop.f32.mrb[0].mxu0
          %v3152 = vadd.f32 %v3039, %v3151
          %3153 = vmatprep.mubr.bf16.mxu0 %v919
          %3154 = vmatmul.mubr.bf16.gmra.mrb[0].mxu0 %v918
          %v3155 = vpop.f32.mrb[0].mxu0
          %v3156 = vadd.f32 %v3043, %v3155
          %v3157 = vpop.f32.mrb[0].mxu0
          %v3158 = vadd.f32 %v3045, %v3157
          %v3159 = vpop.f32.mrb[0].mxu0
          %v3160 = vadd.f32 %v3047, %v3159
          %v3161 = vpop.f32.mrb[0].mxu0
          %v3162 = vadd.f32 %v3049, %v3161
          %3163 = vmatprep.mubr.bf16.mxu0 %v923
          %3164 = vmatmul.mubr.bf16.gmra.mrb[0].mxu0 %v922
          %v3165 = vpop.f32.mrb[0].mxu0
          %v3166 = vadd.f32 %v3053, %v3165
          %v3167 = vpop.f32.mrb[0].mxu0
          %v3168 = vadd.f32 %v3055, %v3167
          %v3169 = vpop.f32.mrb[0].mxu0
          %v3170 = vadd.f32 %v3057, %v3169
          %v3171 = vpop.f32.mrb[0].mxu0
          %v3172 = vadd.f32 %v3059, %v3171
          %3173 = vmatprep.mubr.bf16.mxu0 %v927
          %3174 = vmatmul.mubr.bf16.gmra.mrb[0].mxu0 %v926
          %v3175 = vpop.f32.mrb[0].mxu0
          %v3176 = vadd.f32 %v3063, %v3175
          %v3177 = vpop.f32.mrb[0].mxu0
          %v3178 = vadd.f32 %v3065, %v3177
          %v3179 = vpop.f32.mrb[0].mxu0
          %v3180 = vadd.f32 %v3067, %v3179
          %v3181 = vpop.f32.mrb[0].mxu0
          %v3182 = vadd.f32 %v3069, %v3181
          %3183 = vdwg.mxu0
          %3184 = vmatprep.subr.bf16.mxu0 %v2001
          %3185 = vmatpush1.bf16.msra.mxu0 %v2000
          %3186 = vmatprep.subr.bf16.mxu0 %v2009
          %3187 = vmatpush1.bf16.msra.mxu0 %v2008
          %3188 = vmatprep.subr.bf16.mxu0 %v2017
          %3189 = vmatpush1.bf16.msra.mxu0 %v2016
          %3190 = vmatprep.subr.bf16.mxu0 %v2025
          %3191 = vmatpush1.bf16.msra.mxu0 %v2024
          %3192 = vmatprep.subr.bf16.mxu0 %v2033
          %3193 = vmatpush1.bf16.msra.mxu0 %v2032
          %3194 = vmatprep.subr.bf16.mxu0 %v2041
          %3195 = vmatpush1.bf16.msra.mxu0 %v2040
          %3196 = vmatprep.subr.bf16.mxu0 %v2049
          %3197 = vmatpush1.bf16.msra.mxu0 %v2048
          %3198 = vmatprep.subr.bf16.mxu0 %v2057
          %3199 = vmatpush1.bf16.msra.mxu0 %v2056
          %3200 = vmatprep.subr.bf16.mxu0 %v2065
          %3201 = vmatpush1.bf16.msra.mxu0 %v2064
          %3202 = vmatprep.subr.bf16.mxu0 %v2073
          %3203 = vmatpush1.bf16.msra.mxu0 %v2072
          %3204 = vmatprep.subr.bf16.mxu0 %v2081
          %3205 = vmatpush1.bf16.msra.mxu0 %v2080
          %3206 = vmatprep.subr.bf16.mxu0 %v2089
          %3207 = vmatpush1.bf16.msra.mxu0 %v2088
          %3208 = vmatprep.subr.bf16.mxu0 %v2097
          %3209 = vmatpush1.bf16.msra.mxu0 %v2096
          %3210 = vmatprep.subr.bf16.mxu0 %v2105
          %3211 = vmatpush1.bf16.msra.mxu0 %v2104
          %3212 = vmatprep.subr.bf16.mxu0 %v2113
          %3213 = vmatpush1.bf16.msra.mxu0 %v2112
          %3214 = vmatprep.subr.bf16.mxu0 %v2121
          %3215 = vmatpush1.bf16.msra.mxu0 %v2120
          %3216 = vmatprep.mubr.bf16.mxu0 %v897
          %3217 = vmatmul.mubr.bf16.gmra.mrb[0].mxu0 %v896
          %v3218 = vpop.f32.mrb[0].mxu0
          %v3219 = vadd.f32 %v1213, %v3218
          %v3220 = vpop.f32.mrb[0].mxu0
          %v3221 = vadd.f32 %v1217, %v3220
          %v3222 = vpop.f32.mrb[0].mxu0
          %v3223 = vadd.f32 %v1213, %v3222
          %v3224 = vpop.f32.mrb[0].mxu0
          %v3225 = vadd.f32 %v1217, %v3224
          %3226 = vmatprep.mubr.bf16.mxu0 %v901
          %3227 = vmatmul.mubr.bf16.gmra.mrb[0].mxu0 %v900
          %v3228 = vpop.f32.mrb[0].mxu0
          %v3229 = vadd.f32 %v1213, %v3228
          %v3230 = vpop.f32.mrb[0].mxu0
          %v3231 = vadd.f32 %v1217, %v3230
          %v3232 = vpop.f32.mrb[0].mxu0
          %v3233 = vadd.f32 %v1213, %v3232
          %v3234 = vpop.f32.mrb[0].mxu0
          %v3235 = vadd.f32 %v1217, %v3234
          %3236 = vmatprep.mubr.bf16.mxu0 %v905
          %3237 = vmatmul.mubr.bf16.gmra.mrb[0].mxu0 %v904
          %v3238 = vpop.f32.mrb[0].mxu0
          %v3239 = vadd.f32 %v1213, %v3238
          %v3240 = vpop.f32.mrb[0].mxu0
          %v3241 = vadd.f32 %v1217, %v3240
          %v3242 = vpop.f32.mrb[0].mxu0
          %v3243 = vadd.f32 %v1213, %v3242
          %v3244 = vpop.f32.mrb[0].mxu0
          %v3245 = vadd.f32 %v1217, %v3244
          %3246 = vmatprep.mubr.bf16.mxu0 %v909
          %3247 = vmatmul.mubr.bf16.gmra.mrb[0].mxu0 %v908
          %v3248 = vpop.f32.mrb[0].mxu0
          %v3249 = vadd.f32 %v1213, %v3248
          %v3250 = vpop.f32.mrb[0].mxu0
          %v3251 = vadd.f32 %v1217, %v3250
          %v3252 = vpop.f32.mrb[0].mxu0
          %v3253 = vadd.f32 %v1213, %v3252
          %v3254 = vpop.f32.mrb[0].mxu0
          %v3255 = vadd.f32 %v1217, %v3254
          %3256 = vmatprep.mubr.bf16.mxu0 %v913
          %3257 = vmatmul.mubr.bf16.gmra.mrb[0].mxu0 %v912
          %v3258 = vpop.f32.mrb[0].mxu0
          %v3259 = vadd.f32 %v1213, %v3258
          %v3260 = vpop.f32.mrb[0].mxu0
          %v3261 = vadd.f32 %v1217, %v3260
          %v3262 = vpop.f32.mrb[0].mxu0
          %v3263 = vadd.f32 %v1213, %v3262
          %v3264 = vpop.f32.mrb[0].mxu0
          %v3265 = vadd.f32 %v1217, %v3264
          %3266 = vmatprep.mubr.bf16.mxu0 %v917
          %3267 = vmatmul.mubr.bf16.gmra.mrb[0].mxu0 %v916
          %v3268 = vpop.f32.mrb[0].mxu0
          %v3269 = vadd.f32 %v1213, %v3268
          %v3270 = vpop.f32.mrb[0].mxu0
          %v3271 = vadd.f32 %v1217, %v3270
          %v3272 = vpop.f32.mrb[0].mxu0
          %v3273 = vadd.f32 %v1213, %v3272
          %v3274 = vpop.f32.mrb[0].mxu0
          %v3275 = vadd.f32 %v1217, %v3274
          %3276 = vmatprep.mubr.bf16.mxu0 %v921
          %3277 = vmatmul.mubr.bf16.gmra.mrb[0].mxu0 %v920
          %v3278 = vpop.f32.mrb[0].mxu0
          %v3279 = vadd.f32 %v1213, %v3278
          %v3280 = vpop.f32.mrb[0].mxu0
          %v3281 = vadd.f32 %v1217, %v3280
          %v3282 = vpop.f32.mrb[0].mxu0
          %v3283 = vadd.f32 %v1213, %v3282
          %v3284 = vpop.f32.mrb[0].mxu0
          %v3285 = vadd.f32 %v1217, %v3284
          %3286 = vmatprep.mubr.bf16.mxu0 %v925
          %3287 = vmatmul.mubr.bf16.gmra.mrb[0].mxu0 %v924
          %v3288 = vpop.f32.mrb[0].mxu0
          %v3289 = vadd.f32 %v1213, %v3288
          %v3290 = vpop.f32.mrb[0].mxu0
          %v3291 = vadd.f32 %v1217, %v3290
          %v3292 = vpop.f32.mrb[0].mxu0
          %v3293 = vadd.f32 %v1213, %v3292
          %v3294 = vpop.f32.mrb[0].mxu0
          %v3295 = vadd.f32 %v1217, %v3294
          %3296 = vdwg.mxu0
          %3297 = vmatprep.subr.bf16.mxu0 %v2129
          %3298 = vmatpush1.bf16.msra.mxu0 %v2128
          %3299 = vmatprep.subr.bf16.mxu0 %v2137
          %3300 = vmatpush1.bf16.msra.mxu0 %v2136
          %3301 = vmatprep.subr.bf16.mxu0 %v2145
          %3302 = vmatpush1.bf16.msra.mxu0 %v2144
          %3303 = vmatprep.subr.bf16.mxu0 %v2153
          %3304 = vmatpush1.bf16.msra.mxu0 %v2152
          %3305 = vmatprep.subr.bf16.mxu0 %v2161
          %3306 = vmatpush1.bf16.msra.mxu0 %v2160
          %3307 = vmatprep.subr.bf16.mxu0 %v2169
          %3308 = vmatpush1.bf16.msra.mxu0 %v2168
          %3309 = vmatprep.subr.bf16.mxu0 %v2177
          %3310 = vmatpush1.bf16.msra.mxu0 %v2176
          %3311 = vmatprep.subr.bf16.mxu0 %v2185
          %3312 = vmatpush1.bf16.msra.mxu0 %v2184
          %3313 = vmatprep.subr.bf16.mxu0 %v2193
          %3314 = vmatpush1.bf16.msra.mxu0 %v2192
          %3315 = vmatprep.subr.bf16.mxu0 %v2201
          %3316 = vmatpush1.bf16.msra.mxu0 %v2200
          %3317 = vmatprep.subr.bf16.mxu0 %v2209
          %3318 = vmatpush1.bf16.msra.mxu0 %v2208
          %3319 = vmatprep.subr.bf16.mxu0 %v2217
          %3320 = vmatpush1.bf16.msra.mxu0 %v2216
          %3321 = vmatprep.subr.bf16.mxu0 %v2225
          %3322 = vmatpush1.bf16.msra.mxu0 %v2224
          %3323 = vmatprep.subr.bf16.mxu0 %v2233
          %3324 = vmatpush1.bf16.msra.mxu0 %v2232
          %3325 = vmatprep.subr.bf16.mxu0 %v2241
          %3326 = vmatpush1.bf16.msra.mxu0 %v2240
          %3327 = vmatprep.subr.bf16.mxu0 %v2249
          %3328 = vmatpush1.bf16.msra.mxu0 %v2248
          %3329 = vmatprep.mubr.bf16.mxu0 %v899
          %3330 = vmatmul.mubr.bf16.gmra.mrb[0].mxu0 %v898
          %v3331 = vpop.f32.mrb[0].mxu0
          %v3332 = vadd.f32 %v3219, %v3331
          %v3333 = vpop.f32.mrb[0].mxu0
          %v3334 = vadd.f32 %v3221, %v3333
          %v3335 = vpop.f32.mrb[0].mxu0
          %v3336 = vadd.f32 %v3223, %v3335
          %v3337 = vpop.f32.mrb[0].mxu0
          %v3338 = vadd.f32 %v3225, %v3337
          %3339 = vmatprep.mubr.bf16.mxu0 %v903
          %3340 = vmatmul.mubr.bf16.gmra.mrb[0].mxu0 %v902
          %v3341 = vpop.f32.mrb[0].mxu0
          %v3342 = vadd.f32 %v3229, %v3341
          %v3343 = vpop.f32.mrb[0].mxu0
          %v3344 = vadd.f32 %v3231, %v3343
          %v3345 = vpop.f32.mrb[0].mxu0
          %v3346 = vadd.f32 %v3233, %v3345
          %v3347 = vpop.f32.mrb[0].mxu0
          %v3348 = vadd.f32 %v3235, %v3347
          %3349 = vmatprep.mubr.bf16.mxu0 %v907
          %3350 = vmatmul.mubr.bf16.gmra.mrb[0].mxu0 %v906
          %v3351 = vpop.f32.mrb[0].mxu0
          %v3352 = vadd.f32 %v3239, %v3351
          %v3353 = vpop.f32.mrb[0].mxu0
          %v3354 = vadd.f32 %v3241, %v3353
          %v3355 = vpop.f32.mrb[0].mxu0
          %v3356 = vadd.f32 %v3243, %v3355
          %v3357 = vpop.f32.mrb[0].mxu0
          %v3358 = vadd.f32 %v3245, %v3357
          %3359 = vmatprep.mubr.bf16.mxu0 %v911
          %3360 = vmatmul.mubr.bf16.gmra.mrb[0].mxu0 %v910
          %v3361 = vpop.f32.mrb[0].mxu0
          %v3362 = vadd.f32 %v3249, %v3361
          %v3363 = vpop.f32.mrb[0].mxu0
          %v3364 = vadd.f32 %v3251, %v3363
          %v3365 = vpop.f32.mrb[0].mxu0
          %v3366 = vadd.f32 %v3253, %v3365
          %v3367 = vpop.f32.mrb[0].mxu0
          %v3368 = vadd.f32 %v3255, %v3367
          %3369 = vmatprep.mubr.bf16.mxu0 %v915
          %3370 = vmatmul.mubr.bf16.gmra.mrb[0].mxu0 %v914
          %v3371 = vpop.f32.mrb[0].mxu0
          %v3372 = vadd.f32 %v3259, %v3371
          %v3373 = vpop.f32.mrb[0].mxu0
          %v3374 = vadd.f32 %v3261, %v3373
          %v3375 = vpop.f32.mrb[0].mxu0
          %v3376 = vadd.f32 %v3263, %v3375
          %v3377 = vpop.f32.mrb[0].mxu0
          %v3378 = vadd.f32 %v3265, %v3377
          %3379 = vmatprep.mubr.bf16.mxu0 %v919
          %3380 = vmatmul.mubr.bf16.gmra.mrb[0].mxu0 %v918
          %v3381 = vpop.f32.mrb[0].mxu0
          %v3382 = vadd.f32 %v3269, %v3381
          %v3383 = vpop.f32.mrb[0].mxu0
          %v3384 = vadd.f32 %v3271, %v3383
          %v3385 = vpop.f32.mrb[0].mxu0
          %v3386 = vadd.f32 %v3273, %v3385
          %v3387 = vpop.f32.mrb[0].mxu0
          %v3388 = vadd.f32 %v3275, %v3387
          %3389 = vmatprep.mubr.bf16.mxu0 %v923
          %3390 = vmatmul.mubr.bf16.gmra.mrb[0].mxu0 %v922
          %v3391 = vpop.f32.mrb[0].mxu0
          %v3392 = vadd.f32 %v3279, %v3391
          %v3393 = vpop.f32.mrb[0].mxu0
          %v3394 = vadd.f32 %v3281, %v3393
          %v3395 = vpop.f32.mrb[0].mxu0
          %v3396 = vadd.f32 %v3283, %v3395
          %v3397 = vpop.f32.mrb[0].mxu0
          %v3398 = vadd.f32 %v3285, %v3397
          %3399 = vmatprep.mubr.bf16.mxu0 %v927
          %3400 = vmatmul.mubr.bf16.gmra.mrb[0].mxu0 %v926
          %v3401 = vpop.f32.mrb[0].mxu0
          %v3402 = vadd.f32 %v3289, %v3401
          %v3403 = vpop.f32.mrb[0].mxu0
          %v3404 = vadd.f32 %v3291, %v3403
          %v3405 = vpop.f32.mrb[0].mxu0
          %v3406 = vadd.f32 %v3293, %v3405
          %v3407 = vpop.f32.mrb[0].mxu0
          %v3408 = vadd.f32 %v3295, %v3407
          %3409 = vdwg.mxu0
          %v3410 = vmax.f32 %v2654, 0.0
          %v3411 = vmax.f32 %v2656, 0.0
          %v3412 = vmax.f32 %v2880, 0.0
          %v3413 = vmax.f32 %v2882, 0.0
          %v3414 = vmax.f32 %v3106, 0.0
          %v3415 = vmax.f32 %v3108, 0.0
          %v3416 = vmax.f32 %v3332, 0.0
          %v3417 = vmax.f32 %v3334, 0.0
          %v3418 = vmax.f32 %v2658, 0.0
          %v3419 = vmax.f32 %v2660, 0.0
          %v3420 = vmax.f32 %v2884, 0.0
          %v3421 = vmax.f32 %v2886, 0.0
          %v3422 = vmax.f32 %v3110, 0.0
          %v3423 = vmax.f32 %v3112, 0.0
          %v3424 = vmax.f32 %v3336, 0.0
          %v3425 = vmax.f32 %v3338, 0.0
          %v3426 = vmax.f32 %v2664, 0.0
          %v3427 = vmax.f32 %v2666, 0.0
          %v3428 = vmax.f32 %v2890, 0.0
          %v3429 = vmax.f32 %v2892, 0.0
          %v3430 = vmax.f32 %v3116, 0.0
          %v3431 = vmax.f32 %v3118, 0.0
          %v3432 = vmax.f32 %v3342, 0.0
          %v3433 = vmax.f32 %v3344, 0.0
          %v3434 = vmax.f32 %v2668, 0.0
          %v3435 = vmax.f32 %v2670, 0.0
          %v3436 = vmax.f32 %v2894, 0.0
          %v3437 = vmax.f32 %v2896, 0.0
          %v3438 = vmax.f32 %v3120, 0.0
          %v3439 = vmax.f32 %v3122, 0.0
          %v3440 = vmax.f32 %v3346, 0.0
          %v3441 = vmax.f32 %v3348, 0.0
          %v3442 = vmax.f32 %v2674, 0.0
          %v3443 = vmax.f32 %v2676, 0.0
          %v3444 = vmax.f32 %v2900, 0.0
          %v3445 = vmax.f32 %v2902, 0.0
          %v3446 = vmax.f32 %v3126, 0.0
          %v3447 = vmax.f32 %v3128, 0.0
          %v3448 = vmax.f32 %v3352, 0.0
          %v3449 = vmax.f32 %v3354, 0.0
          %v3450 = vmax.f32 %v2678, 0.0
          %v3451 = vmax.f32 %v2680, 0.0
          %v3452 = vmax.f32 %v2904, 0.0
          %v3453 = vmax.f32 %v2906, 0.0
          %v3454 = vmax.f32 %v3130, 0.0
          %v3455 = vmax.f32 %v3132, 0.0
          %v3456 = vmax.f32 %v3356, 0.0
          %v3457 = vmax.f32 %v3358, 0.0
          %v3458 = vmax.f32 %v2684, 0.0
          %v3459 = vmax.f32 %v2686, 0.0
          %v3460 = vmax.f32 %v2910, 0.0
          %v3461 = vmax.f32 %v2912, 0.0
          %v3462 = vmax.f32 %v3136, 0.0
          %v3463 = vmax.f32 %v3138, 0.0
          %v3464 = vmax.f32 %v3362, 0.0
          %v3465 = vmax.f32 %v3364, 0.0
          %v3466 = vmax.f32 %v2688, 0.0
          %v3467 = vmax.f32 %v2690, 0.0
          %v3468 = vmax.f32 %v2914, 0.0
          %v3469 = vmax.f32 %v2916, 0.0
          %v3470 = vmax.f32 %v3140, 0.0
          %v3471 = vmax.f32 %v3142, 0.0
          %v3472 = vmax.f32 %v3366, 0.0
          %v3473 = vmax.f32 %v3368, 0.0
          %v3474 = vmax.f32 %v2694, 0.0
          %v3475 = vmax.f32 %v2696, 0.0
          %v3476 = vmax.f32 %v2920, 0.0
          %v3477 = vmax.f32 %v2922, 0.0
          %v3478 = vmax.f32 %v3146, 0.0
          %v3479 = vmax.f32 %v3148, 0.0
          %v3480 = vmax.f32 %v3372, 0.0
          %v3481 = vmax.f32 %v3374, 0.0
          %v3482 = vmax.f32 %v2698, 0.0
          %v3483 = vmax.f32 %v2700, 0.0
          %v3484 = vmax.f32 %v2924, 0.0
          %v3485 = vmax.f32 %v2926, 0.0
          %v3486 = vmax.f32 %v3150, 0.0
          %v3487 = vmax.f32 %v3152, 0.0
          %v3488 = vmax.f32 %v3376, 0.0
          %v3489 = vmax.f32 %v3378, 0.0
          %v3490 = vmax.f32 %v2704, 0.0
          %v3491 = vmax.f32 %v2706, 0.0
          %v3492 = vmax.f32 %v2930, 0.0
          %v3493 = vmax.f32 %v2932, 0.0
          %v3494 = vmax.f32 %v3156, 0.0
          %v3495 = vmax.f32 %v3158, 0.0
          %v3496 = vmax.f32 %v3382, 0.0
          %v3497 = vmax.f32 %v3384, 0.0
          %v3498 = vmax.f32 %v2708, 0.0
          %v3499 = vmax.f32 %v2710, 0.0
          %v3500 = vmax.f32 %v2934, 0.0
          %v3501 = vmax.f32 %v2936, 0.0
          %v3502 = vmax.f32 %v3160, 0.0
          %v3503 = vmax.f32 %v3162, 0.0
          %v3504 = vmax.f32 %v3386, 0.0
          %v3505 = vmax.f32 %v3388, 0.0
          %v3506 = vmax.f32 %v2714, 0.0
          %v3507 = vmax.f32 %v2716, 0.0
          %v3508 = vmax.f32 %v2940, 0.0
          %v3509 = vmax.f32 %v2942, 0.0
          %v3510 = vmax.f32 %v3166, 0.0
          %v3511 = vmax.f32 %v3168, 0.0
          %v3512 = vmax.f32 %v3392, 0.0
          %v3513 = vmax.f32 %v3394, 0.0
          %v3514 = vmax.f32 %v2718, 0.0
          %v3515 = vmax.f32 %v2720, 0.0
          %v3516 = vmax.f32 %v2944, 0.0
          %v3517 = vmax.f32 %v2946, 0.0
          %v3518 = vmax.f32 %v3170, 0.0
          %v3519 = vmax.f32 %v3172, 0.0
          %v3520 = vmax.f32 %v3396, 0.0
          %v3521 = vmax.f32 %v3398, 0.0
          %v3522 = vmax.f32 %v2724, 0.0
          %v3523 = vmax.f32 %v2726, 0.0
          %v3524 = vmax.f32 %v2950, 0.0
          %v3525 = vmax.f32 %v2952, 0.0
          %v3526 = vmax.f32 %v3176, 0.0
          %v3527 = vmax.f32 %v3178, 0.0
          %v3528 = vmax.f32 %v3402, 0.0
          %v3529 = vmax.f32 %v3404, 0.0
          %v3530 = vmax.f32 %v2728, 0.0
          %v3531 = vmax.f32 %v2730, 0.0
          %v3532 = vmax.f32 %v2954, 0.0
          %v3533 = vmax.f32 %v2956, 0.0
          %v3534 = vmax.f32 %v3180, 0.0
          %v3535 = vmax.f32 %v3182, 0.0
          %v3536 = vmax.f32 %v3406, 0.0
          %v3537 = vmax.f32 %v3408, 0.0
          %v3538 = vpack.c.bf16 %v3418, %v3410
          %v3539 = vpack.c.bf16 %v3419, %v3411
          %v3540 = vpack.c.bf16 %v3420, %v3412
          %v3541 = vpack.c.bf16 %v3421, %v3413
          %v3542 = vpack.c.bf16 %v3422, %v3414
          %v3543 = vpack.c.bf16 %v3423, %v3415
          %v3544 = vpack.c.bf16 %v3424, %v3416
          %v3545 = vpack.c.bf16 %v3425, %v3417
          %v3546 = vpack.c.bf16 %v3434, %v3426
          %v3547 = vpack.c.bf16 %v3435, %v3427
          %v3548 = vpack.c.bf16 %v3436, %v3428
          %v3549 = vpack.c.bf16 %v3437, %v3429
          %v3550 = vpack.c.bf16 %v3438, %v3430
          %v3551 = vpack.c.bf16 %v3439, %v3431
          %v3552 = vpack.c.bf16 %v3440, %v3432
          %v3553 = vpack.c.bf16 %v3441, %v3433
          %v3554 = vpack.c.bf16 %v3450, %v3442
          %v3555 = vpack.c.bf16 %v3451, %v3443
          %v3556 = vpack.c.bf16 %v3452, %v3444
          %v3557 = vpack.c.bf16 %v3453, %v3445
          %v3558 = vpack.c.bf16 %v3454, %v3446
          %v3559 = vpack.c.bf16 %v3455, %v3447
          %v3560 = vpack.c.bf16 %v3456, %v3448
          %v3561 = vpack.c.bf16 %v3457, %v3449
          %v3562 = vpack.c.bf16 %v3466, %v3458
          %v3563 = vpack.c.bf16 %v3467, %v3459
          %v3564 = vpack.c.bf16 %v3468, %v3460
          %v3565 = vpack.c.bf16 %v3469, %v3461
          %v3566 = vpack.c.bf16 %v3470, %v3462
          %v3567 = vpack.c.bf16 %v3471, %v3463
          %v3568 = vpack.c.bf16 %v3472, %v3464
          %v3569 = vpack.c.bf16 %v3473, %v3465
          %v3570 = vpack.c.bf16 %v3482, %v3474
          %v3571 = vpack.c.bf16 %v3483, %v3475
          %v3572 = vpack.c.bf16 %v3484, %v3476
          %v3573 = vpack.c.bf16 %v3485, %v3477
          %v3574 = vpack.c.bf16 %v3486, %v3478
          %v3575 = vpack.c.bf16 %v3487, %v3479
          %v3576 = vpack.c.bf16 %v3488, %v3480
          %v3577 = vpack.c.bf16 %v3489, %v3481
          %v3578 = vpack.c.bf16 %v3498, %v3490
          %v3579 = vpack.c.bf16 %v3499, %v3491
          %v3580 = vpack.c.bf16 %v3500, %v3492
          %v3581 = vpack.c.bf16 %v3501, %v3493
          %v3582 = vpack.c.bf16 %v3502, %v3494
          %v3583 = vpack.c.bf16 %v3503, %v3495
          %v3584 = vpack.c.bf16 %v3504, %v3496
          %v3585 = vpack.c.bf16 %v3505, %v3497
          %v3586 = vpack.c.bf16 %v3514, %v3506
          %v3587 = vpack.c.bf16 %v3515, %v3507
          %v3588 = vpack.c.bf16 %v3516, %v3508
          %v3589 = vpack.c.bf16 %v3517, %v3509
          %v3590 = vpack.c.bf16 %v3518, %v3510
          %v3591 = vpack.c.bf16 %v3519, %v3511
          %v3592 = vpack.c.bf16 %v3520, %v3512
          %v3593 = vpack.c.bf16 %v3521, %v3513
          %v3594 = vpack.c.bf16 %v3530, %v3522
          %v3595 = vpack.c.bf16 %v3531, %v3523
          %v3596 = vpack.c.bf16 %v3532, %v3524
          %v3597 = vpack.c.bf16 %v3533, %v3525
          %v3598 = vpack.c.bf16 %v3534, %v3526
          %v3599 = vpack.c.bf16 %v3535, %v3527
          %v3600 = vpack.c.bf16 %v3536, %v3528
          %v3601 = vpack.c.bf16 %v3537, %v3529
          %3602 = vst [vmem:[#allocation2] sm:$0xff] %v3538
          %3603 = vst [vmem:[#allocation2 + $0x8] sm:$0xff] %v3539
          %3604 = vst [vmem:[#allocation2 + $0x10] sm:$0xff] %v3540
          %3605 = vst [vmem:[#allocation2 + $0x18] sm:$0xff] %v3541
          %3606 = vst [vmem:[#allocation2 + $0x20] sm:$0xff] %v3542
          %3607 = vst [vmem:[#allocation2 + $0x28] sm:$0xff] %v3543
          %3608 = vst [vmem:[#allocation2 + $0x30] sm:$0xff] %v3544
          %3609 = vst [vmem:[#allocation2 + $0x38] sm:$0xff] %v3545
          %3610 = vst [vmem:[#allocation2 + $0x40] sm:$0xff] %v3546
          %3611 = vst [vmem:[#allocation2 + $0x48] sm:$0xff] %v3547
          %3612 = vst [vmem:[#allocation2 + $0x50] sm:$0xff] %v3548
          %3613 = vst [vmem:[#allocation2 + $0x58] sm:$0xff] %v3549
          %3614 = vst [vmem:[#allocation2 + $0x60] sm:$0xff] %v3550
          %3615 = vst [vmem:[#allocation2 + $0x68] sm:$0xff] %v3551
          %3616 = vst [vmem:[#allocation2 + $0x70] sm:$0xff] %v3552
          %3617 = vst [vmem:[#allocation2 + $0x78] sm:$0xff] %v3553
          %3618 = vst [vmem:[#allocation2 + $0x80] sm:$0xff] %v3554
          %3619 = vst [vmem:[#allocation2 + $0x88] sm:$0xff] %v3555
          %3620 = vst [vmem:[#allocation2 + $0x90] sm:$0xff] %v3556
          %3621 = vst [vmem:[#allocation2 + $0x98] sm:$0xff] %v3557
          %3622 = vst [vmem:[#allocation2 + $0xa0] sm:$0xff] %v3558
          %3623 = vst [vmem:[#allocation2 + $0xa8] sm:$0xff] %v3559
          %3624 = vst [vmem:[#allocation2 + $0xb0] sm:$0xff] %v3560
          %3625 = vst [vmem:[#allocation2 + $0xb8] sm:$0xff] %v3561
          %3626 = vst [vmem:[#allocation2 + $0xc0] sm:$0xff] %v3562
          %3627 = vst [vmem:[#allocation2 + $0xc8] sm:$0xff] %v3563
          %3628 = vst [vmem:[#allocation2 + $0xd0] sm:$0xff] %v3564
          %3629 = vst [vmem:[#allocation2 + $0xd8] sm:$0xff] %v3565
          %3630 = vst [vmem:[#allocation2 + $0xe0] sm:$0xff] %v3566
          %3631 = vst [vmem:[#allocation2 + $0xe8] sm:$0xff] %v3567
          %3632 = vst [vmem:[#allocation2 + $0xf0] sm:$0xff] %v3568
          %3633 = vst [vmem:[#allocation2 + $0xf8] sm:$0xff] %v3569
          %3634 = vst [vmem:[#allocation2 + $0x100] sm:$0xff] %v3570
          %3635 = vst [vmem:[#allocation2 + $0x108] sm:$0xff] %v3571
          %3636 = vst [vmem:[#allocation2 + $0x110] sm:$0xff] %v3572
          %3637 = vst [vmem:[#allocation2 + $0x118] sm:$0xff] %v3573
          %3638 = vst [vmem:[#allocation2 + $0x120] sm:$0xff] %v3574
          %3639 = vst [vmem:[#allocation2 + $0x128] sm:$0xff] %v3575
          %3640 = vst [vmem:[#allocation2 + $0x130] sm:$0xff] %v3576
          %3641 = vst [vmem:[#allocation2 + $0x138] sm:$0xff] %v3577
          %3642 = vst [vmem:[#allocation2 + $0x140] sm:$0xff] %v3578
          %3643 = vst [vmem:[#allocation2 + $0x148] sm:$0xff] %v3579
          %3644 = vst [vmem:[#allocation2 + $0x150] sm:$0xff] %v3580
          %3645 = vst [vmem:[#allocation2 + $0x158] sm:$0xff] %v3581
          %3646 = vst [vmem:[#allocation2 + $0x160] sm:$0xff] %v3582
          %3647 = vst [vmem:[#allocation2 + $0x168] sm:$0xff] %v3583
          %3648 = vst [vmem:[#allocation2 + $0x170] sm:$0xff] %v3584
          %3649 = vst [vmem:[#allocation2 + $0x178] sm:$0xff] %v3585
          %3650 = vst [vmem:[#allocation2 + $0x180] sm:$0xff] %v3586
          %3651 = vst [vmem:[#allocation2 + $0x188] sm:$0xff] %v3587
          %3652 = vst [vmem:[#allocation2 + $0x190] sm:$0xff] %v3588
          %3653 = vst [vmem:[#allocation2 + $0x198] sm:$0xff] %v3589
          %3654 = vst [vmem:[#allocation2 + $0x1a0] sm:$0xff] %v3590
          %3655 = vst [vmem:[#allocation2 + $0x1a8] sm:$0xff] %v3591
          %3656 = vst [vmem:[#allocation2 + $0x1b0] sm:$0xff] %v3592
          %3657 = vst [vmem:[#allocation2 + $0x1b8] sm:$0xff] %v3593
          %3658 = vst [vmem:[#allocation2 + $0x1c0] sm:$0xff] %v3594
          %3659 = vst [vmem:[#allocation2 + $0x1c8] sm:$0xff] %v3595
          %3660 = vst [vmem:[#allocation2 + $0x1d0] sm:$0xff] %v3596
          %3661 = vst [vmem:[#allocation2 + $0x1d8] sm:$0xff] %v3597
          %3662 = vst [vmem:[#allocation2 + $0x1e0] sm:$0xff] %v3598
          %3663 = vst [vmem:[#allocation2 + $0x1e8] sm:$0xff] %v3599
          %3664 = vst [vmem:[#allocation2 + $0x1f0] sm:$0xff] %v3600
          %3665 = vst [vmem:[#allocation2 + $0x1f8] sm:$0xff] %v3601
        $region60: #{mlp_decoder_forward.1} parent=47 // pred_fallthru
          _
        %v3666 = vld [vmem:[#allocation2] sm:$0xff]
        %v3667 = vld [vmem:[#allocation2 + $0x8] sm:$0xff]
        %v3668 = vld [vmem:[#allocation2 + $0x10] sm:$0xff]
        %v3669 = vld [vmem:[#allocation2 + $0x18] sm:$0xff]
        %v3670 = vld [vmem:[#allocation2 + $0x20] sm:$0xff]
        %v3671 = vld [vmem:[#allocation2 + $0x28] sm:$0xff]
        %v3672 = vld [vmem:[#allocation2 + $0x30] sm:$0xff]
        %v3673 = vld [vmem:[#allocation2 + $0x38] sm:$0xff]
        %v3674 = vld [vmem:[#allocation2 + $0x40] sm:$0xff]
        %v3675 = vld [vmem:[#allocation2 + $0x48] sm:$0xff]
        %v3676 = vld [vmem:[#allocation2 + $0x50] sm:$0xff]
        %v3677 = vld [vmem:[#allocation2 + $0x58] sm:$0xff]
        %v3678 = vld [vmem:[#allocation2 + $0x60] sm:$0xff]
        %v3679 = vld [vmem:[#allocation2 + $0x68] sm:$0xff]
        %v3680 = vld [vmem:[#allocation2 + $0x70] sm:$0xff]
        %v3681 = vld [vmem:[#allocation2 + $0x78] sm:$0xff]
        %v3682 = vld [vmem:[#allocation2 + $0x80] sm:$0xff]
        %v3683 = vld [vmem:[#allocation2 + $0x88] sm:$0xff]
        %v3684 = vld [vmem:[#allocation2 + $0x90] sm:$0xff]
        %v3685 = vld [vmem:[#allocation2 + $0x98] sm:$0xff]
        %v3686 = vld [vmem:[#allocation2 + $0xa0] sm:$0xff]
        %v3687 = vld [vmem:[#allocation2 + $0xa8] sm:$0xff]
        %v3688 = vld [vmem:[#allocation2 + $0xb0] sm:$0xff]
        %v3689 = vld [vmem:[#allocation2 + $0xb8] sm:$0xff]
        %v3690 = vld [vmem:[#allocation2 + $0xc0] sm:$0xff]
        %v3691 = vld [vmem:[#allocation2 + $0xc8] sm:$0xff]
        %v3692 = vld [vmem:[#allocation2 + $0xd0] sm:$0xff]
        %v3693 = vld [vmem:[#allocation2 + $0xd8] sm:$0xff]
        %v3694 = vld [vmem:[#allocation2 + $0xe0] sm:$0xff]
        %v3695 = vld [vmem:[#allocation2 + $0xe8] sm:$0xff]
        %v3696 = vld [vmem:[#allocation2 + $0xf0] sm:$0xff]
        %v3697 = vld [vmem:[#allocation2 + $0xf8] sm:$0xff]
        %v3698 = vld [vmem:[#allocation2 + $0x100] sm:$0xff]
        %v3699 = vld [vmem:[#allocation2 + $0x108] sm:$0xff]
        %v3700 = vld [vmem:[#allocation2 + $0x110] sm:$0xff]
        %v3701 = vld [vmem:[#allocation2 + $0x118] sm:$0xff]
        %v3702 = vld [vmem:[#allocation2 + $0x120] sm:$0xff]
        %v3703 = vld [vmem:[#allocation2 + $0x128] sm:$0xff]
        %v3704 = vld [vmem:[#allocation2 + $0x130] sm:$0xff]
        %v3705 = vld [vmem:[#allocation2 + $0x138] sm:$0xff]
        %v3706 = vld [vmem:[#allocation2 + $0x140] sm:$0xff]
        %v3707 = vld [vmem:[#allocation2 + $0x148] sm:$0xff]
        %v3708 = vld [vmem:[#allocation2 + $0x150] sm:$0xff]
        %v3709 = vld [vmem:[#allocation2 + $0x158] sm:$0xff]
        %v3710 = vld [vmem:[#allocation2 + $0x160] sm:$0xff]
        %v3711 = vld [vmem:[#allocation2 + $0x168] sm:$0xff]
        %v3712 = vld [vmem:[#allocation2 + $0x170] sm:$0xff]
        %v3713 = vld [vmem:[#allocation2 + $0x178] sm:$0xff]
        %v3714 = vld [vmem:[#allocation2 + $0x180] sm:$0xff]
        %v3715 = vld [vmem:[#allocation2 + $0x188] sm:$0xff]
        %v3716 = vld [vmem:[#allocation2 + $0x190] sm:$0xff]
        %v3717 = vld [vmem:[#allocation2 + $0x198] sm:$0xff]
        %v3718 = vld [vmem:[#allocation2 + $0x1a0] sm:$0xff]
        %v3719 = vld [vmem:[#allocation2 + $0x1a8] sm:$0xff]
        %v3720 = vld [vmem:[#allocation2 + $0x1b0] sm:$0xff]
        %v3721 = vld [vmem:[#allocation2 + $0x1b8] sm:$0xff]
        %v3722 = vld [vmem:[#allocation2 + $0x1c0] sm:$0xff]
        %v3723 = vld [vmem:[#allocation2 + $0x1c8] sm:$0xff]
        %v3724 = vld [vmem:[#allocation2 + $0x1d0] sm:$0xff]
        %v3725 = vld [vmem:[#allocation2 + $0x1d8] sm:$0xff]
        %v3726 = vld [vmem:[#allocation2 + $0x1e0] sm:$0xff]
        %v3727 = vld [vmem:[#allocation2 + $0x1e8] sm:$0xff]
        %v3728 = vld [vmem:[#allocation2 + $0x1f0] sm:$0xff]
        %v3729 = vld [vmem:[#allocation2 + $0x1f8] sm:$0xff]
        %v3730 = vld [vmem:[%s350] sm:$0xf]
        %v3731 = vld [vmem:[%s350 + $0x4] sm:$0xf]
        %v3732 = vld [vmem:[%s350 + $0x8] sm:$0xf]
        %v3733 = vld [vmem:[%s350 + $0xc] sm:$0xf]
        %v3734 = vld [vmem:[%s350 + $0x10] sm:$0xf]
        %v3735 = vld [vmem:[%s350 + $0x14] sm:$0xf]
        %v3736 = vld [vmem:[%s350 + $0x18] sm:$0xf]
        %v3737 = vld [vmem:[%s350 + $0x1c] sm:$0xf]
        %v3738 = vld [vmem:[%s350 + $0x20] sm:$0xf]
        %v3739 = vld [vmem:[%s350 + $0x24] sm:$0xf]
        %v3740 = vld [vmem:[%s350 + $0x28] sm:$0xf]
        %v3741 = vld [vmem:[%s350 + $0x2c] sm:$0xf]
        %v3742 = vld [vmem:[%s350 + $0x30] sm:$0xf]
        %v3743 = vld [vmem:[%s350 + $0x34] sm:$0xf]
        %v3744 = vld [vmem:[%s350 + $0x38] sm:$0xf]
        %v3745 = vld [vmem:[%s350 + $0x3c] sm:$0xf]
        %v3746 = vld [vmem:[%s350 + $0x40] sm:$0xf]
        %v3747 = vld [vmem:[%s350 + $0x44] sm:$0xf]
        %v3748 = vld [vmem:[%s350 + $0x48] sm:$0xf]
        %v3749 = vld [vmem:[%s350 + $0x4c] sm:$0xf]
        %v3750 = vld [vmem:[%s350 + $0x50] sm:$0xf]
        %v3751 = vld [vmem:[%s350 + $0x54] sm:$0xf]
        %v3752 = vld [vmem:[%s350 + $0x58] sm:$0xf]
        %v3753 = vld [vmem:[%s350 + $0x5c] sm:$0xf]
        %v3754 = vld [vmem:[%s350 + $0x60] sm:$0xf]
        %v3755 = vld [vmem:[%s350 + $0x64] sm:$0xf]
        %v3756 = vld [vmem:[%s350 + $0x68] sm:$0xf]
        %v3757 = vld [vmem:[%s350 + $0x6c] sm:$0xf]
        %v3758 = vld [vmem:[%s350 + $0x70] sm:$0xf]
        %v3759 = vld [vmem:[%s350 + $0x74] sm:$0xf]
        %v3760 = vld [vmem:[%s350 + $0x78] sm:$0xf]
        %v3761 = vld [vmem:[%s350 + $0x7c] sm:$0xf]
        %v3762 = vld [vmem:[%s350 + $0x80] sm:$0xf]
        %v3763 = vld [vmem:[%s350 + $0x84] sm:$0xf]
        %v3764 = vld [vmem:[%s350 + $0x88] sm:$0xf]
        %v3765 = vld [vmem:[%s350 + $0x8c] sm:$0xf]
        %v3766 = vld [vmem:[%s350 + $0x90] sm:$0xf]
        %v3767 = vld [vmem:[%s350 + $0x94] sm:$0xf]
        %v3768 = vld [vmem:[%s350 + $0x98] sm:$0xf]
        %v3769 = vld [vmem:[%s350 + $0x9c] sm:$0xf]
        %v3770 = vld [vmem:[%s350 + $0xa0] sm:$0xf]
        %v3771 = vld [vmem:[%s350 + $0xa4] sm:$0xf]
        %v3772 = vld [vmem:[%s350 + $0xa8] sm:$0xf]
        %v3773 = vld [vmem:[%s350 + $0xac] sm:$0xf]
        %v3774 = vld [vmem:[%s350 + $0xb0] sm:$0xf]
        %v3775 = vld [vmem:[%s350 + $0xb4] sm:$0xf]
        %v3776 = vld [vmem:[%s350 + $0xb8] sm:$0xf]
        %v3777 = vld [vmem:[%s350 + $0xbc] sm:$0xf]
        %v3778 = vld [vmem:[%s350 + $0xc0] sm:$0xf]
        %v3779 = vld [vmem:[%s350 + $0xc4] sm:$0xf]
        %v3780 = vld [vmem:[%s350 + $0xc8] sm:$0xf]
        %v3781 = vld [vmem:[%s350 + $0xcc] sm:$0xf]
        %v3782 = vld [vmem:[%s350 + $0xd0] sm:$0xf]
        %v3783 = vld [vmem:[%s350 + $0xd4] sm:$0xf]
        %v3784 = vld [vmem:[%s350 + $0xd8] sm:$0xf]
        %v3785 = vld [vmem:[%s350 + $0xdc] sm:$0xf]
        %v3786 = vld [vmem:[%s350 + $0xe0] sm:$0xf]
        %v3787 = vld [vmem:[%s350 + $0xe4] sm:$0xf]
        %v3788 = vld [vmem:[%s350 + $0xe8] sm:$0xf]
        %v3789 = vld [vmem:[%s350 + $0xec] sm:$0xf]
        %v3790 = vld [vmem:[%s350 + $0xf0] sm:$0xf]
        %v3791 = vld [vmem:[%s350 + $0xf4] sm:$0xf]
        %v3792 = vld [vmem:[%s350 + $0xf8] sm:$0xf]
        %v3793 = vld [vmem:[%s350 + $0xfc] sm:$0xf]
        %v3794 = vld [vmem:[%s350 + $0x100] sm:$0xf]
        %v3795 = vld [vmem:[%s350 + $0x104] sm:$0xf]
        %v3796 = vld [vmem:[%s350 + $0x108] sm:$0xf]
        %v3797 = vld [vmem:[%s350 + $0x10c] sm:$0xf]
        %v3798 = vld [vmem:[%s350 + $0x110] sm:$0xf]
        %v3799 = vld [vmem:[%s350 + $0x114] sm:$0xf]
        %v3800 = vld [vmem:[%s350 + $0x118] sm:$0xf]
        %v3801 = vld [vmem:[%s350 + $0x11c] sm:$0xf]
        %v3802 = vld [vmem:[%s350 + $0x120] sm:$0xf]
        %v3803 = vld [vmem:[%s350 + $0x124] sm:$0xf]
        %v3804 = vld [vmem:[%s350 + $0x128] sm:$0xf]
        %v3805 = vld [vmem:[%s350 + $0x12c] sm:$0xf]
        %v3806 = vld [vmem:[%s350 + $0x130] sm:$0xf]
        %v3807 = vld [vmem:[%s350 + $0x134] sm:$0xf]
        %v3808 = vld [vmem:[%s350 + $0x138] sm:$0xf]
        %v3809 = vld [vmem:[%s350 + $0x13c] sm:$0xf]
        %v3810 = vld [vmem:[%s350 + $0x140] sm:$0xf]
        %v3811 = vld [vmem:[%s350 + $0x144] sm:$0xf]
        %v3812 = vld [vmem:[%s350 + $0x148] sm:$0xf]
        %v3813 = vld [vmem:[%s350 + $0x14c] sm:$0xf]
        %v3814 = vld [vmem:[%s350 + $0x150] sm:$0xf]
        %v3815 = vld [vmem:[%s350 + $0x154] sm:$0xf]
        %v3816 = vld [vmem:[%s350 + $0x158] sm:$0xf]
        %v3817 = vld [vmem:[%s350 + $0x15c] sm:$0xf]
        %v3818 = vld [vmem:[%s350 + $0x160] sm:$0xf]
        %v3819 = vld [vmem:[%s350 + $0x164] sm:$0xf]
        %v3820 = vld [vmem:[%s350 + $0x168] sm:$0xf]
        %v3821 = vld [vmem:[%s350 + $0x16c] sm:$0xf]
        %v3822 = vld [vmem:[%s350 + $0x170] sm:$0xf]
        %v3823 = vld [vmem:[%s350 + $0x174] sm:$0xf]
        %v3824 = vld [vmem:[%s350 + $0x178] sm:$0xf]
        %v3825 = vld [vmem:[%s350 + $0x17c] sm:$0xf]
        %v3826 = vld [vmem:[%s350 + $0x180] sm:$0xf]
        %v3827 = vld [vmem:[%s350 + $0x184] sm:$0xf]
        %v3828 = vld [vmem:[%s350 + $0x188] sm:$0xf]
        %v3829 = vld [vmem:[%s350 + $0x18c] sm:$0xf]
        %v3830 = vld [vmem:[%s350 + $0x190] sm:$0xf]
        %v3831 = vld [vmem:[%s350 + $0x194] sm:$0xf]
        %v3832 = vld [vmem:[%s350 + $0x198] sm:$0xf]
        %v3833 = vld [vmem:[%s350 + $0x19c] sm:$0xf]
        %v3834 = vld [vmem:[%s350 + $0x1a0] sm:$0xf]
        %v3835 = vld [vmem:[%s350 + $0x1a4] sm:$0xf]
        %v3836 = vld [vmem:[%s350 + $0x1a8] sm:$0xf]
        %v3837 = vld [vmem:[%s350 + $0x1ac] sm:$0xf]
        %v3838 = vld [vmem:[%s350 + $0x1b0] sm:$0xf]
        %v3839 = vld [vmem:[%s350 + $0x1b4] sm:$0xf]
        %v3840 = vld [vmem:[%s350 + $0x1b8] sm:$0xf]
        %v3841 = vld [vmem:[%s350 + $0x1bc] sm:$0xf]
        %v3842 = vld [vmem:[%s350 + $0x1c0] sm:$0xf]
        %v3843 = vld [vmem:[%s350 + $0x1c4] sm:$0xf]
        %v3844 = vld [vmem:[%s350 + $0x1c8] sm:$0xf]
        %v3845 = vld [vmem:[%s350 + $0x1cc] sm:$0xf]
        %v3846 = vld [vmem:[%s350 + $0x1d0] sm:$0xf]
        %v3847 = vld [vmem:[%s350 + $0x1d4] sm:$0xf]
        %v3848 = vld [vmem:[%s350 + $0x1d8] sm:$0xf]
        %v3849 = vld [vmem:[%s350 + $0x1dc] sm:$0xf]
        %v3850 = vld [vmem:[%s350 + $0x1e0] sm:$0xf]
        %v3851 = vld [vmem:[%s350 + $0x1e4] sm:$0xf]
        %v3852 = vld [vmem:[%s350 + $0x1e8] sm:$0xf]
        %v3853 = vld [vmem:[%s350 + $0x1ec] sm:$0xf]
        %v3854 = vld [vmem:[%s350 + $0x1f0] sm:$0xf]
        %v3855 = vld [vmem:[%s350 + $0x1f4] sm:$0xf]
        %v3856 = vld [vmem:[%s350 + $0x1f8] sm:$0xf]
        %v3857 = vld [vmem:[%s350 + $0x1fc] sm:$0xf]
        %v3858 = vld [vmem:[%s353] sm:$0x1]
        %v3860 = vlaneseq
        %v3861 = vshrl.u32 %v3860, 7
        %v3862 = vsub.s32 0, %v3861
        %v3863 = vrot.slane %v3858, %v3862
        %v3993 = vunpack.c.l.b16 %v3730
        %v3994 = vunpack.c.l.b16 %v3731
        %v3995 = vunpack.c.l.b16 %v3732
        %v3996 = vunpack.c.l.b16 %v3733
        %v3997 = vunpack.c.l.b16 %v3734
        %v3998 = vunpack.c.l.b16 %v3735
        %v3999 = vunpack.c.l.b16 %v3736
        %v4000 = vunpack.c.l.b16 %v3737
        %v4001 = vunpack.c.l.b16 %v3738
        %v4002 = vunpack.c.l.b16 %v3739
        %v4003 = vunpack.c.l.b16 %v3740
        %v4004 = vunpack.c.l.b16 %v3741
        %v4005 = vunpack.c.l.b16 %v3742
        %v4006 = vunpack.c.l.b16 %v3743
        %v4007 = vunpack.c.l.b16 %v3744
        %v4008 = vunpack.c.l.b16 %v3745
        %v4009 = vunpack.c.l.b16 %v3746
        %v4010 = vunpack.c.l.b16 %v3747
        %v4011 = vunpack.c.l.b16 %v3748
        %v4012 = vunpack.c.l.b16 %v3749
        %v4013 = vunpack.c.l.b16 %v3750
        %v4014 = vunpack.c.l.b16 %v3751
        %v4015 = vunpack.c.l.b16 %v3752
        %v4016 = vunpack.c.l.b16 %v3753
        %v4017 = vunpack.c.l.b16 %v3754
        %v4018 = vunpack.c.l.b16 %v3755
        %v4019 = vunpack.c.l.b16 %v3756
        %v4020 = vunpack.c.l.b16 %v3757
        %v4021 = vunpack.c.l.b16 %v3758
        %v4022 = vunpack.c.l.b16 %v3759
        %v4023 = vunpack.c.l.b16 %v3760
        %v4024 = vunpack.c.l.b16 %v3761
        %v4025 = vunpack.c.l.b16 %v3762
        %v4026 = vunpack.c.l.b16 %v3763
        %v4027 = vunpack.c.l.b16 %v3764
        %v4028 = vunpack.c.l.b16 %v3765
        %v4029 = vunpack.c.l.b16 %v3766
        %v4030 = vunpack.c.l.b16 %v3767
        %v4031 = vunpack.c.l.b16 %v3768
        %v4032 = vunpack.c.l.b16 %v3769
        %v4033 = vunpack.c.l.b16 %v3770
        %v4034 = vunpack.c.l.b16 %v3771
        %v4035 = vunpack.c.l.b16 %v3772
        %v4036 = vunpack.c.l.b16 %v3773
        %v4037 = vunpack.c.l.b16 %v3774
        %v4038 = vunpack.c.l.b16 %v3775
        %v4039 = vunpack.c.l.b16 %v3776
        %v4040 = vunpack.c.l.b16 %v3777
        %v4041 = vunpack.c.l.b16 %v3778
        %v4042 = vunpack.c.l.b16 %v3779
        %v4043 = vunpack.c.l.b16 %v3780
        %v4044 = vunpack.c.l.b16 %v3781
        %v4045 = vunpack.c.l.b16 %v3782
        %v4046 = vunpack.c.l.b16 %v3783
        %v4047 = vunpack.c.l.b16 %v3784
        %v4048 = vunpack.c.l.b16 %v3785
        %v4049 = vunpack.c.l.b16 %v3786
        %v4050 = vunpack.c.l.b16 %v3787
        %v4051 = vunpack.c.l.b16 %v3788
        %v4052 = vunpack.c.l.b16 %v3789
        %v4053 = vunpack.c.l.b16 %v3790
        %v4054 = vunpack.c.l.b16 %v3791
        %v4055 = vunpack.c.l.b16 %v3792
        %v4056 = vunpack.c.l.b16 %v3793
        %v4057 = vunpack.c.l.b16 %v3794
        %v4058 = vunpack.c.l.b16 %v3795
        %v4059 = vunpack.c.l.b16 %v3796
        %v4060 = vunpack.c.l.b16 %v3797
        %v4061 = vunpack.c.l.b16 %v3798
        %v4062 = vunpack.c.l.b16 %v3799
        %v4063 = vunpack.c.l.b16 %v3800
        %v4064 = vunpack.c.l.b16 %v3801
        %v4065 = vunpack.c.l.b16 %v3802
        %v4066 = vunpack.c.l.b16 %v3803
        %v4067 = vunpack.c.l.b16 %v3804
        %v4068 = vunpack.c.l.b16 %v3805
        %v4069 = vunpack.c.l.b16 %v3806
        %v4070 = vunpack.c.l.b16 %v3807
        %v4071 = vunpack.c.l.b16 %v3808
        %v4072 = vunpack.c.l.b16 %v3809
        %v4073 = vunpack.c.l.b16 %v3810
        %v4074 = vunpack.c.l.b16 %v3811
        %v4075 = vunpack.c.l.b16 %v3812
        %v4076 = vunpack.c.l.b16 %v3813
        %v4077 = vunpack.c.l.b16 %v3814
        %v4078 = vunpack.c.l.b16 %v3815
        %v4079 = vunpack.c.l.b16 %v3816
        %v4080 = vunpack.c.l.b16 %v3817
        %v4081 = vunpack.c.l.b16 %v3818
        %v4082 = vunpack.c.l.b16 %v3819
        %v4083 = vunpack.c.l.b16 %v3820
        %v4084 = vunpack.c.l.b16 %v3821
        %v4085 = vunpack.c.l.b16 %v3822
        %v4086 = vunpack.c.l.b16 %v3823
        %v4087 = vunpack.c.l.b16 %v3824
        %v4088 = vunpack.c.l.b16 %v3825
        %v4089 = vunpack.c.l.b16 %v3826
        %v4090 = vunpack.c.l.b16 %v3827
        %v4091 = vunpack.c.l.b16 %v3828
        %v4092 = vunpack.c.l.b16 %v3829
        %v4093 = vunpack.c.l.b16 %v3830
        %v4094 = vunpack.c.l.b16 %v3831
        %v4095 = vunpack.c.l.b16 %v3832
        %v4096 = vunpack.c.l.b16 %v3833
        %v4097 = vunpack.c.l.b16 %v3834
        %v4098 = vunpack.c.l.b16 %v3835
        %v4099 = vunpack.c.l.b16 %v3836
        %v4100 = vunpack.c.l.b16 %v3837
        %v4101 = vunpack.c.l.b16 %v3838
        %v4102 = vunpack.c.l.b16 %v3839
        %v4103 = vunpack.c.l.b16 %v3840
        %v4104 = vunpack.c.l.b16 %v3841
        %v4105 = vunpack.c.l.b16 %v3842
        %v4106 = vunpack.c.l.b16 %v3843
        %v4107 = vunpack.c.l.b16 %v3844
        %v4108 = vunpack.c.l.b16 %v3845
        %v4109 = vunpack.c.l.b16 %v3846
        %v4110 = vunpack.c.l.b16 %v3847
        %v4111 = vunpack.c.l.b16 %v3848
        %v4112 = vunpack.c.l.b16 %v3849
        %v4113 = vunpack.c.l.b16 %v3850
        %v4114 = vunpack.c.l.b16 %v3851
        %v4115 = vunpack.c.l.b16 %v3852
        %v4116 = vunpack.c.l.b16 %v3853
        %v4117 = vunpack.c.l.b16 %v3854
        %v4118 = vunpack.c.l.b16 %v3855
        %v4119 = vunpack.c.l.b16 %v3856
        %v4120 = vunpack.c.l.b16 %v3857
        %v4121 = vpack.c.b16 %v3994, %v3993
        %v4122 = vpack.c.b16 %v3996, %v3995
        %v4123 = vpack.c.b16 %v3998, %v3997
        %v4124 = vpack.c.b16 %v4000, %v3999
        %v4125 = vpack.c.b16 %v4002, %v4001
        %v4126 = vpack.c.b16 %v4004, %v4003
        %v4127 = vpack.c.b16 %v4006, %v4005
        %v4128 = vpack.c.b16 %v4008, %v4007
        %v4129 = vpack.c.b16 %v4010, %v4009
        %v4130 = vpack.c.b16 %v4012, %v4011
        %v4131 = vpack.c.b16 %v4014, %v4013
        %v4132 = vpack.c.b16 %v4016, %v4015
        %v4133 = vpack.c.b16 %v4018, %v4017
        %v4134 = vpack.c.b16 %v4020, %v4019
        %v4135 = vpack.c.b16 %v4022, %v4021
        %v4136 = vpack.c.b16 %v4024, %v4023
        %v4137 = vpack.c.b16 %v4026, %v4025
        %v4138 = vpack.c.b16 %v4028, %v4027
        %v4139 = vpack.c.b16 %v4030, %v4029
        %v4140 = vpack.c.b16 %v4032, %v4031
        %v4141 = vpack.c.b16 %v4034, %v4033
        %v4142 = vpack.c.b16 %v4036, %v4035
        %v4143 = vpack.c.b16 %v4038, %v4037
        %v4144 = vpack.c.b16 %v4040, %v4039
        %v4145 = vpack.c.b16 %v4042, %v4041
        %v4146 = vpack.c.b16 %v4044, %v4043
        %v4147 = vpack.c.b16 %v4046, %v4045
        %v4148 = vpack.c.b16 %v4048, %v4047
        %v4149 = vpack.c.b16 %v4050, %v4049
        %v4150 = vpack.c.b16 %v4052, %v4051
        %v4151 = vpack.c.b16 %v4054, %v4053
        %v4152 = vpack.c.b16 %v4056, %v4055
        %v4153 = vpack.c.b16 %v4058, %v4057
        %v4154 = vpack.c.b16 %v4060, %v4059
        %v4155 = vpack.c.b16 %v4062, %v4061
        %v4156 = vpack.c.b16 %v4064, %v4063
        %v4157 = vpack.c.b16 %v4066, %v4065
        %v4158 = vpack.c.b16 %v4068, %v4067
        %v4159 = vpack.c.b16 %v4070, %v4069
        %v4160 = vpack.c.b16 %v4072, %v4071
        %v4161 = vpack.c.b16 %v4074, %v4073
        %v4162 = vpack.c.b16 %v4076, %v4075
        %v4163 = vpack.c.b16 %v4078, %v4077
        %v4164 = vpack.c.b16 %v4080, %v4079
        %v4165 = vpack.c.b16 %v4082, %v4081
        %v4166 = vpack.c.b16 %v4084, %v4083
        %v4167 = vpack.c.b16 %v4086, %v4085
        %v4168 = vpack.c.b16 %v4088, %v4087
        %v4169 = vpack.c.b16 %v4090, %v4089
        %v4170 = vpack.c.b16 %v4092, %v4091
        %v4171 = vpack.c.b16 %v4094, %v4093
        %v4172 = vpack.c.b16 %v4096, %v4095
        %v4173 = vpack.c.b16 %v4098, %v4097
        %v4174 = vpack.c.b16 %v4100, %v4099
        %v4175 = vpack.c.b16 %v4102, %v4101
        %v4176 = vpack.c.b16 %v4104, %v4103
        %v4177 = vpack.c.b16 %v4106, %v4105
        %v4178 = vpack.c.b16 %v4108, %v4107
        %v4179 = vpack.c.b16 %v4110, %v4109
        %v4180 = vpack.c.b16 %v4112, %v4111
        %v4181 = vpack.c.b16 %v4114, %v4113
        %v4182 = vpack.c.b16 %v4116, %v4115
        %v4183 = vpack.c.b16 %v4118, %v4117
        %v4184 = vpack.c.b16 %v4120, %v4119
        %4249 = vmatprep.subr.bf16.mxu0 0
        %4250 = vmatpush1.bf16.msra.mxu0 %v4121
        %4251 = vmatprep.subr.bf16.mxu0 0
        %4252 = vmatpush1.bf16.msra.mxu0 %v4122
        %4253 = vmatprep.subr.bf16.mxu0 0
        %4254 = vmatpush1.bf16.msra.mxu0 %v4123
        %4255 = vmatprep.subr.bf16.mxu0 0
        %4256 = vmatpush1.bf16.msra.mxu0 %v4124
        %4257 = vmatprep.subr.bf16.mxu0 0
        %4258 = vmatpush1.bf16.msra.mxu0 %v4125
        %4259 = vmatprep.subr.bf16.mxu0 0
        %4260 = vmatpush1.bf16.msra.mxu0 %v4126
        %4261 = vmatprep.subr.bf16.mxu0 0
        %4262 = vmatpush1.bf16.msra.mxu0 %v4127
        %4263 = vmatprep.subr.bf16.mxu0 0
        %4264 = vmatpush1.bf16.msra.mxu0 %v4128
        %4265 = vmatprep.subr.bf16.mxu0 0
        %4266 = vmatpush1.bf16.msra.mxu0 %v4129
        %4267 = vmatprep.subr.bf16.mxu0 0
        %4268 = vmatpush1.bf16.msra.mxu0 %v4130
        %4269 = vmatprep.subr.bf16.mxu0 0
        %4270 = vmatpush1.bf16.msra.mxu0 %v4131
        %4271 = vmatprep.subr.bf16.mxu0 0
        %4272 = vmatpush1.bf16.msra.mxu0 %v4132
        %4273 = vmatprep.subr.bf16.mxu0 0
        %4274 = vmatpush1.bf16.msra.mxu0 %v4133
        %4275 = vmatprep.subr.bf16.mxu0 0
        %4276 = vmatpush1.bf16.msra.mxu0 %v4134
        %4277 = vmatprep.subr.bf16.mxu0 0
        %4278 = vmatpush1.bf16.msra.mxu0 %v4135
        %4279 = vmatprep.subr.bf16.mxu0 0
        %4280 = vmatpush1.bf16.msra.mxu0 %v4136
        %4281 = vmatprep.mubr.bf16.mxu0 %v3667
        %4282 = vmatmul.mubr.bf16.gmra.mrb[0].mxu0 %v3666
        %v4283 = vpop.f32.mrb[0].mxu0
        %v4284 = vadd.f32 %v3863, %v4283
        %v4285 = vpop.f32.mrb[0].mxu0
        %v4286 = vpop.f32.mrb[0].mxu0
        %v4287 = vadd.f32 %v3863, %v4286
        %v4288 = vpop.f32.mrb[0].mxu0
        %4289 = vmatprep.mubr.bf16.mxu0 %v3675
        %4290 = vmatmul.mubr.bf16.gmra.mrb[0].mxu0 %v3674
        %v4291 = vpop.f32.mrb[0].mxu0
        %v4292 = vadd.f32 %v3863, %v4291
        %v4293 = vpop.f32.mrb[0].mxu0
        %v4294 = vpop.f32.mrb[0].mxu0
        %v4295 = vadd.f32 %v3863, %v4294
        %v4296 = vpop.f32.mrb[0].mxu0
        %4297 = vmatprep.mubr.bf16.mxu0 %v3683
        %4298 = vmatmul.mubr.bf16.gmra.mrb[0].mxu0 %v3682
        %v4299 = vpop.f32.mrb[0].mxu0
        %v4300 = vadd.f32 %v3863, %v4299
        %v4301 = vpop.f32.mrb[0].mxu0
        %v4302 = vpop.f32.mrb[0].mxu0
        %v4303 = vadd.f32 %v3863, %v4302
        %v4304 = vpop.f32.mrb[0].mxu0
        %4305 = vmatprep.mubr.bf16.mxu0 %v3691
        %4306 = vmatmul.mubr.bf16.gmra.mrb[0].mxu0 %v3690
        %v4307 = vpop.f32.mrb[0].mxu0
        %v4308 = vadd.f32 %v3863, %v4307
        %v4309 = vpop.f32.mrb[0].mxu0
        %v4310 = vpop.f32.mrb[0].mxu0
        %v4311 = vadd.f32 %v3863, %v4310
        %v4312 = vpop.f32.mrb[0].mxu0
        %4313 = vmatprep.mubr.bf16.mxu0 %v3699
        %4314 = vmatmul.mubr.bf16.gmra.mrb[0].mxu0 %v3698
        %v4315 = vpop.f32.mrb[0].mxu0
        %v4316 = vadd.f32 %v3863, %v4315
        %v4317 = vpop.f32.mrb[0].mxu0
        %v4318 = vpop.f32.mrb[0].mxu0
        %v4319 = vadd.f32 %v3863, %v4318
        %v4320 = vpop.f32.mrb[0].mxu0
        %4321 = vmatprep.mubr.bf16.mxu0 %v3707
        %4322 = vmatmul.mubr.bf16.gmra.mrb[0].mxu0 %v3706
        %v4323 = vpop.f32.mrb[0].mxu0
        %v4324 = vadd.f32 %v3863, %v4323
        %v4325 = vpop.f32.mrb[0].mxu0
        %v4326 = vpop.f32.mrb[0].mxu0
        %v4327 = vadd.f32 %v3863, %v4326
        %v4328 = vpop.f32.mrb[0].mxu0
        %4329 = vmatprep.mubr.bf16.mxu0 %v3715
        %4330 = vmatmul.mubr.bf16.gmra.mrb[0].mxu0 %v3714
        %v4331 = vpop.f32.mrb[0].mxu0
        %v4332 = vadd.f32 %v3863, %v4331
        %v4333 = vpop.f32.mrb[0].mxu0
        %v4334 = vpop.f32.mrb[0].mxu0
        %v4335 = vadd.f32 %v3863, %v4334
        %v4336 = vpop.f32.mrb[0].mxu0
        %4337 = vmatprep.mubr.bf16.mxu0 %v3723
        %4338 = vmatmul.mubr.bf16.gmra.mrb[0].mxu0 %v3722
        %v4339 = vpop.f32.mrb[0].mxu0
        %v4340 = vadd.f32 %v3863, %v4339
        %v4341 = vpop.f32.mrb[0].mxu0
        %v4342 = vpop.f32.mrb[0].mxu0
        %v4343 = vadd.f32 %v3863, %v4342
        %v4344 = vpop.f32.mrb[0].mxu0
        %4345 = vdwg.mxu0
        %4346 = vmatprep.subr.bf16.mxu0 0
        %4347 = vmatpush1.bf16.msra.mxu0 %v4137
        %4348 = vmatprep.subr.bf16.mxu0 0
        %4349 = vmatpush1.bf16.msra.mxu0 %v4138
        %4350 = vmatprep.subr.bf16.mxu0 0
        %4351 = vmatpush1.bf16.msra.mxu0 %v4139
        %4352 = vmatprep.subr.bf16.mxu0 0
        %4353 = vmatpush1.bf16.msra.mxu0 %v4140
        %4354 = vmatprep.subr.bf16.mxu0 0
        %4355 = vmatpush1.bf16.msra.mxu0 %v4141
        %4356 = vmatprep.subr.bf16.mxu0 0
        %4357 = vmatpush1.bf16.msra.mxu0 %v4142
        %4358 = vmatprep.subr.bf16.mxu0 0
        %4359 = vmatpush1.bf16.msra.mxu0 %v4143
        %4360 = vmatprep.subr.bf16.mxu0 0
        %4361 = vmatpush1.bf16.msra.mxu0 %v4144
        %4362 = vmatprep.subr.bf16.mxu0 0
        %4363 = vmatpush1.bf16.msra.mxu0 %v4145
        %4364 = vmatprep.subr.bf16.mxu0 0
        %4365 = vmatpush1.bf16.msra.mxu0 %v4146
        %4366 = vmatprep.subr.bf16.mxu0 0
        %4367 = vmatpush1.bf16.msra.mxu0 %v4147
        %4368 = vmatprep.subr.bf16.mxu0 0
        %4369 = vmatpush1.bf16.msra.mxu0 %v4148
        %4370 = vmatprep.subr.bf16.mxu0 0
        %4371 = vmatpush1.bf16.msra.mxu0 %v4149
        %4372 = vmatprep.subr.bf16.mxu0 0
        %4373 = vmatpush1.bf16.msra.mxu0 %v4150
        %4374 = vmatprep.subr.bf16.mxu0 0
        %4375 = vmatpush1.bf16.msra.mxu0 %v4151
        %4376 = vmatprep.subr.bf16.mxu0 0
        %4377 = vmatpush1.bf16.msra.mxu0 %v4152
        %4378 = vmatprep.mubr.bf16.mxu0 %v3669
        %4379 = vmatmul.mubr.bf16.gmra.mrb[0].mxu0 %v3668
        %v4380 = vpop.f32.mrb[0].mxu0
        %v4381 = vadd.f32 %v4284, %v4380
        %v4382 = vpop.f32.mrb[0].mxu0
        %v4383 = vpop.f32.mrb[0].mxu0
        %v4384 = vadd.f32 %v4287, %v4383
        %v4385 = vpop.f32.mrb[0].mxu0
        %4386 = vmatprep.mubr.bf16.mxu0 %v3677
        %4387 = vmatmul.mubr.bf16.gmra.mrb[0].mxu0 %v3676
        %v4388 = vpop.f32.mrb[0].mxu0
        %v4389 = vadd.f32 %v4292, %v4388
        %v4390 = vpop.f32.mrb[0].mxu0
        %v4391 = vpop.f32.mrb[0].mxu0
        %v4392 = vadd.f32 %v4295, %v4391
        %v4393 = vpop.f32.mrb[0].mxu0
        %4394 = vmatprep.mubr.bf16.mxu0 %v3685
        %4395 = vmatmul.mubr.bf16.gmra.mrb[0].mxu0 %v3684
        %v4396 = vpop.f32.mrb[0].mxu0
        %v4397 = vadd.f32 %v4300, %v4396
        %v4398 = vpop.f32.mrb[0].mxu0
        %v4399 = vpop.f32.mrb[0].mxu0
        %v4400 = vadd.f32 %v4303, %v4399
        %v4401 = vpop.f32.mrb[0].mxu0
        %4402 = vmatprep.mubr.bf16.mxu0 %v3693
        %4403 = vmatmul.mubr.bf16.gmra.mrb[0].mxu0 %v3692
        %v4404 = vpop.f32.mrb[0].mxu0
        %v4405 = vadd.f32 %v4308, %v4404
        %v4406 = vpop.f32.mrb[0].mxu0
        %v4407 = vpop.f32.mrb[0].mxu0
        %v4408 = vadd.f32 %v4311, %v4407
        %v4409 = vpop.f32.mrb[0].mxu0
        %4410 = vmatprep.mubr.bf16.mxu0 %v3701
        %4411 = vmatmul.mubr.bf16.gmra.mrb[0].mxu0 %v3700
        %v4412 = vpop.f32.mrb[0].mxu0
        %v4413 = vadd.f32 %v4316, %v4412
        %v4414 = vpop.f32.mrb[0].mxu0
        %v4415 = vpop.f32.mrb[0].mxu0
        %v4416 = vadd.f32 %v4319, %v4415
        %v4417 = vpop.f32.mrb[0].mxu0
        %4418 = vmatprep.mubr.bf16.mxu0 %v3709
        %4419 = vmatmul.mubr.bf16.gmra.mrb[0].mxu0 %v3708
        %v4420 = vpop.f32.mrb[0].mxu0
        %v4421 = vadd.f32 %v4324, %v4420
        %v4422 = vpop.f32.mrb[0].mxu0
        %v4423 = vpop.f32.mrb[0].mxu0
        %v4424 = vadd.f32 %v4327, %v4423
        %v4425 = vpop.f32.mrb[0].mxu0
        %4426 = vmatprep.mubr.bf16.mxu0 %v3717
        %4427 = vmatmul.mubr.bf16.gmra.mrb[0].mxu0 %v3716
        %v4428 = vpop.f32.mrb[0].mxu0
        %v4429 = vadd.f32 %v4332, %v4428
        %v4430 = vpop.f32.mrb[0].mxu0
        %v4431 = vpop.f32.mrb[0].mxu0
        %v4432 = vadd.f32 %v4335, %v4431
        %v4433 = vpop.f32.mrb[0].mxu0
        %4434 = vmatprep.mubr.bf16.mxu0 %v3725
        %4435 = vmatmul.mubr.bf16.gmra.mrb[0].mxu0 %v3724
        %v4436 = vpop.f32.mrb[0].mxu0
        %v4437 = vadd.f32 %v4340, %v4436
        %v4438 = vpop.f32.mrb[0].mxu0
        %v4439 = vpop.f32.mrb[0].mxu0
        %v4440 = vadd.f32 %v4343, %v4439
        %v4441 = vpop.f32.mrb[0].mxu0
        %4442 = vdwg.mxu0
        %4443 = vmatprep.subr.bf16.mxu0 0
        %4444 = vmatpush1.bf16.msra.mxu0 %v4153
        %4445 = vmatprep.subr.bf16.mxu0 0
        %4446 = vmatpush1.bf16.msra.mxu0 %v4154
        %4447 = vmatprep.subr.bf16.mxu0 0
        %4448 = vmatpush1.bf16.msra.mxu0 %v4155
        %4449 = vmatprep.subr.bf16.mxu0 0
        %4450 = vmatpush1.bf16.msra.mxu0 %v4156
        %4451 = vmatprep.subr.bf16.mxu0 0
        %4452 = vmatpush1.bf16.msra.mxu0 %v4157
        %4453 = vmatprep.subr.bf16.mxu0 0
        %4454 = vmatpush1.bf16.msra.mxu0 %v4158
        %4455 = vmatprep.subr.bf16.mxu0 0
        %4456 = vmatpush1.bf16.msra.mxu0 %v4159
        %4457 = vmatprep.subr.bf16.mxu0 0
        %4458 = vmatpush1.bf16.msra.mxu0 %v4160
        %4459 = vmatprep.subr.bf16.mxu0 0
        %4460 = vmatpush1.bf16.msra.mxu0 %v4161
        %4461 = vmatprep.subr.bf16.mxu0 0
        %4462 = vmatpush1.bf16.msra.mxu0 %v4162
        %4463 = vmatprep.subr.bf16.mxu0 0
        %4464 = vmatpush1.bf16.msra.mxu0 %v4163
        %4465 = vmatprep.subr.bf16.mxu0 0
        %4466 = vmatpush1.bf16.msra.mxu0 %v4164
        %4467 = vmatprep.subr.bf16.mxu0 0
        %4468 = vmatpush1.bf16.msra.mxu0 %v4165
        %4469 = vmatprep.subr.bf16.mxu0 0
        %4470 = vmatpush1.bf16.msra.mxu0 %v4166
        %4471 = vmatprep.subr.bf16.mxu0 0
        %4472 = vmatpush1.bf16.msra.mxu0 %v4167
        %4473 = vmatprep.subr.bf16.mxu0 0
        %4474 = vmatpush1.bf16.msra.mxu0 %v4168
        %4475 = vmatprep.mubr.bf16.mxu0 %v3671
        %4476 = vmatmul.mubr.bf16.gmra.mrb[0].mxu0 %v3670
        %v4477 = vpop.f32.mrb[0].mxu0
        %v4478 = vadd.f32 %v4381, %v4477
        %v4479 = vpop.f32.mrb[0].mxu0
        %v4480 = vpop.f32.mrb[0].mxu0
        %v4481 = vadd.f32 %v4384, %v4480
        %v4482 = vpop.f32.mrb[0].mxu0
        %4483 = vmatprep.mubr.bf16.mxu0 %v3679
        %4484 = vmatmul.mubr.bf16.gmra.mrb[0].mxu0 %v3678
        %v4485 = vpop.f32.mrb[0].mxu0
        %v4486 = vadd.f32 %v4389, %v4485
        %v4487 = vpop.f32.mrb[0].mxu0
        %v4488 = vpop.f32.mrb[0].mxu0
        %v4489 = vadd.f32 %v4392, %v4488
        %v4490 = vpop.f32.mrb[0].mxu0
        %4491 = vmatprep.mubr.bf16.mxu0 %v3687
        %4492 = vmatmul.mubr.bf16.gmra.mrb[0].mxu0 %v3686
        %v4493 = vpop.f32.mrb[0].mxu0
        %v4494 = vadd.f32 %v4397, %v4493
        %v4495 = vpop.f32.mrb[0].mxu0
        %v4496 = vpop.f32.mrb[0].mxu0
        %v4497 = vadd.f32 %v4400, %v4496
        %v4498 = vpop.f32.mrb[0].mxu0
        %4499 = vmatprep.mubr.bf16.mxu0 %v3695
        %4500 = vmatmul.mubr.bf16.gmra.mrb[0].mxu0 %v3694
        %v4501 = vpop.f32.mrb[0].mxu0
        %v4502 = vadd.f32 %v4405, %v4501
        %v4503 = vpop.f32.mrb[0].mxu0
        %v4504 = vpop.f32.mrb[0].mxu0
        %v4505 = vadd.f32 %v4408, %v4504
        %v4506 = vpop.f32.mrb[0].mxu0
        %4507 = vmatprep.mubr.bf16.mxu0 %v3703
        %4508 = vmatmul.mubr.bf16.gmra.mrb[0].mxu0 %v3702
        %v4509 = vpop.f32.mrb[0].mxu0
        %v4510 = vadd.f32 %v4413, %v4509
        %v4511 = vpop.f32.mrb[0].mxu0
        %v4512 = vpop.f32.mrb[0].mxu0
        %v4513 = vadd.f32 %v4416, %v4512
        %v4514 = vpop.f32.mrb[0].mxu0
        %4515 = vmatprep.mubr.bf16.mxu0 %v3711
        %4516 = vmatmul.mubr.bf16.gmra.mrb[0].mxu0 %v3710
        %v4517 = vpop.f32.mrb[0].mxu0
        %v4518 = vadd.f32 %v4421, %v4517
        %v4519 = vpop.f32.mrb[0].mxu0
        %v4520 = vpop.f32.mrb[0].mxu0
        %v4521 = vadd.f32 %v4424, %v4520
        %v4522 = vpop.f32.mrb[0].mxu0
        %4523 = vmatprep.mubr.bf16.mxu0 %v3719
        %4524 = vmatmul.mubr.bf16.gmra.mrb[0].mxu0 %v3718
        %v4525 = vpop.f32.mrb[0].mxu0
        %v4526 = vadd.f32 %v4429, %v4525
        %v4527 = vpop.f32.mrb[0].mxu0
        %v4528 = vpop.f32.mrb[0].mxu0
        %v4529 = vadd.f32 %v4432, %v4528
        %v4530 = vpop.f32.mrb[0].mxu0
        %4531 = vmatprep.mubr.bf16.mxu0 %v3727
        %4532 = vmatmul.mubr.bf16.gmra.mrb[0].mxu0 %v3726
        %v4533 = vpop.f32.mrb[0].mxu0
        %v4534 = vadd.f32 %v4437, %v4533
        %v4535 = vpop.f32.mrb[0].mxu0
        %v4536 = vpop.f32.mrb[0].mxu0
        %v4537 = vadd.f32 %v4440, %v4536
        %v4538 = vpop.f32.mrb[0].mxu0
        %4539 = vdwg.mxu0
        %4540 = vmatprep.subr.bf16.mxu0 0
        %4541 = vmatpush1.bf16.msra.mxu0 %v4169
        %4542 = vmatprep.subr.bf16.mxu0 0
        %4543 = vmatpush1.bf16.msra.mxu0 %v4170
        %4544 = vmatprep.subr.bf16.mxu0 0
        %4545 = vmatpush1.bf16.msra.mxu0 %v4171
        %4546 = vmatprep.subr.bf16.mxu0 0
        %4547 = vmatpush1.bf16.msra.mxu0 %v4172
        %4548 = vmatprep.subr.bf16.mxu0 0
        %4549 = vmatpush1.bf16.msra.mxu0 %v4173
        %4550 = vmatprep.subr.bf16.mxu0 0
        %4551 = vmatpush1.bf16.msra.mxu0 %v4174
        %4552 = vmatprep.subr.bf16.mxu0 0
        %4553 = vmatpush1.bf16.msra.mxu0 %v4175
        %4554 = vmatprep.subr.bf16.mxu0 0
        %4555 = vmatpush1.bf16.msra.mxu0 %v4176
        %4556 = vmatprep.subr.bf16.mxu0 0
        %4557 = vmatpush1.bf16.msra.mxu0 %v4177
        %4558 = vmatprep.subr.bf16.mxu0 0
        %4559 = vmatpush1.bf16.msra.mxu0 %v4178
        %4560 = vmatprep.subr.bf16.mxu0 0
        %4561 = vmatpush1.bf16.msra.mxu0 %v4179
        %4562 = vmatprep.subr.bf16.mxu0 0
        %4563 = vmatpush1.bf16.msra.mxu0 %v4180
        %4564 = vmatprep.subr.bf16.mxu0 0
        %4565 = vmatpush1.bf16.msra.mxu0 %v4181
        %4566 = vmatprep.subr.bf16.mxu0 0
        %4567 = vmatpush1.bf16.msra.mxu0 %v4182
        %4568 = vmatprep.subr.bf16.mxu0 0
        %4569 = vmatpush1.bf16.msra.mxu0 %v4183
        %4570 = vmatprep.subr.bf16.mxu0 0
        %4571 = vmatpush1.bf16.msra.mxu0 %v4184
        %4572 = vmatprep.mubr.bf16.mxu0 %v3673
        %4573 = vmatmul.mubr.bf16.gmra.mrb[0].mxu0 %v3672
        %v4574 = vpop.f32.mrb[0].mxu0
        %v4575 = vadd.f32 %v4478, %v4574
        %v4576 = vpop.f32.mrb[0].mxu0
        %v4577 = vpop.f32.mrb[0].mxu0
        %v4578 = vadd.f32 %v4481, %v4577
        %v4579 = vpop.f32.mrb[0].mxu0
        %4580 = vmatprep.mubr.bf16.mxu0 %v3681
        %4581 = vmatmul.mubr.bf16.gmra.mrb[0].mxu0 %v3680
        %v4582 = vpop.f32.mrb[0].mxu0
        %v4583 = vadd.f32 %v4486, %v4582
        %v4584 = vpop.f32.mrb[0].mxu0
        %v4585 = vpop.f32.mrb[0].mxu0
        %v4586 = vadd.f32 %v4489, %v4585
        %v4587 = vpop.f32.mrb[0].mxu0
        %4588 = vmatprep.mubr.bf16.mxu0 %v3689
        %4589 = vmatmul.mubr.bf16.gmra.mrb[0].mxu0 %v3688
        %v4590 = vpop.f32.mrb[0].mxu0
        %v4591 = vadd.f32 %v4494, %v4590
        %v4592 = vpop.f32.mrb[0].mxu0
        %v4593 = vpop.f32.mrb[0].mxu0
        %v4594 = vadd.f32 %v4497, %v4593
        %v4595 = vpop.f32.mrb[0].mxu0
        %4596 = vmatprep.mubr.bf16.mxu0 %v3697
        %4597 = vmatmul.mubr.bf16.gmra.mrb[0].mxu0 %v3696
        %v4598 = vpop.f32.mrb[0].mxu0
        %v4599 = vadd.f32 %v4502, %v4598
        %v4600 = vpop.f32.mrb[0].mxu0
        %v4601 = vpop.f32.mrb[0].mxu0
        %v4602 = vadd.f32 %v4505, %v4601
        %v4603 = vpop.f32.mrb[0].mxu0
        %4604 = vmatprep.mubr.bf16.mxu0 %v3705
        %4605 = vmatmul.mubr.bf16.gmra.mrb[0].mxu0 %v3704
        %v4606 = vpop.f32.mrb[0].mxu0
        %v4607 = vadd.f32 %v4510, %v4606
        %v4608 = vpop.f32.mrb[0].mxu0
        %v4609 = vpop.f32.mrb[0].mxu0
        %v4610 = vadd.f32 %v4513, %v4609
        %v4611 = vpop.f32.mrb[0].mxu0
        %4612 = vmatprep.mubr.bf16.mxu0 %v3713
        %4613 = vmatmul.mubr.bf16.gmra.mrb[0].mxu0 %v3712
        %v4614 = vpop.f32.mrb[0].mxu0
        %v4615 = vadd.f32 %v4518, %v4614
        %v4616 = vpop.f32.mrb[0].mxu0
        %v4617 = vpop.f32.mrb[0].mxu0
        %v4618 = vadd.f32 %v4521, %v4617
        %v4619 = vpop.f32.mrb[0].mxu0
        %4620 = vmatprep.mubr.bf16.mxu0 %v3721
        %4621 = vmatmul.mubr.bf16.gmra.mrb[0].mxu0 %v3720
        %v4622 = vpop.f32.mrb[0].mxu0
        %v4623 = vadd.f32 %v4526, %v4622
        %v4624 = vpop.f32.mrb[0].mxu0
        %v4625 = vpop.f32.mrb[0].mxu0
        %v4626 = vadd.f32 %v4529, %v4625
        %v4627 = vpop.f32.mrb[0].mxu0
        %4628 = vmatprep.mubr.bf16.mxu0 %v3729
        %4629 = vmatmul.mubr.bf16.gmra.mrb[0].mxu0 %v3728
        %v4630 = vpop.f32.mrb[0].mxu0
        %v4631 = vadd.f32 %v4534, %v4630
        %v4632 = vpop.f32.mrb[0].mxu0
        %v4633 = vpop.f32.mrb[0].mxu0
        %v4634 = vadd.f32 %v4537, %v4633
        %v4635 = vpop.f32.mrb[0].mxu0
        %4636 = vdwg.mxu0
        %4637 = vst [vmem:[%s361] sm:$0xff] %v4575
        %4638 = vst [vmem:[%s361 + $0x8] sm:$0xff] %v4578
        %4639 = vst [vmem:[%s361 + $0x10] sm:$0xff] %v4583
        %4640 = vst [vmem:[%s361 + $0x18] sm:$0xff] %v4586
        %4641 = vst [vmem:[%s361 + $0x20] sm:$0xff] %v4591
        %4642 = vst [vmem:[%s361 + $0x28] sm:$0xff] %v4594
        %4643 = vst [vmem:[%s361 + $0x30] sm:$0xff] %v4599
        %4644 = vst [vmem:[%s361 + $0x38] sm:$0xff] %v4602
        %4645 = vst [vmem:[%s361 + $0x40] sm:$0xff] %v4607
        %4646 = vst [vmem:[%s361 + $0x48] sm:$0xff] %v4610
        %4647 = vst [vmem:[%s361 + $0x50] sm:$0xff] %v4615
        %4648 = vst [vmem:[%s361 + $0x58] sm:$0xff] %v4618
        %4649 = vst [vmem:[%s361 + $0x60] sm:$0xff] %v4623
        %4650 = vst [vmem:[%s361 + $0x68] sm:$0xff] %v4626
        %4651 = vst [vmem:[%s361 + $0x70] sm:$0xff] %v4631
        %4652 = vst [vmem:[%s361 + $0x78] sm:$0xff] %v4634
        %s4653 = smul.u32 16, %s24
        %p4654 = scmp.lt.s32.totalorder %s4653, 31
        %s4655 = scalar_select %p4654, %s4653, 31
        %p4656 = scmp.lt.s32.totalorder %s25, 0
        %s4657 = scalar_select %p4656, %s25, 0
        %s4658 = sadd.s32 %s4657, %s4655
        %s4659 = smul.addr %s4658, 8
        %s4660 = scalar_lea.vmem %s7, %s4659
        // Predicated region
        $region61: #{mlp_decoder_forward.1} parent=47 // pred_check
          %p4661 = pneg %p214
        $region62: #{mlp_decoder_forward.1} parent=47 // pred_check_branch
          %4663 = sbr.rel (%p4661) target = $region64
        $region63: #{mlp_decoder_forward.1} parent=47 // pred_region
          %s4664 = smul.u32 16, %s24
        $region64: #{mlp_decoder_forward.1} parent=47 // pred_fallthru
          _
      $region48: #{mlp_decoder_forward.1} parent=5 // pred_fallthru
        _
      %p4665 = scmp.le.s32.totalorder 2, %s15
      // Predicated region
      $region65: #{mlp_decoder_forward.1} parent=5 // pred_check
        %p4666 = pneg %p4665
      $region66: #{mlp_decoder_forward.1} parent=5 // pred_check_branch
        %4668 = sbr.rel (%p4666) target = $region68
      $region67: #{mlp_decoder_forward.1} parent=5 // pred_region
        %s4669 = ssub.s32 %s15, 2
        // Predicated region
        $region69: #{mlp_decoder_forward.1} parent=67 // pred_check
          %p4670 = pneg %p220
        $region70: #{mlp_decoder_forward.1} parent=67 // pred_check_branch
          %4672 = sbr.rel (%p4670) target = $region72
        $region71: #{mlp_decoder_forward.1} parent=67 // pred_region
          %s4673 = smul.u32 16, %s26
          %p4674 = scmp.lt.s32.totalorder %s4673, 31
          %s4675 = scalar_select %p4674, %s4673, 31
          %p4676 = scmp.lt.s32.totalorder %s27, 0
          %s4677 = scalar_select %p4676, %s27, 0
          %s4678 = sadd.s32 %s4677, %s4675
          %s4679 = smul.addr %s4678, 8
          %s4680 = scalar_lea.vmem %s7, %s4679
        $region72: #{mlp_decoder_forward.1} parent=67 // pred_fallthru
          _
      $region68: #{mlp_decoder_forward.1} parent=5 // pred_fallthru
        _
    $region6: #{mlp_decoder_forward.1} parent=1 // loop_footer
      %s19 = sadd.s32 1, %s15
    $region7: #{mlp_decoder_forward.1} parent=1 // loop_footer_branch
      %14 = sbr.rel target = $region3
    $region8: #{mlp_decoder_forward.1} parent=1 // loop_exit
      _
    %4681 = vsyncpa [#allocation4], 1
    %s4682 = scalar_lea.sflag [#allocation4], 1
    %4683 = vsyncpa %s4682, 1
    %4684 = vsyncpa [#allocation6], 1

</llo_original>
